<compile_context>
chip_gen: v7x
topology: tpu7x:2x2x1
jax: 0.10.0
libtpu: 0.0.40
codegen_flags: <defaults>
</compile_context>

<pallas_src>
import functools

import jax
import jax.numpy as jnp
from jax.experimental import pallas as pl
from jax.experimental.pallas import tpu as pltpu

MASK_TOKEN_ID = 50264           # roberta <mask>
PAD_TOKEN_ID = 1                # roberta <pad>
LN_EPS = 1e-5

# ----------------------------- config (small) --------------------------------
B = 2            # batch
S = 8            # sequence length
H = 32           # hidden size
FFN = 64         # intermediate size
NUM_HEADS = 2
NUM_LAYERS = 2
VOCAB = 50265    # must contain MASK_TOKEN_ID
MAX_POS = S + 2  # roberta offsets positions by padding_idx (=1)


# ----------------------------- in-kernel math helpers -------------------------
def _erf(z):
    # Abramowitz & Stegun 7.1.26 polynomial, |error| < 1.5e-7 (~f32 eps): exact GELU
    # without relying on an erf lowering; uses only abs/div/exp/where (VPU + EUP).
    t = 1.0 / (1.0 + 0.3275911 * jnp.abs(z))
    poly = ((((1.061405429 * t - 1.453152027) * t + 1.421413741) * t
             - 0.284496736) * t + 0.254829592) * t
    y = 1.0 - poly * jnp.exp(-z * z)
    return jnp.where(z >= 0.0, y, -y)


def _gelu_exact(v):
    # HF RoBERTa uses the exact erf-GELU.
    return 0.5 * v * (1.0 + _erf(v * 0.7071067811865476))


# ----------------------------- fused Pallas kernel ----------------------------
def fused_encoder_head_kernel(
        mask_pos_ref,                                    # SMEM [B] flat <mask> row index
        x_ref, kbias_ref,                                # [BS,H], [B,1,S]
        wq_ref, wk_ref, wv_ref,                          # [L,nh,H,dh]
        bq_ref, bk_ref, bv_ref,                          # [L,nh,1,dh]
        wo_ref, bo_ref, ln1_ref,                         # [L,nh,dh,H], [L,1,H], [L,2,H]
        w1_ref, b1_ref, w2_ref, b2_ref, ln2_ref,         # FFN + LN2
        cls_w_ref, cls_b_ref, labels_ref,                # [1,H], [1,1], [B,1]
        loss_ref, logits_ref, vec_ref,                   # [1,1], [B,1], [B,H]
        act_ref,                                         # VMEM scratch [BS,H] (row gather)
        *, num_heads, batch, seq):
    x = x_ref[...].astype(jnp.float32)                   # [BS, H]
    kbias = kbias_ref[...]                               # [B, 1, S] additive key-padding bias
    bs, hid = x.shape
    dh = hid // num_heads
    scale = 1.0 / float(dh) ** 0.5
    num_layers = wq_ref.shape[0]

    def layernorm(v, gb):
        g = gb[0:1, :]
        b_ = gb[1:2, :]
        mu = jnp.mean(v, axis=-1, keepdims=True)
        var = jnp.mean((v - mu) ** 2, axis=-1, keepdims=True)
        return (v - mu) * jax.lax.rsqrt(var + LN_EPS) * g + b_

    for l in range(num_layers):          # static unroll: all layer weights already in VMEM
        # ---- multi-head self attention: per-head 2-D matmuls, per-batch softmax ----
        attn = None
        for h in range(num_heads):       # static loop; no lane slicing / concatenation
            q = (jnp.dot(x, wq_ref[l, h], preferred_element_type=jnp.float32)
                 + bq_ref[l, h]).reshape(batch, seq, dh)
            k = (jnp.dot(x, wk_ref[l, h], preferred_element_type=jnp.float32)
                 + bk_ref[l, h]).reshape(batch, seq, dh)
            v = (jnp.dot(x, wv_ref[l, h], preferred_element_type=jnp.float32)
                 + bv_ref[l, h]).reshape(batch, seq, dh)
            s = jnp.einsum('bqd,bkd->bqk', q, k,
                           preferred_element_type=jnp.float32) * scale + kbias
            s = s - jnp.max(s, axis=-1, keepdims=True)
            p = jnp.exp(s)
            p = p / jnp.sum(p, axis=-1, keepdims=True)      # exact softmax normalisation
            ctx = jnp.einsum('bqk,bkd->bqd', p, v,
                             preferred_element_type=jnp.float32).reshape(bs, dh)
            # per-head row-block of the output projection, accumulated
            # (replaces lane-concat of heads + one [H,H] matmul)
            head_out = jnp.dot(ctx, wo_ref[l, h], preferred_element_type=jnp.float32)
            attn = head_out if attn is None else attn + head_out
        attn = attn + bo_ref[l]
        y = layernorm(x + attn, ln1_ref[l])

        # ---- feed-forward (exact erf GELU, as in HF RoBERTa) ----
        hmid = jnp.dot(y, w1_ref[l], preferred_element_type=jnp.float32) + b1_ref[l]
        hmid = _gelu_exact(hmid)
        ffn = jnp.dot(hmid, w2_ref[l], preferred_element_type=jnp.float32) + b2_ref[l]
        x = layernorm(y + ffn, ln2_ref[l])

    # ---- <mask>-token gather + classifier + BCEWithLogits (mean reduction) ----
    act_ref[...] = x                       # stash final hidden states for dynamic row gather
    cls_w = cls_w_ref[...]                 # [1, H]
    cls_b = cls_b_ref[...]                 # [1, 1]
    loss_acc = None
    for bi in range(batch):                # exactly one <mask> per sequence (as in torch module)
        row = act_ref[pl.ds(mask_pos_ref[bi], 1), :]                    # [1, H]
        vec_ref[pl.ds(bi, 1), :] = row.astype(vec_ref.dtype)            # direct write, no concat
        # classifier dropout is identity (eval mode)
        logit = jnp.sum(row * cls_w, axis=1, keepdims=True) + cls_b     # [1, 1]
        logits_ref[pl.ds(bi, 1), :] = logit
        label = labels_ref[pl.ds(bi, 1), :]
        # numerically stable BCE-with-logits.
        # TODO(synk): log1p would be marginally tighter; difference is below f32 eps here.
        per = (jnp.maximum(logit, 0.0) - logit * label
               + jnp.log(1.0 + jnp.exp(-jnp.abs(logit))))
        loss_acc = per if loss_acc is None else loss_acc + per
    loss_ref[...] = loss_acc * (1.0 / batch)


# ----------------------------- Pallas wrapper ---------------------------------
def fused_encoder_head(params, x0, key_bias, mask_flat_pos, labels):
    bs, h = x0.shape
    b = labels.shape[0]
    s = bs // b
    num_layers = params["wq"].shape[0]
    f = params["w1"].shape[2]
    nh = NUM_HEADS
    dh = h // nh

    # Pre-split per-head projection weights (one-time layout plumbing in the wrapper),
    # so the kernel never slices or concatenates along the lane axis.
    wq = params["wq"].reshape(num_layers, h, nh, dh).transpose(0, 2, 1, 3)
    wk = params["wk"].reshape(num_layers, h, nh, dh).transpose(0, 2, 1, 3)
    wv = params["wv"].reshape(num_layers, h, nh, dh).transpose(0, 2, 1, 3)
    bq = params["bq"].reshape(num_layers, nh, 1, dh)
    bk = params["bk"].reshape(num_layers, nh, 1, dh)
    bv = params["bv"].reshape(num_layers, nh, 1, dh)
    wo = params["wo"].reshape(num_layers, nh, dh, h)
    bo = params["bo"].reshape(num_layers, 1, h)
    b1 = params["b1"].reshape(num_layers, 1, f)
    b2 = params["b2"].reshape(num_layers, 1, h)

    operands = (x0, key_bias, wq, wk, wv, bq, bk, bv, wo, bo, params["ln1"],
                params["w1"], b1, params["w2"], b2, params["ln2"],
                params["cls_w"], params["cls_b"], labels)

    def full(a):
        nd = a.ndim
        return pl.BlockSpec(a.shape, lambda i, mp, _n=nd: (0,) * _n)

    grid_spec = pltpu.PrefetchScalarGridSpec(
        num_scalar_prefetch=1,              # mask_flat_pos -> SMEM
        grid=(1,),                          # single step: no pipeline warmup/drain overhead
        in_specs=[full(a) for a in operands],
        out_specs=(pl.BlockSpec((1, 1), lambda i, mp: (0, 0)),
                   pl.BlockSpec((b, 1), lambda i, mp: (0, 0)),
                   pl.BlockSpec((b, h), lambda i, mp: (0, 0))),
        scratch_shapes=[pltpu.VMEM((bs, h), jnp.float32)],
    )

    flops = int(num_layers * (8 * bs * h * h + 4 * b * s * s * h + 4 * bs * h * f))
    transcendentals = int(num_layers * (nh * b * s * s + bs * f))
    bytes_accessed = int(4 * (sum(int(a.size) for a in operands) + 1 + b + b * h) + 4 * b)

    loss, logits, vecs = pl.pallas_call(
        functools.partial(fused_encoder_head_kernel, num_heads=nh, batch=b, seq=s),
        grid_spec=grid_spec,
        out_shape=(jax.ShapeDtypeStruct((1, 1), jnp.float32),
                   jax.ShapeDtypeStruct((b, 1), jnp.float32),
                   jax.ShapeDtypeStruct((b, h), jnp.float32)),
        compiler_params=pltpu.CompilerParams(dimension_semantics=("arbitrary",)),
        cost_estimate=pl.CostEstimate(flops=flops, transcendentals=transcendentals,
                                      bytes_accessed=bytes_accessed),
    )(mask_flat_pos, *operands)
    return loss, logits, vecs


# ----------------------------- JAX glue ---------------------------------------
def roberta_position_ids(input_ids, padding_idx=PAD_TOKEN_ID):
    mask = (input_ids != padding_idx).astype(jnp.int32)
    return jnp.cumsum(mask, axis=1) * mask + padding_idx


def embed(params, input_ids):
    we = jnp.take(params["word_emb"], input_ids, axis=0)               # [B,S,H]
    pe = jnp.take(params["pos_emb"], roberta_position_ids(input_ids), axis=0)
    te = params["type_emb"][0]                                         # [H]
    x = we + pe + te
    mu = jnp.mean(x, axis=-1, keepdims=True)
    var = jnp.mean((x - mu) ** 2, axis=-1, keepdims=True)
    x = (x - mu) / jnp.sqrt(var + LN_EPS) * params["emb_ln_g"] + params["emb_ln_b"]
    return x  # embedding dropout is identity (eval mode)


def forward(params, input_ids, attention_mask, labels):
    """Returns (loss, mask_logits, mask_vectors), matching the torch module."""
    b, s = input_ids.shape
    x0 = embed(params, input_ids).reshape(b * s, -1).astype(jnp.float32)

    # Additive key-padding bias, one row per sequence (attention is per-batch in-kernel,
    # so no [B*S, B*S] block-diagonal mask is materialized).
    key_bias = jnp.where(attention_mask > 0, 0.0, -1e9).astype(jnp.float32).reshape(b, 1, s)

    # Flat row index of the (single) <mask> token per sequence (scalar prefetch).
    pos_in_seq = jnp.argmax((input_ids == MASK_TOKEN_ID).astype(jnp.int32), axis=1)
    mask_flat_pos = (jnp.arange(b) * s + pos_in_seq).astype(jnp.int32)

    labels2 = labels.reshape(b, 1).astype(jnp.float32)
    loss, logits, vecs = fused_encoder_head(params, x0, key_bias, mask_flat_pos, labels2)
    return loss.reshape(()), logits.reshape(-1), vecs


def init_params(key):
    ks = jax.random.split(key, 12)

    def nrm(k, shape):
        return (0.02 * jax.random.normal(k, shape)).astype(jnp.float32)

    ones_h = jnp.ones((H,), jnp.float32)
    zeros_h = jnp.zeros((H,), jnp.float32)
    ln_init = jnp.tile(jnp.stack([ones_h, zeros_h])[None], (NUM_LAYERS, 1, 1))

    return {
        "word_emb": nrm(ks[0], (VOCAB, H)),
        "pos_emb": nrm(ks[1], (MAX_POS, H)),
        "type_emb": nrm(ks[2], (1, H)),
        "emb_ln_g": ones_h,
        "emb_ln_b": zeros_h,
        "cls_w": nrm(ks[3], (1, H)),          # nn.Linear(hidden, 1).weight
        "cls_b": jnp.zeros((1, 1), jnp.float32),
        # stacked per-layer encoder weights [L, ...]
        "wq": nrm(ks[4], (NUM_LAYERS, H, H)),
        "wk": nrm(ks[5], (NUM_LAYERS, H, H)),
        "wv": nrm(ks[6], (NUM_LAYERS, H, H)),
        "bq": jnp.zeros((NUM_LAYERS, H), jnp.float32),
        "bk": jnp.zeros((NUM_LAYERS, H), jnp.float32),
        "bv": jnp.zeros((NUM_LAYERS, H), jnp.float32),
        "wo": nrm(ks[7], (NUM_LAYERS, H, H)),
        "bo": jnp.zeros((NUM_LAYERS, H), jnp.float32),
        "ln1": ln_init,
        "w1": nrm(ks[8], (NUM_LAYERS, H, FFN)),
        "b1": jnp.zeros((NUM_LAYERS, FFN), jnp.float32),
        "w2": nrm(ks[9], (NUM_LAYERS, FFN, H)),
        "b2": jnp.zeros((NUM_LAYERS, H), jnp.float32),
        "ln2": ln_init,
    }


if __name__ == "__main__":
    key = jax.random.PRNGKey(0)
    k_params, k_ids, k_labels = jax.random.split(key, 3)

    params = init_params(k_params)

    # deterministic inputs: one <mask> per sequence, one padded position.
    input_ids = jax.random.randint(k_ids, (B, S), 5, 1000, dtype=jnp.int32)
    mask_pos = jnp.array([2, 5], dtype=jnp.int32)
    input_ids = input_ids.at[jnp.arange(B), mask_pos].set(MASK_TOKEN_ID)
    input_ids = input_ids.at[1, S - 1].set(PAD_TOKEN_ID)

    attention_mask = jnp.ones((B, S), jnp.float32)
    attention_mask = attention_mask.at[1, S - 1].set(0.0)

    labels = jax.random.bernoulli(k_labels, 0.5, (B,)).astype(jnp.float32)

    fwd = jax.jit(forward)
    loss, mask_logits, mask_vectors = fwd(params, input_ids, attention_mask, labels)
    jax.block_until_ready((loss, mask_logits, mask_vectors))

    assert loss.shape == ()
    assert mask_logits.shape == (B,)
    assert mask_vectors.shape == (B, H)
    assert bool(jnp.isfinite(loss))

    print("KERNEL_OK")
</pallas_src>

<mosaic_0001>
module attributes {stable_mosaic.version = 11 : i64} {
  func.func @fused_encoder_head_kernel(%arg0: i32, %arg1: memref<2xi32, #tpu.memory_space<smem>>, %arg2: memref<16x32xf32, #tpu.memory_space<vmem>>, %arg3: memref<2x1x8xf32, #tpu.memory_space<vmem>>, %arg4: memref<2x2x32x16xf32, #tpu.memory_space<vmem>>, %arg5: memref<2x2x32x16xf32, #tpu.memory_space<vmem>>, %arg6: memref<2x2x32x16xf32, #tpu.memory_space<vmem>>, %arg7: memref<2x2x1x16xf32, #tpu.memory_space<vmem>>, %arg8: memref<2x2x1x16xf32, #tpu.memory_space<vmem>>, %arg9: memref<2x2x1x16xf32, #tpu.memory_space<vmem>>, %arg10: memref<2x2x16x32xf32, #tpu.memory_space<vmem>>, %arg11: memref<2x1x32xf32, #tpu.memory_space<vmem>>, %arg12: memref<2x2x32xf32, #tpu.memory_space<vmem>>, %arg13: memref<2x32x64xf32, #tpu.memory_space<vmem>>, %arg14: memref<2x1x64xf32, #tpu.memory_space<vmem>>, %arg15: memref<2x64x32xf32, #tpu.memory_space<vmem>>, %arg16: memref<2x1x32xf32, #tpu.memory_space<vmem>>, %arg17: memref<2x2x32xf32, #tpu.memory_space<vmem>>, %arg18: memref<1x32xf32, #tpu.memory_space<vmem>>, %arg19: memref<1x1xf32, #tpu.memory_space<vmem>>, %arg20: memref<2x1xf32, #tpu.memory_space<vmem>>, %arg21: memref<1x1xf32, #tpu.memory_space<vmem>>, %arg22: memref<2x1xf32, #tpu.memory_space<vmem>>, %arg23: memref<2x32xf32, #tpu.memory_space<vmem>>, %arg24: memref<16x32xf32, #tpu.memory_space<vmem>>) attributes {dimension_semantics = [#tpu.dimension_semantics<arbitrary>], iteration_bounds = array<i64: 1>, scalar_prefetch = 1 : i64, scratch_operands = 1 : i64, tpu.core_type = #tpu.core_type<tc>, window_params = [{pipeline_mode = #tpu.pipeline_mode<synchronous>, transform_indices = @transform_0, window_bounds = array<i64: 16, 32>}, {pipeline_mode = #tpu.pipeline_mode<synchronous>, transform_indices = @transform_1, window_bounds = array<i64: 2, 1, 8>}, {pipeline_mode = #tpu.pipeline_mode<synchronous>, transform_indices = @transform_2, window_bounds = array<i64: 2, 2, 32, 16>}, {pipeline_mode = #tpu.pipeline_mode<synchronous>, transform_indices = @transform_3, window_bounds = array<i64: 2, 2, 32, 16>}, {pipeline_mode = #tpu.pipeline_mode<synchronous>, transform_indices = @transform_4, window_bounds = array<i64: 2, 2, 32, 16>}, {pipeline_mode = #tpu.pipeline_mode<synchronous>, transform_indices = @transform_5, window_bounds = array<i64: 2, 2, 1, 16>}, {pipeline_mode = #tpu.pipeline_mode<synchronous>, transform_indices = @transform_6, window_bounds = array<i64: 2, 2, 1, 16>}, {pipeline_mode = #tpu.pipeline_mode<synchronous>, transform_indices = @transform_7, window_bounds = array<i64: 2, 2, 1, 16>}, {pipeline_mode = #tpu.pipeline_mode<synchronous>, transform_indices = @transform_8, window_bounds = array<i64: 2, 2, 16, 32>}, {pipeline_mode = #tpu.pipeline_mode<synchronous>, transform_indices = @transform_9, window_bounds = array<i64: 2, 1, 32>}, {pipeline_mode = #tpu.pipeline_mode<synchronous>, transform_indices = @transform_10, window_bounds = array<i64: 2, 2, 32>}, {pipeline_mode = #tpu.pipeline_mode<synchronous>, transform_indices = @transform_11, window_bounds = array<i64: 2, 32, 64>}, {pipeline_mode = #tpu.pipeline_mode<synchronous>, transform_indices = @transform_12, window_bounds = array<i64: 2, 1, 64>}, {pipeline_mode = #tpu.pipeline_mode<synchronous>, transform_indices = @transform_13, window_bounds = array<i64: 2, 64, 32>}, {pipeline_mode = #tpu.pipeline_mode<synchronous>, transform_indices = @transform_14, window_bounds = array<i64: 2, 1, 32>}, {pipeline_mode = #tpu.pipeline_mode<synchronous>, transform_indices = @transform_15, window_bounds = array<i64: 2, 2, 32>}, {pipeline_mode = #tpu.pipeline_mode<synchronous>, transform_indices = @transform_16, window_bounds = array<i64: 1, 32>}, {pipeline_mode = #tpu.pipeline_mode<synchronous>, transform_indices = @transform_17, window_bounds = array<i64: 1, 1>}, {pipeline_mode = #tpu.pipeline_mode<synchronous>, transform_indices = @transform_18, window_bounds = array<i64: 2, 1>}, {pipeline_mode = #tpu.pipeline_mode<synchronous>, transform_indices = @transform_19, window_bounds = array<i64: 1, 1>}, {pipeline_mode = #tpu.pipeline_mode<synchronous>, transform_indices = @transform_20, window_bounds = array<i64: 2, 1>}, {pipeline_mode = #tpu.pipeline_mode<synchronous>, transform_indices = @transform_21, window_bounds = array<i64: 2, 32>}]} {
    %c0 = arith.constant 0 : index
    %c0_0 = arith.constant 0 : index
    %0 = vector.load %arg2[%c0, %c0_0] : memref<16x32xf32, #tpu.memory_space<vmem>>, vector<16x32xf32>
    %c0_1 = arith.constant 0 : index
    %c0_2 = arith.constant 0 : index
    %c0_3 = arith.constant 0 : index
    %1 = vector.load %arg3[%c0_1, %c0_2, %c0_3] : memref<2x1x8xf32, #tpu.memory_space<vmem>>, vector<2x1x8xf32>
    %c0_4 = arith.constant 0 : index
    %c0_5 = arith.constant 0 : index
    %c0_6 = arith.constant 0 : index
    %c0_7 = arith.constant 0 : index
    %2 = vector.load %arg4[%c0_4, %c0_5, %c0_6, %c0_7] : memref<2x2x32x16xf32, #tpu.memory_space<vmem>>, vector<1x1x32x16xf32>
    %3 = vector.shape_cast %2 : vector<1x1x32x16xf32> to vector<32x16xf32>
    %cst = arith.constant dense<0.000000e+00> : vector<16x16xf32>
    %4 = tpu.matmul %0, %3, %cst {dimension_numbers = #tpu.dot_dimension_numbers<[1], [0], [0], [1], [0, 0, 1, 1], [], []>} : vector<16x32xf32>, vector<32x16xf32>, vector<16x16xf32> -> vector<16x16xf32>
    %c0_8 = arith.constant 0 : index
    %c0_9 = arith.constant 0 : index
    %c0_10 = arith.constant 0 : index
    %c0_11 = arith.constant 0 : index
    %5 = vector.load %arg7[%c0_8, %c0_9, %c0_10, %c0_11] : memref<2x2x1x16xf32, #tpu.memory_space<vmem>>, vector<1x1x1x16xf32>
    %6 = vector.shape_cast %5 : vector<1x1x1x16xf32> to vector<1x16xf32>
    %7 = vector.broadcast %6 : vector<1x16xf32> to vector<16x16xf32>
    %8 = arith.addf %4, %7 : vector<16x16xf32>
    %9 = vector.shape_cast %8 : vector<16x16xf32> to vector<2x8x16xf32>
    %c0_12 = arith.constant 0 : index
    %c0_13 = arith.constant 0 : index
    %c0_14 = arith.constant 0 : index
    %c0_15 = arith.constant 0 : index
    %10 = vector.load %arg5[%c0_12, %c0_13, %c0_14, %c0_15] : memref<2x2x32x16xf32, #tpu.memory_space<vmem>>, vector<1x1x32x16xf32>
    %11 = vector.shape_cast %10 : vector<1x1x32x16xf32> to vector<32x16xf32>
    %cst_16 = arith.constant dense<0.000000e+00> : vector<16x16xf32>
    %12 = tpu.matmul %0, %11, %cst_16 {dimension_numbers = #tpu.dot_dimension_numbers<[1], [0], [0], [1], [0, 0, 1, 1], [], []>} : vector<16x32xf32>, vector<32x16xf32>, vector<16x16xf32> -> vector<16x16xf32>
    %c0_17 = arith.constant 0 : index
    %c0_18 = arith.constant 0 : index
    %c0_19 = arith.constant 0 : index
    %c0_20 = arith.constant 0 : index
    %13 = vector.load %arg8[%c0_17, %c0_18, %c0_19, %c0_20] : memref<2x2x1x16xf32, #tpu.memory_space<vmem>>, vector<1x1x1x16xf32>
    %14 = vector.shape_cast %13 : vector<1x1x1x16xf32> to vector<1x16xf32>
    %15 = vector.broadcast %14 : vector<1x16xf32> to vector<16x16xf32>
    %16 = arith.addf %12, %15 : vector<16x16xf32>
    %17 = vector.shape_cast %16 : vector<16x16xf32> to vector<2x8x16xf32>
    %c0_21 = arith.constant 0 : index
    %c0_22 = arith.constant 0 : index
    %c0_23 = arith.constant 0 : index
    %c0_24 = arith.constant 0 : index
    %18 = vector.load %arg6[%c0_21, %c0_22, %c0_23, %c0_24] : memref<2x2x32x16xf32, #tpu.memory_space<vmem>>, vector<1x1x32x16xf32>
    %19 = vector.shape_cast %18 : vector<1x1x32x16xf32> to vector<32x16xf32>
    %cst_25 = arith.constant dense<0.000000e+00> : vector<16x16xf32>
    %20 = tpu.matmul %0, %19, %cst_25 {dimension_numbers = #tpu.dot_dimension_numbers<[1], [0], [0], [1], [0, 0, 1, 1], [], []>} : vector<16x32xf32>, vector<32x16xf32>, vector<16x16xf32> -> vector<16x16xf32>
    %c0_26 = arith.constant 0 : index
    %c0_27 = arith.constant 0 : index
    %c0_28 = arith.constant 0 : index
    %c0_29 = arith.constant 0 : index
    %21 = vector.load %arg9[%c0_26, %c0_27, %c0_28, %c0_29] : memref<2x2x1x16xf32, #tpu.memory_space<vmem>>, vector<1x1x1x16xf32>
    %22 = vector.shape_cast %21 : vector<1x1x1x16xf32> to vector<1x16xf32>
    %23 = vector.broadcast %22 : vector<1x16xf32> to vector<16x16xf32>
    %24 = arith.addf %20, %23 : vector<16x16xf32>
    %25 = vector.shape_cast %24 : vector<16x16xf32> to vector<2x8x16xf32>
    "tpu.trace_start"() <{level = 10 : i32, message = "bqd,bkd->bqk"}> : () -> ()
    %cst_30 = arith.constant dense<0.000000e+00> : vector<2x8x8xf32>
    %26 = tpu.matmul %9, %17, %cst_30 {dimension_numbers = #tpu.dot_dimension_numbers<[2], [2], [1], [1], [0, 0, 0, 1, 1, 1], [0], [0]>} : vector<2x8x16xf32>, vector<2x8x16xf32>, vector<2x8x8xf32> -> vector<2x8x8xf32>
    "tpu.trace_stop"() : () -> ()
    %cst_31 = arith.constant 2.500000e-01 : f32
    %27 = vector.broadcast %cst_31 : f32 to vector<2x8x8xf32>
    %28 = arith.mulf %26, %27 : vector<2x8x8xf32>
    %29 = vector.broadcast %1 : vector<2x1x8xf32> to vector<2x8x8xf32>
    %30 = arith.addf %28, %29 : vector<2x8x8xf32>
    %cst_32 = arith.constant dense<0xFF800000> : vector<2x8xf32>
    %31 = vector.multi_reduction <maximumf>, %30, %cst_32 [2] : vector<2x8x8xf32> to vector<2x8xf32>
    %32 = vector.shape_cast %31 : vector<2x8xf32> to vector<2x8x1xf32>
    %33 = vector.broadcast %32 : vector<2x8x1xf32> to vector<2x8x8xf32>
    %34 = arith.subf %30, %33 : vector<2x8x8xf32>
    %35 = math.exp %34 : vector<2x8x8xf32>
    %cst_33 = arith.constant dense<0.000000e+00> : vector<2x8xf32>
    %36 = vector.multi_reduction <add>, %35, %cst_33 [2] : vector<2x8x8xf32> to vector<2x8xf32>
    %37 = vector.shape_cast %36 : vector<2x8xf32> to vector<2x8x1xf32>
    %38 = vector.broadcast %37 : vector<2x8x1xf32> to vector<2x8x8xf32>
    %39 = arith.divf %35, %38 : vector<2x8x8xf32>
    "tpu.trace_start"() <{level = 10 : i32, message = "bqk,bkd->bqd"}> : () -> ()
    %cst_34 = arith.constant dense<0.000000e+00> : vector<2x8x16xf32>
    %40 = tpu.matmul %39, %25, %cst_34 {dimension_numbers = #tpu.dot_dimension_numbers<[2], [1], [1], [2], [0, 0, 0, 1, 1, 2], [0], [0]>} : vector<2x8x8xf32>, vector<2x8x16xf32>, vector<2x8x16xf32> -> vector<2x8x16xf32>
    "tpu.trace_stop"() : () -> ()
    %41 = vector.shape_cast %40 : vector<2x8x16xf32> to vector<16x16xf32>
    %c0_35 = arith.constant 0 : index
    %c0_36 = arith.constant 0 : index
    %c0_37 = arith.constant 0 : index
    %c0_38 = arith.constant 0 : index
    %42 = vector.load %arg10[%c0_35, %c0_36, %c0_37, %c0_38] : memref<2x2x16x32xf32, #tpu.memory_space<vmem>>, vector<1x1x16x32xf32>
    %43 = vector.shape_cast %42 : vector<1x1x16x32xf32> to vector<16x32xf32>
    %cst_39 = arith.constant dense<0.000000e+00> : vector<16x32xf32>
    %44 = tpu.matmul %41, %43, %cst_39 {dimension_numbers = #tpu.dot_dimension_numbers<[1], [0], [0], [1], [0, 0, 1, 1], [], []>} : vector<16x16xf32>, vector<16x32xf32>, vector<16x32xf32> -> vector<16x32xf32>
    %c0_40 = arith.constant 0 : index
    %c1 = arith.constant 1 : index
    %c0_41 = arith.constant 0 : index
    %c0_42 = arith.constant 0 : index
    %45 = vector.load %arg4[%c0_40, %c1, %c0_41, %c0_42] : memref<2x2x32x16xf32, #tpu.memory_space<vmem>>, vector<1x1x32x16xf32>
    %46 = vector.shape_cast %45 : vector<1x1x32x16xf32> to vector<32x16xf32>
    %cst_43 = arith.constant dense<0.000000e+00> : vector<16x16xf32>
    %47 = tpu.matmul %0, %46, %cst_43 {dimension_numbers = #tpu.dot_dimension_numbers<[1], [0], [0], [1], [0, 0, 1, 1], [], []>} : vector<16x32xf32>, vector<32x16xf32>, vector<16x16xf32> -> vector<16x16xf32>
    %c0_44 = arith.constant 0 : index
    %c1_45 = arith.constant 1 : index
    %c0_46 = arith.constant 0 : index
    %c0_47 = arith.constant 0 : index
    %48 = vector.load %arg7[%c0_44, %c1_45, %c0_46, %c0_47] : memref<2x2x1x16xf32, #tpu.memory_space<vmem>>, vector<1x1x1x16xf32>
    %49 = vector.shape_cast %48 : vector<1x1x1x16xf32> to vector<1x16xf32>
    %50 = vector.broadcast %49 : vector<1x16xf32> to vector<16x16xf32>
    %51 = arith.addf %47, %50 : vector<16x16xf32>
    %52 = vector.shape_cast %51 : vector<16x16xf32> to vector<2x8x16xf32>
    %c0_48 = arith.constant 0 : index
    %c1_49 = arith.constant 1 : index
    %c0_50 = arith.constant 0 : index
    %c0_51 = arith.constant 0 : index
    %53 = vector.load %arg5[%c0_48, %c1_49, %c0_50, %c0_51] : memref<2x2x32x16xf32, #tpu.memory_space<vmem>>, vector<1x1x32x16xf32>
    %54 = vector.shape_cast %53 : vector<1x1x32x16xf32> to vector<32x16xf32>
    %cst_52 = arith.constant dense<0.000000e+00> : vector<16x16xf32>
    %55 = tpu.matmul %0, %54, %cst_52 {dimension_numbers = #tpu.dot_dimension_numbers<[1], [0], [0], [1], [0, 0, 1, 1], [], []>} : vector<16x32xf32>, vector<32x16xf32>, vector<16x16xf32> -> vector<16x16xf32>
    %c0_53 = arith.constant 0 : index
    %c1_54 = arith.constant 1 : index
    %c0_55 = arith.constant 0 : index
    %c0_56 = arith.constant 0 : index
    %56 = vector.load %arg8[%c0_53, %c1_54, %c0_55, %c0_56] : memref<2x2x1x16xf32, #tpu.memory_space<vmem>>, vector<1x1x1x16xf32>
    %57 = vector.shape_cast %56 : vector<1x1x1x16xf32> to vector<1x16xf32>
    %58 = vector.broadcast %57 : vector<1x16xf32> to vector<16x16xf32>
    %59 = arith.addf %55, %58 : vector<16x16xf32>
    %60 = vector.shape_cast %59 : vector<16x16xf32> to vector<2x8x16xf32>
    %c0_57 = arith.constant 0 : index
    %c1_58 = arith.constant 1 : index
    %c0_59 = arith.constant 0 : index
    %c0_60 = arith.constant 0 : index
    %61 = vector.load %arg6[%c0_57, %c1_58, %c0_59, %c0_60] : memref<2x2x32x16xf32, #tpu.memory_space<vmem>>, vector<1x1x32x16xf32>
    %62 = vector.shape_cast %61 : vector<1x1x32x16xf32> to vector<32x16xf32>
    %cst_61 = arith.constant dense<0.000000e+00> : vector<16x16xf32>
    %63 = tpu.matmul %0, %62, %cst_61 {dimension_numbers = #tpu.dot_dimension_numbers<[1], [0], [0], [1], [0, 0, 1, 1], [], []>} : vector<16x32xf32>, vector<32x16xf32>, vector<16x16xf32> -> vector<16x16xf32>
    %c0_62 = arith.constant 0 : index
    %c1_63 = arith.constant 1 : index
    %c0_64 = arith.constant 0 : index
    %c0_65 = arith.constant 0 : index
    %64 = vector.load %arg9[%c0_62, %c1_63, %c0_64, %c0_65] : memref<2x2x1x16xf32, #tpu.memory_space<vmem>>, vector<1x1x1x16xf32>
    %65 = vector.shape_cast %64 : vector<1x1x1x16xf32> to vector<1x16xf32>
    %66 = vector.broadcast %65 : vector<1x16xf32> to vector<16x16xf32>
    %67 = arith.addf %63, %66 : vector<16x16xf32>
    %68 = vector.shape_cast %67 : vector<16x16xf32> to vector<2x8x16xf32>
    "tpu.trace_start"() <{level = 10 : i32, message = "bqd,bkd->bqk"}> : () -> ()
    %cst_66 = arith.constant dense<0.000000e+00> : vector<2x8x8xf32>
    %69 = tpu.matmul %52, %60, %cst_66 {dimension_numbers = #tpu.dot_dimension_numbers<[2], [2], [1], [1], [0, 0, 0, 1, 1, 1], [0], [0]>} : vector<2x8x16xf32>, vector<2x8x16xf32>, vector<2x8x8xf32> -> vector<2x8x8xf32>
    "tpu.trace_stop"() : () -> ()
    %cst_67 = arith.constant 2.500000e-01 : f32
    %70 = vector.broadcast %cst_67 : f32 to vector<2x8x8xf32>
    %71 = arith.mulf %69, %70 : vector<2x8x8xf32>
    %72 = vector.broadcast %1 : vector<2x1x8xf32> to vector<2x8x8xf32>
    %73 = arith.addf %71, %72 : vector<2x8x8xf32>
    %cst_68 = arith.constant dense<0xFF800000> : vector<2x8xf32>
    %74 = vector.multi_reduction <maximumf>, %73, %cst_68 [2] : vector<2x8x8xf32> to vector<2x8xf32>
    %75 = vector.shape_cast %74 : vector<2x8xf32> to vector<2x8x1xf32>
    %76 = vector.broadcast %75 : vector<2x8x1xf32> to vector<2x8x8xf32>
    %77 = arith.subf %73, %76 : vector<2x8x8xf32>
    %78 = math.exp %77 : vector<2x8x8xf32>
    %cst_69 = arith.constant dense<0.000000e+00> : vector<2x8xf32>
    %79 = vector.multi_reduction <add>, %78, %cst_69 [2] : vector<2x8x8xf32> to vector<2x8xf32>
    %80 = vector.shape_cast %79 : vector<2x8xf32> to vector<2x8x1xf32>
    %81 = vector.broadcast %80 : vector<2x8x1xf32> to vector<2x8x8xf32>
    %82 = arith.divf %78, %81 : vector<2x8x8xf32>
    "tpu.trace_start"() <{level = 10 : i32, message = "bqk,bkd->bqd"}> : () -> ()
    %cst_70 = arith.constant dense<0.000000e+00> : vector<2x8x16xf32>
    %83 = tpu.matmul %82, %68, %cst_70 {dimension_numbers = #tpu.dot_dimension_numbers<[2], [1], [1], [2], [0, 0, 0, 1, 1, 2], [0], [0]>} : vector<2x8x8xf32>, vector<2x8x16xf32>, vector<2x8x16xf32> -> vector<2x8x16xf32>
    "tpu.trace_stop"() : () -> ()
    %84 = vector.shape_cast %83 : vector<2x8x16xf32> to vector<16x16xf32>
    %c0_71 = arith.constant 0 : index
    %c1_72 = arith.constant 1 : index
    %c0_73 = arith.constant 0 : index
    %c0_74 = arith.constant 0 : index
    %85 = vector.load %arg10[%c0_71, %c1_72, %c0_73, %c0_74] : memref<2x2x16x32xf32, #tpu.memory_space<vmem>>, vector<1x1x16x32xf32>
    %86 = vector.shape_cast %85 : vector<1x1x16x32xf32> to vector<16x32xf32>
    %cst_75 = arith.constant dense<0.000000e+00> : vector<16x32xf32>
    %87 = tpu.matmul %84, %86, %cst_75 {dimension_numbers = #tpu.dot_dimension_numbers<[1], [0], [0], [1], [0, 0, 1, 1], [], []>} : vector<16x16xf32>, vector<16x32xf32>, vector<16x32xf32> -> vector<16x32xf32>
    %88 = arith.addf %44, %87 : vector<16x32xf32>
    %c0_76 = arith.constant 0 : index
    %c0_77 = arith.constant 0 : index
    %c0_78 = arith.constant 0 : index
    %89 = vector.load %arg11[%c0_76, %c0_77, %c0_78] : memref<2x1x32xf32, #tpu.memory_space<vmem>>, vector<1x1x32xf32>
    %90 = vector.shape_cast %89 : vector<1x1x32xf32> to vector<1x32xf32>
    %91 = vector.broadcast %90 : vector<1x32xf32> to vector<16x32xf32>
    %92 = arith.addf %88, %91 : vector<16x32xf32>
    %93 = arith.addf %0, %92 : vector<16x32xf32>
    %c0_79 = arith.constant 0 : index
    %c0_80 = arith.constant 0 : index
    %c0_81 = arith.constant 0 : index
    %94 = vector.load %arg12[%c0_79, %c0_80, %c0_81] : memref<2x2x32xf32, #tpu.memory_space<vmem>>, vector<1x2x32xf32>
    %95 = vector.shape_cast %94 : vector<1x2x32xf32> to vector<2x32xf32>
    %96 = vector.extract_strided_slice %95 {offsets = [0, 0], sizes = [1, 32], strides = [1, 1]} : vector<2x32xf32> to vector<1x32xf32>
    %97 = vector.extract_strided_slice %95 {offsets = [1, 0], sizes = [1, 32], strides = [1, 1]} : vector<2x32xf32> to vector<1x32xf32>
    %cst_82 = arith.constant dense<0.000000e+00> : vector<16xf32>
    %98 = vector.multi_reduction <add>, %93, %cst_82 [1] : vector<16x32xf32> to vector<16xf32>
    %99 = vector.shape_cast %98 : vector<16xf32> to vector<16x1xf32>
    %cst_83 = arith.constant 3.200000e+01 : f32
    %100 = vector.broadcast %cst_83 : f32 to vector<16x1xf32>
    %101 = arith.divf %99, %100 : vector<16x1xf32>
    %102 = vector.broadcast %101 : vector<16x1xf32> to vector<16x32xf32>
    %103 = arith.subf %93, %102 : vector<16x32xf32>
    %104 = arith.mulf %103, %103 : vector<16x32xf32>
    %cst_84 = arith.constant dense<0.000000e+00> : vector<16xf32>
    %105 = vector.multi_reduction <add>, %104, %cst_84 [1] : vector<16x32xf32> to vector<16xf32>
    %106 = vector.shape_cast %105 : vector<16xf32> to vector<16x1xf32>
    %cst_85 = arith.constant 3.200000e+01 : f32
    %107 = vector.broadcast %cst_85 : f32 to vector<16x1xf32>
    %108 = arith.divf %106, %107 : vector<16x1xf32>
    %109 = vector.broadcast %101 : vector<16x1xf32> to vector<16x32xf32>
    %110 = arith.subf %93, %109 : vector<16x32xf32>
    %cst_86 = arith.constant 9.99999974E-6 : f32
    %111 = vector.broadcast %cst_86 : f32 to vector<16x1xf32>
    %112 = arith.addf %108, %111 : vector<16x1xf32>
    %113 = math.rsqrt %112 : vector<16x1xf32>
    %114 = vector.broadcast %113 : vector<16x1xf32> to vector<16x32xf32>
    %115 = arith.mulf %110, %114 : vector<16x32xf32>
    %116 = vector.broadcast %96 : vector<1x32xf32> to vector<16x32xf32>
    %117 = arith.mulf %115, %116 : vector<16x32xf32>
    %118 = vector.broadcast %97 : vector<1x32xf32> to vector<16x32xf32>
    %119 = arith.addf %117, %118 : vector<16x32xf32>
    %c0_87 = arith.constant 0 : index
    %c0_88 = arith.constant 0 : index
    %c0_89 = arith.constant 0 : index
    %120 = vector.load %arg13[%c0_87, %c0_88, %c0_89] : memref<2x32x64xf32, #tpu.memory_space<vmem>>, vector<1x32x64xf32>
    %121 = vector.shape_cast %120 : vector<1x32x64xf32> to vector<32x64xf32>
    %cst_90 = arith.constant dense<0.000000e+00> : vector<16x64xf32>
    %122 = tpu.matmul %119, %121, %cst_90 {dimension_numbers = #tpu.dot_dimension_numbers<[1], [0], [0], [1], [0, 0, 1, 1], [], []>} : vector<16x32xf32>, vector<32x64xf32>, vector<16x64xf32> -> vector<16x64xf32>
    %c0_91 = arith.constant 0 : index
    %c0_92 = arith.constant 0 : index
    %c0_93 = arith.constant 0 : index
    %123 = vector.load %arg14[%c0_91, %c0_92, %c0_93] : memref<2x1x64xf32, #tpu.memory_space<vmem>>, vector<1x1x64xf32>
    %124 = vector.shape_cast %123 : vector<1x1x64xf32> to vector<1x64xf32>
    %125 = vector.broadcast %124 : vector<1x64xf32> to vector<16x64xf32>
    %126 = arith.addf %122, %125 : vector<16x64xf32>
    %cst_94 = arith.constant 5.000000e-01 : f32
    %127 = vector.broadcast %cst_94 : f32 to vector<16x64xf32>
    %128 = arith.mulf %127, %126 : vector<16x64xf32>
    %cst_95 = arith.constant 0.707106769 : f32
    %129 = vector.broadcast %cst_95 : f32 to vector<16x64xf32>
    %130 = arith.mulf %126, %129 : vector<16x64xf32>
    %131 = math.absf %130 : vector<16x64xf32>
    %cst_96 = arith.constant 0.327591091 : f32
    %132 = vector.broadcast %cst_96 : f32 to vector<16x64xf32>
    %133 = arith.mulf %132, %131 : vector<16x64xf32>
    %cst_97 = arith.constant 1.000000e+00 : f32
    %134 = vector.broadcast %cst_97 : f32 to vector<16x64xf32>
    %135 = arith.addf %134, %133 : vector<16x64xf32>
    %cst_98 = arith.constant 1.000000e+00 : f32
    %136 = vector.broadcast %cst_98 : f32 to vector<16x64xf32>
    %137 = arith.divf %136, %135 : vector<16x64xf32>
    %cst_99 = arith.constant 1.06140542 : f32
    %138 = vector.broadcast %cst_99 : f32 to vector<16x64xf32>
    %139 = arith.mulf %138, %137 : vector<16x64xf32>
    %cst_100 = arith.constant 1.45315206 : f32
    %140 = vector.broadcast %cst_100 : f32 to vector<16x64xf32>
    %141 = arith.subf %139, %140 : vector<16x64xf32>
    %142 = arith.mulf %141, %137 : vector<16x64xf32>
    %cst_101 = arith.constant 1.42141378 : f32
    %143 = vector.broadcast %cst_101 : f32 to vector<16x64xf32>
    %144 = arith.addf %142, %143 : vector<16x64xf32>
    %145 = arith.mulf %144, %137 : vector<16x64xf32>
    %cst_102 = arith.constant 0.284496725 : f32
    %146 = vector.broadcast %cst_102 : f32 to vector<16x64xf32>
    %147 = arith.subf %145, %146 : vector<16x64xf32>
    %148 = arith.mulf %147, %137 : vector<16x64xf32>
    %cst_103 = arith.constant 0.254829586 : f32
    %149 = vector.broadcast %cst_103 : f32 to vector<16x64xf32>
    %150 = arith.addf %148, %149 : vector<16x64xf32>
    %151 = arith.mulf %150, %137 : vector<16x64xf32>
    %cst_104 = arith.constant 0.000000e+00 : f32
    %152 = vector.broadcast %cst_104 : f32 to vector<16x64xf32>
    %153 = arith.subf %152, %130 : vector<16x64xf32>
    %154 = arith.mulf %153, %130 : vector<16x64xf32>
    %155 = math.exp %154 : vector<16x64xf32>
    %156 = arith.mulf %151, %155 : vector<16x64xf32>
    %cst_105 = arith.constant 1.000000e+00 : f32
    %157 = vector.broadcast %cst_105 : f32 to vector<16x64xf32>
    %158 = arith.subf %157, %156 : vector<16x64xf32>
    %cst_106 = arith.constant 0.000000e+00 : f32
    %159 = vector.broadcast %cst_106 : f32 to vector<16x64xf32>
    %160 = arith.cmpf oge, %130, %159 : vector<16x64xf32>
    %cst_107 = arith.constant 0.000000e+00 : f32
    %161 = vector.broadcast %cst_107 : f32 to vector<16x64xf32>
    %162 = arith.subf %161, %158 : vector<16x64xf32>
    %163 = arith.select %160, %158, %162 : vector<16x64xi1>, vector<16x64xf32>
    %cst_108 = arith.constant 1.000000e+00 : f32
    %164 = vector.broadcast %cst_108 : f32 to vector<16x64xf32>
    %165 = arith.addf %164, %163 : vector<16x64xf32>
    %166 = arith.mulf %128, %165 : vector<16x64xf32>
    %c0_109 = arith.constant 0 : index
    %c0_110 = arith.constant 0 : index
    %c0_111 = arith.constant 0 : index
    %167 = vector.load %arg15[%c0_109, %c0_110, %c0_111] : memref<2x64x32xf32, #tpu.memory_space<vmem>>, vector<1x64x32xf32>
    %168 = vector.shape_cast %167 : vector<1x64x32xf32> to vector<64x32xf32>
    %cst_112 = arith.constant dense<0.000000e+00> : vector<16x32xf32>
    %169 = tpu.matmul %166, %168, %cst_112 {dimension_numbers = #tpu.dot_dimension_numbers<[1], [0], [0], [1], [0, 0, 1, 1], [], []>} : vector<16x64xf32>, vector<64x32xf32>, vector<16x32xf32> -> vector<16x32xf32>
    %c0_113 = arith.constant 0 : index
    %c0_114 = arith.constant 0 : index
    %c0_115 = arith.constant 0 : index
    %170 = vector.load %arg16[%c0_113, %c0_114, %c0_115] : memref<2x1x32xf32, #tpu.memory_space<vmem>>, vector<1x1x32xf32>
    %171 = vector.shape_cast %170 : vector<1x1x32xf32> to vector<1x32xf32>
    %172 = vector.broadcast %171 : vector<1x32xf32> to vector<16x32xf32>
    %173 = arith.addf %169, %172 : vector<16x32xf32>
    %174 = arith.addf %119, %173 : vector<16x32xf32>
    %c0_116 = arith.constant 0 : index
    %c0_117 = arith.constant 0 : index
    %c0_118 = arith.constant 0 : index
    %175 = vector.load %arg17[%c0_116, %c0_117, %c0_118] : memref<2x2x32xf32, #tpu.memory_space<vmem>>, vector<1x2x32xf32>
    %176 = vector.shape_cast %175 : vector<1x2x32xf32> to vector<2x32xf32>
    %177 = vector.extract_strided_slice %176 {offsets = [0, 0], sizes = [1, 32], strides = [1, 1]} : vector<2x32xf32> to vector<1x32xf32>
    %178 = vector.extract_strided_slice %176 {offsets = [1, 0], sizes = [1, 32], strides = [1, 1]} : vector<2x32xf32> to vector<1x32xf32>
    %cst_119 = arith.constant dense<0.000000e+00> : vector<16xf32>
    %179 = vector.multi_reduction <add>, %174, %cst_119 [1] : vector<16x32xf32> to vector<16xf32>
    %180 = vector.shape_cast %179 : vector<16xf32> to vector<16x1xf32>
    %cst_120 = arith.constant 3.200000e+01 : f32
    %181 = vector.broadcast %cst_120 : f32 to vector<16x1xf32>
    %182 = arith.divf %180, %181 : vector<16x1xf32>
    %183 = vector.broadcast %182 : vector<16x1xf32> to vector<16x32xf32>
    %184 = arith.subf %174, %183 : vector<16x32xf32>
    %185 = arith.mulf %184, %184 : vector<16x32xf32>
    %cst_121 = arith.constant dense<0.000000e+00> : vector<16xf32>
    %186 = vector.multi_reduction <add>, %185, %cst_121 [1] : vector<16x32xf32> to vector<16xf32>
    %187 = vector.shape_cast %186 : vector<16xf32> to vector<16x1xf32>
    %cst_122 = arith.constant 3.200000e+01 : f32
    %188 = vector.broadcast %cst_122 : f32 to vector<16x1xf32>
    %189 = arith.divf %187, %188 : vector<16x1xf32>
    %190 = vector.broadcast %182 : vector<16x1xf32> to vector<16x32xf32>
    %191 = arith.subf %174, %190 : vector<16x32xf32>
    %cst_123 = arith.constant 9.99999974E-6 : f32
    %192 = vector.broadcast %cst_123 : f32 to vector<16x1xf32>
    %193 = arith.addf %189, %192 : vector<16x1xf32>
    %194 = math.rsqrt %193 : vector<16x1xf32>
    %195 = vector.broadcast %194 : vector<16x1xf32> to vector<16x32xf32>
    %196 = arith.mulf %191, %195 : vector<16x32xf32>
    %197 = vector.broadcast %177 : vector<1x32xf32> to vector<16x32xf32>
    %198 = arith.mulf %196, %197 : vector<16x32xf32>
    %199 = vector.broadcast %178 : vector<1x32xf32> to vector<16x32xf32>
    %200 = arith.addf %198, %199 : vector<16x32xf32>
    %c1_124 = arith.constant 1 : index
    %c0_125 = arith.constant 0 : index
    %c0_126 = arith.constant 0 : index
    %c0_127 = arith.constant 0 : index
    %201 = vector.load %arg4[%c1_124, %c0_125, %c0_126, %c0_127] : memref<2x2x32x16xf32, #tpu.memory_space<vmem>>, vector<1x1x32x16xf32>
    %202 = vector.shape_cast %201 : vector<1x1x32x16xf32> to vector<32x16xf32>
    %cst_128 = arith.constant dense<0.000000e+00> : vector<16x16xf32>
    %203 = tpu.matmul %200, %202, %cst_128 {dimension_numbers = #tpu.dot_dimension_numbers<[1], [0], [0], [1], [0, 0, 1, 1], [], []>} : vector<16x32xf32>, vector<32x16xf32>, vector<16x16xf32> -> vector<16x16xf32>
    %c1_129 = arith.constant 1 : index
    %c0_130 = arith.constant 0 : index
    %c0_131 = arith.constant 0 : index
    %c0_132 = arith.constant 0 : index
    %204 = vector.load %arg7[%c1_129, %c0_130, %c0_131, %c0_132] : memref<2x2x1x16xf32, #tpu.memory_space<vmem>>, vector<1x1x1x16xf32>
    %205 = vector.shape_cast %204 : vector<1x1x1x16xf32> to vector<1x16xf32>
    %206 = vector.broadcast %205 : vector<1x16xf32> to vector<16x16xf32>
    %207 = arith.addf %203, %206 : vector<16x16xf32>
    %208 = vector.shape_cast %207 : vector<16x16xf32> to vector<2x8x16xf32>
    %c1_133 = arith.constant 1 : index
    %c0_134 = arith.constant 0 : index
    %c0_135 = arith.constant 0 : index
    %c0_136 = arith.constant 0 : index
    %209 = vector.load %arg5[%c1_133, %c0_134, %c0_135, %c0_136] : memref<2x2x32x16xf32, #tpu.memory_space<vmem>>, vector<1x1x32x16xf32>
    %210 = vector.shape_cast %209 : vector<1x1x32x16xf32> to vector<32x16xf32>
    %cst_137 = arith.constant dense<0.000000e+00> : vector<16x16xf32>
    %211 = tpu.matmul %200, %210, %cst_137 {dimension_numbers = #tpu.dot_dimension_numbers<[1], [0], [0], [1], [0, 0, 1, 1], [], []>} : vector<16x32xf32>, vector<32x16xf32>, vector<16x16xf32> -> vector<16x16xf32>
    %c1_138 = arith.constant 1 : index
    %c0_139 = arith.constant 0 : index
    %c0_140 = arith.constant 0 : index
    %c0_141 = arith.constant 0 : index
    %212 = vector.load %arg8[%c1_138, %c0_139, %c0_140, %c0_141] : memref<2x2x1x16xf32, #tpu.memory_space<vmem>>, vector<1x1x1x16xf32>
    %213 = vector.shape_cast %212 : vector<1x1x1x16xf32> to vector<1x16xf32>
    %214 = vector.broadcast %213 : vector<1x16xf32> to vector<16x16xf32>
    %215 = arith.addf %211, %214 : vector<16x16xf32>
    %216 = vector.shape_cast %215 : vector<16x16xf32> to vector<2x8x16xf32>
    %c1_142 = arith.constant 1 : index
    %c0_143 = arith.constant 0 : index
    %c0_144 = arith.constant 0 : index
    %c0_145 = arith.constant 0 : index
    %217 = vector.load %arg6[%c1_142, %c0_143, %c0_144, %c0_145] : memref<2x2x32x16xf32, #tpu.memory_space<vmem>>, vector<1x1x32x16xf32>
    %218 = vector.shape_cast %217 : vector<1x1x32x16xf32> to vector<32x16xf32>
    %cst_146 = arith.constant dense<0.000000e+00> : vector<16x16xf32>
    %219 = tpu.matmul %200, %218, %cst_146 {dimension_numbers = #tpu.dot_dimension_numbers<[1], [0], [0], [1], [0, 0, 1, 1], [], []>} : vector<16x32xf32>, vector<32x16xf32>, vector<16x16xf32> -> vector<16x16xf32>
    %c1_147 = arith.constant 1 : index
    %c0_148 = arith.constant 0 : index
    %c0_149 = arith.constant 0 : index
    %c0_150 = arith.constant 0 : index
    %220 = vector.load %arg9[%c1_147, %c0_148, %c0_149, %c0_150] : memref<2x2x1x16xf32, #tpu.memory_space<vmem>>, vector<1x1x1x16xf32>
    %221 = vector.shape_cast %220 : vector<1x1x1x16xf32> to vector<1x16xf32>
    %222 = vector.broadcast %221 : vector<1x16xf32> to vector<16x16xf32>
    %223 = arith.addf %219, %222 : vector<16x16xf32>
    %224 = vector.shape_cast %223 : vector<16x16xf32> to vector<2x8x16xf32>
    "tpu.trace_start"() <{level = 10 : i32, message = "bqd,bkd->bqk"}> : () -> ()
    %cst_151 = arith.constant dense<0.000000e+00> : vector<2x8x8xf32>
    %225 = tpu.matmul %208, %216, %cst_151 {dimension_numbers = #tpu.dot_dimension_numbers<[2], [2], [1], [1], [0, 0, 0, 1, 1, 1], [0], [0]>} : vector<2x8x16xf32>, vector<2x8x16xf32>, vector<2x8x8xf32> -> vector<2x8x8xf32>
    "tpu.trace_stop"() : () -> ()
    %cst_152 = arith.constant 2.500000e-01 : f32
    %226 = vector.broadcast %cst_152 : f32 to vector<2x8x8xf32>
    %227 = arith.mulf %225, %226 : vector<2x8x8xf32>
    %228 = vector.broadcast %1 : vector<2x1x8xf32> to vector<2x8x8xf32>
    %229 = arith.addf %227, %228 : vector<2x8x8xf32>
    %cst_153 = arith.constant dense<0xFF800000> : vector<2x8xf32>
    %230 = vector.multi_reduction <maximumf>, %229, %cst_153 [2] : vector<2x8x8xf32> to vector<2x8xf32>
    %231 = vector.shape_cast %230 : vector<2x8xf32> to vector<2x8x1xf32>
    %232 = vector.broadcast %231 : vector<2x8x1xf32> to vector<2x8x8xf32>
    %233 = arith.subf %229, %232 : vector<2x8x8xf32>
    %234 = math.exp %233 : vector<2x8x8xf32>
    %cst_154 = arith.constant dense<0.000000e+00> : vector<2x8xf32>
    %235 = vector.multi_reduction <add>, %234, %cst_154 [2] : vector<2x8x8xf32> to vector<2x8xf32>
    %236 = vector.shape_cast %235 : vector<2x8xf32> to vector<2x8x1xf32>
    %237 = vector.broadcast %236 : vector<2x8x1xf32> to vector<2x8x8xf32>
    %238 = arith.divf %234, %237 : vector<2x8x8xf32>
    "tpu.trace_start"() <{level = 10 : i32, message = "bqk,bkd->bqd"}> : () -> ()
    %cst_155 = arith.constant dense<0.000000e+00> : vector<2x8x16xf32>
    %239 = tpu.matmul %238, %224, %cst_155 {dimension_numbers = #tpu.dot_dimension_numbers<[2], [1], [1], [2], [0, 0, 0, 1, 1, 2], [0], [0]>} : vector<2x8x8xf32>, vector<2x8x16xf32>, vector<2x8x16xf32> -> vector<2x8x16xf32>
    "tpu.trace_stop"() : () -> ()
    %240 = vector.shape_cast %239 : vector<2x8x16xf32> to vector<16x16xf32>
    %c1_156 = arith.constant 1 : index
    %c0_157 = arith.constant 0 : index
    %c0_158 = arith.constant 0 : index
    %c0_159 = arith.constant 0 : index
    %241 = vector.load %arg10[%c1_156, %c0_157, %c0_158, %c0_159] : memref<2x2x16x32xf32, #tpu.memory_space<vmem>>, vector<1x1x16x32xf32>
    %242 = vector.shape_cast %241 : vector<1x1x16x32xf32> to vector<16x32xf32>
    %cst_160 = arith.constant dense<0.000000e+00> : vector<16x32xf32>
    %243 = tpu.matmul %240, %242, %cst_160 {dimension_numbers = #tpu.dot_dimension_numbers<[1], [0], [0], [1], [0, 0, 1, 1], [], []>} : vector<16x16xf32>, vector<16x32xf32>, vector<16x32xf32> -> vector<16x32xf32>
    %c1_161 = arith.constant 1 : index
    %c1_162 = arith.constant 1 : index
    %c0_163 = arith.constant 0 : index
    %c0_164 = arith.constant 0 : index
    %244 = vector.load %arg4[%c1_161, %c1_162, %c0_163, %c0_164] : memref<2x2x32x16xf32, #tpu.memory_space<vmem>>, vector<1x1x32x16xf32>
    %245 = vector.shape_cast %244 : vector<1x1x32x16xf32> to vector<32x16xf32>
    %cst_165 = arith.constant dense<0.000000e+00> : vector<16x16xf32>
    %246 = tpu.matmul %200, %245, %cst_165 {dimension_numbers = #tpu.dot_dimension_numbers<[1], [0], [0], [1], [0, 0, 1, 1], [], []>} : vector<16x32xf32>, vector<32x16xf32>, vector<16x16xf32> -> vector<16x16xf32>
    %c1_166 = arith.constant 1 : index
    %c1_167 = arith.constant 1 : index
    %c0_168 = arith.constant 0 : index
    %c0_169 = arith.constant 0 : index
    %247 = vector.load %arg7[%c1_166, %c1_167, %c0_168, %c0_169] : memref<2x2x1x16xf32, #tpu.memory_space<vmem>>, vector<1x1x1x16xf32>
    %248 = vector.shape_cast %247 : vector<1x1x1x16xf32> to vector<1x16xf32>
    %249 = vector.broadcast %248 : vector<1x16xf32> to vector<16x16xf32>
    %250 = arith.addf %246, %249 : vector<16x16xf32>
    %251 = vector.shape_cast %250 : vector<16x16xf32> to vector<2x8x16xf32>
    %c1_170 = arith.constant 1 : index
    %c1_171 = arith.constant 1 : index
    %c0_172 = arith.constant 0 : index
    %c0_173 = arith.constant 0 : index
    %252 = vector.load %arg5[%c1_170, %c1_171, %c0_172, %c0_173] : memref<2x2x32x16xf32, #tpu.memory_space<vmem>>, vector<1x1x32x16xf32>
    %253 = vector.shape_cast %252 : vector<1x1x32x16xf32> to vector<32x16xf32>
    %cst_174 = arith.constant dense<0.000000e+00> : vector<16x16xf32>
    %254 = tpu.matmul %200, %253, %cst_174 {dimension_numbers = #tpu.dot_dimension_numbers<[1], [0], [0], [1], [0, 0, 1, 1], [], []>} : vector<16x32xf32>, vector<32x16xf32>, vector<16x16xf32> -> vector<16x16xf32>
    %c1_175 = arith.constant 1 : index
    %c1_176 = arith.constant 1 : index
    %c0_177 = arith.constant 0 : index
    %c0_178 = arith.constant 0 : index
    %255 = vector.load %arg8[%c1_175, %c1_176, %c0_177, %c0_178] : memref<2x2x1x16xf32, #tpu.memory_space<vmem>>, vector<1x1x1x16xf32>
    %256 = vector.shape_cast %255 : vector<1x1x1x16xf32> to vector<1x16xf32>
    %257 = vector.broadcast %256 : vector<1x16xf32> to vector<16x16xf32>
    %258 = arith.addf %254, %257 : vector<16x16xf32>
    %259 = vector.shape_cast %258 : vector<16x16xf32> to vector<2x8x16xf32>
    %c1_179 = arith.constant 1 : index
    %c1_180 = arith.constant 1 : index
    %c0_181 = arith.constant 0 : index
    %c0_182 = arith.constant 0 : index
    %260 = vector.load %arg6[%c1_179, %c1_180, %c0_181, %c0_182] : memref<2x2x32x16xf32, #tpu.memory_space<vmem>>, vector<1x1x32x16xf32>
    %261 = vector.shape_cast %260 : vector<1x1x32x16xf32> to vector<32x16xf32>
    %cst_183 = arith.constant dense<0.000000e+00> : vector<16x16xf32>
    %262 = tpu.matmul %200, %261, %cst_183 {dimension_numbers = #tpu.dot_dimension_numbers<[1], [0], [0], [1], [0, 0, 1, 1], [], []>} : vector<16x32xf32>, vector<32x16xf32>, vector<16x16xf32> -> vector<16x16xf32>
    %c1_184 = arith.constant 1 : index
    %c1_185 = arith.constant 1 : index
    %c0_186 = arith.constant 0 : index
    %c0_187 = arith.constant 0 : index
    %263 = vector.load %arg9[%c1_184, %c1_185, %c0_186, %c0_187] : memref<2x2x1x16xf32, #tpu.memory_space<vmem>>, vector<1x1x1x16xf32>
    %264 = vector.shape_cast %263 : vector<1x1x1x16xf32> to vector<1x16xf32>
    %265 = vector.broadcast %264 : vector<1x16xf32> to vector<16x16xf32>
    %266 = arith.addf %262, %265 : vector<16x16xf32>
    %267 = vector.shape_cast %266 : vector<16x16xf32> to vector<2x8x16xf32>
    "tpu.trace_start"() <{level = 10 : i32, message = "bqd,bkd->bqk"}> : () -> ()
    %cst_188 = arith.constant dense<0.000000e+00> : vector<2x8x8xf32>
    %268 = tpu.matmul %251, %259, %cst_188 {dimension_numbers = #tpu.dot_dimension_numbers<[2], [2], [1], [1], [0, 0, 0, 1, 1, 1], [0], [0]>} : vector<2x8x16xf32>, vector<2x8x16xf32>, vector<2x8x8xf32> -> vector<2x8x8xf32>
    "tpu.trace_stop"() : () -> ()
    %cst_189 = arith.constant 2.500000e-01 : f32
    %269 = vector.broadcast %cst_189 : f32 to vector<2x8x8xf32>
    %270 = arith.mulf %268, %269 : vector<2x8x8xf32>
    %271 = vector.broadcast %1 : vector<2x1x8xf32> to vector<2x8x8xf32>
    %272 = arith.addf %270, %271 : vector<2x8x8xf32>
    %cst_190 = arith.constant dense<0xFF800000> : vector<2x8xf32>
    %273 = vector.multi_reduction <maximumf>, %272, %cst_190 [2] : vector<2x8x8xf32> to vector<2x8xf32>
    %274 = vector.shape_cast %273 : vector<2x8xf32> to vector<2x8x1xf32>
    %275 = vector.broadcast %274 : vector<2x8x1xf32> to vector<2x8x8xf32>
    %276 = arith.subf %272, %275 : vector<2x8x8xf32>
    %277 = math.exp %276 : vector<2x8x8xf32>
    %cst_191 = arith.constant dense<0.000000e+00> : vector<2x8xf32>
    %278 = vector.multi_reduction <add>, %277, %cst_191 [2] : vector<2x8x8xf32> to vector<2x8xf32>
    %279 = vector.shape_cast %278 : vector<2x8xf32> to vector<2x8x1xf32>
    %280 = vector.broadcast %279 : vector<2x8x1xf32> to vector<2x8x8xf32>
    %281 = arith.divf %277, %280 : vector<2x8x8xf32>
    "tpu.trace_start"() <{level = 10 : i32, message = "bqk,bkd->bqd"}> : () -> ()
    %cst_192 = arith.constant dense<0.000000e+00> : vector<2x8x16xf32>
    %282 = tpu.matmul %281, %267, %cst_192 {dimension_numbers = #tpu.dot_dimension_numbers<[2], [1], [1], [2], [0, 0, 0, 1, 1, 2], [0], [0]>} : vector<2x8x8xf32>, vector<2x8x16xf32>, vector<2x8x16xf32> -> vector<2x8x16xf32>
    "tpu.trace_stop"() : () -> ()
    %283 = vector.shape_cast %282 : vector<2x8x16xf32> to vector<16x16xf32>
    %c1_193 = arith.constant 1 : index
    %c1_194 = arith.constant 1 : index
    %c0_195 = arith.constant 0 : index
    %c0_196 = arith.constant 0 : index
    %284 = vector.load %arg10[%c1_193, %c1_194, %c0_195, %c0_196] : memref<2x2x16x32xf32, #tpu.memory_space<vmem>>, vector<1x1x16x32xf32>
    %285 = vector.shape_cast %284 : vector<1x1x16x32xf32> to vector<16x32xf32>
    %cst_197 = arith.constant dense<0.000000e+00> : vector<16x32xf32>
    %286 = tpu.matmul %283, %285, %cst_197 {dimension_numbers = #tpu.dot_dimension_numbers<[1], [0], [0], [1], [0, 0, 1, 1], [], []>} : vector<16x16xf32>, vector<16x32xf32>, vector<16x32xf32> -> vector<16x32xf32>
    %287 = arith.addf %243, %286 : vector<16x32xf32>
    %c1_198 = arith.constant 1 : index
    %c0_199 = arith.constant 0 : index
    %c0_200 = arith.constant 0 : index
    %288 = vector.load %arg11[%c1_198, %c0_199, %c0_200] : memref<2x1x32xf32, #tpu.memory_space<vmem>>, vector<1x1x32xf32>
    %289 = vector.shape_cast %288 : vector<1x1x32xf32> to vector<1x32xf32>
    %290 = vector.broadcast %289 : vector<1x32xf32> to vector<16x32xf32>
    %291 = arith.addf %287, %290 : vector<16x32xf32>
    %292 = arith.addf %200, %291 : vector<16x32xf32>
    %c1_201 = arith.constant 1 : index
    %c0_202 = arith.constant 0 : index
    %c0_203 = arith.constant 0 : index
    %293 = vector.load %arg12[%c1_201, %c0_202, %c0_203] : memref<2x2x32xf32, #tpu.memory_space<vmem>>, vector<1x2x32xf32>
    %294 = vector.shape_cast %293 : vector<1x2x32xf32> to vector<2x32xf32>
    %295 = vector.extract_strided_slice %294 {offsets = [0, 0], sizes = [1, 32], strides = [1, 1]} : vector<2x32xf32> to vector<1x32xf32>
    %296 = vector.extract_strided_slice %294 {offsets = [1, 0], sizes = [1, 32], strides = [1, 1]} : vector<2x32xf32> to vector<1x32xf32>
    %cst_204 = arith.constant dense<0.000000e+00> : vector<16xf32>
    %297 = vector.multi_reduction <add>, %292, %cst_204 [1] : vector<16x32xf32> to vector<16xf32>
    %298 = vector.shape_cast %297 : vector<16xf32> to vector<16x1xf32>
    %cst_205 = arith.constant 3.200000e+01 : f32
    %299 = vector.broadcast %cst_205 : f32 to vector<16x1xf32>
    %300 = arith.divf %298, %299 : vector<16x1xf32>
    %301 = vector.broadcast %300 : vector<16x1xf32> to vector<16x32xf32>
    %302 = arith.subf %292, %301 : vector<16x32xf32>
    %303 = arith.mulf %302, %302 : vector<16x32xf32>
    %cst_206 = arith.constant dense<0.000000e+00> : vector<16xf32>
    %304 = vector.multi_reduction <add>, %303, %cst_206 [1] : vector<16x32xf32> to vector<16xf32>
    %305 = vector.shape_cast %304 : vector<16xf32> to vector<16x1xf32>
    %cst_207 = arith.constant 3.200000e+01 : f32
    %306 = vector.broadcast %cst_207 : f32 to vector<16x1xf32>
    %307 = arith.divf %305, %306 : vector<16x1xf32>
    %308 = vector.broadcast %300 : vector<16x1xf32> to vector<16x32xf32>
    %309 = arith.subf %292, %308 : vector<16x32xf32>
    %cst_208 = arith.constant 9.99999974E-6 : f32
    %310 = vector.broadcast %cst_208 : f32 to vector<16x1xf32>
    %311 = arith.addf %307, %310 : vector<16x1xf32>
    %312 = math.rsqrt %311 : vector<16x1xf32>
    %313 = vector.broadcast %312 : vector<16x1xf32> to vector<16x32xf32>
    %314 = arith.mulf %309, %313 : vector<16x32xf32>
    %315 = vector.broadcast %295 : vector<1x32xf32> to vector<16x32xf32>
    %316 = arith.mulf %314, %315 : vector<16x32xf32>
    %317 = vector.broadcast %296 : vector<1x32xf32> to vector<16x32xf32>
    %318 = arith.addf %316, %317 : vector<16x32xf32>
    %c1_209 = arith.constant 1 : index
    %c0_210 = arith.constant 0 : index
    %c0_211 = arith.constant 0 : index
    %319 = vector.load %arg13[%c1_209, %c0_210, %c0_211] : memref<2x32x64xf32, #tpu.memory_space<vmem>>, vector<1x32x64xf32>
    %320 = vector.shape_cast %319 : vector<1x32x64xf32> to vector<32x64xf32>
    %cst_212 = arith.constant dense<0.000000e+00> : vector<16x64xf32>
    %321 = tpu.matmul %318, %320, %cst_212 {dimension_numbers = #tpu.dot_dimension_numbers<[1], [0], [0], [1], [0, 0, 1, 1], [], []>} : vector<16x32xf32>, vector<32x64xf32>, vector<16x64xf32> -> vector<16x64xf32>
    %c1_213 = arith.constant 1 : index
    %c0_214 = arith.constant 0 : index
    %c0_215 = arith.constant 0 : index
    %322 = vector.load %arg14[%c1_213, %c0_214, %c0_215] : memref<2x1x64xf32, #tpu.memory_space<vmem>>, vector<1x1x64xf32>
    %323 = vector.shape_cast %322 : vector<1x1x64xf32> to vector<1x64xf32>
    %324 = vector.broadcast %323 : vector<1x64xf32> to vector<16x64xf32>
    %325 = arith.addf %321, %324 : vector<16x64xf32>
    %cst_216 = arith.constant 5.000000e-01 : f32
    %326 = vector.broadcast %cst_216 : f32 to vector<16x64xf32>
    %327 = arith.mulf %326, %325 : vector<16x64xf32>
    %cst_217 = arith.constant 0.707106769 : f32
    %328 = vector.broadcast %cst_217 : f32 to vector<16x64xf32>
    %329 = arith.mulf %325, %328 : vector<16x64xf32>
    %330 = math.absf %329 : vector<16x64xf32>
    %cst_218 = arith.constant 0.327591091 : f32
    %331 = vector.broadcast %cst_218 : f32 to vector<16x64xf32>
    %332 = arith.mulf %331, %330 : vector<16x64xf32>
    %cst_219 = arith.constant 1.000000e+00 : f32
    %333 = vector.broadcast %cst_219 : f32 to vector<16x64xf32>
    %334 = arith.addf %333, %332 : vector<16x64xf32>
    %cst_220 = arith.constant 1.000000e+00 : f32
    %335 = vector.broadcast %cst_220 : f32 to vector<16x64xf32>
    %336 = arith.divf %335, %334 : vector<16x64xf32>
    %cst_221 = arith.constant 1.06140542 : f32
    %337 = vector.broadcast %cst_221 : f32 to vector<16x64xf32>
    %338 = arith.mulf %337, %336 : vector<16x64xf32>
    %cst_222 = arith.constant 1.45315206 : f32
    %339 = vector.broadcast %cst_222 : f32 to vector<16x64xf32>
    %340 = arith.subf %338, %339 : vector<16x64xf32>
    %341 = arith.mulf %340, %336 : vector<16x64xf32>
    %cst_223 = arith.constant 1.42141378 : f32
    %342 = vector.broadcast %cst_223 : f32 to vector<16x64xf32>
    %343 = arith.addf %341, %342 : vector<16x64xf32>
    %344 = arith.mulf %343, %336 : vector<16x64xf32>
    %cst_224 = arith.constant 0.284496725 : f32
    %345 = vector.broadcast %cst_224 : f32 to vector<16x64xf32>
    %346 = arith.subf %344, %345 : vector<16x64xf32>
    %347 = arith.mulf %346, %336 : vector<16x64xf32>
    %cst_225 = arith.constant 0.254829586 : f32
    %348 = vector.broadcast %cst_225 : f32 to vector<16x64xf32>
    %349 = arith.addf %347, %348 : vector<16x64xf32>
    %350 = arith.mulf %349, %336 : vector<16x64xf32>
    %cst_226 = arith.constant 0.000000e+00 : f32
    %351 = vector.broadcast %cst_226 : f32 to vector<16x64xf32>
    %352 = arith.subf %351, %329 : vector<16x64xf32>
    %353 = arith.mulf %352, %329 : vector<16x64xf32>
    %354 = math.exp %353 : vector<16x64xf32>
    %355 = arith.mulf %350, %354 : vector<16x64xf32>
    %cst_227 = arith.constant 1.000000e+00 : f32
    %356 = vector.broadcast %cst_227 : f32 to vector<16x64xf32>
    %357 = arith.subf %356, %355 : vector<16x64xf32>
    %cst_228 = arith.constant 0.000000e+00 : f32
    %358 = vector.broadcast %cst_228 : f32 to vector<16x64xf32>
    %359 = arith.cmpf oge, %329, %358 : vector<16x64xf32>
    %cst_229 = arith.constant 0.000000e+00 : f32
    %360 = vector.broadcast %cst_229 : f32 to vector<16x64xf32>
    %361 = arith.subf %360, %357 : vector<16x64xf32>
    %362 = arith.select %359, %357, %361 : vector<16x64xi1>, vector<16x64xf32>
    %cst_230 = arith.constant 1.000000e+00 : f32
    %363 = vector.broadcast %cst_230 : f32 to vector<16x64xf32>
    %364 = arith.addf %363, %362 : vector<16x64xf32>
    %365 = arith.mulf %327, %364 : vector<16x64xf32>
    %c1_231 = arith.constant 1 : index
    %c0_232 = arith.constant 0 : index
    %c0_233 = arith.constant 0 : index
    %366 = vector.load %arg15[%c1_231, %c0_232, %c0_233] : memref<2x64x32xf32, #tpu.memory_space<vmem>>, vector<1x64x32xf32>
    %367 = vector.shape_cast %366 : vector<1x64x32xf32> to vector<64x32xf32>
    %cst_234 = arith.constant dense<0.000000e+00> : vector<16x32xf32>
    %368 = tpu.matmul %365, %367, %cst_234 {dimension_numbers = #tpu.dot_dimension_numbers<[1], [0], [0], [1], [0, 0, 1, 1], [], []>} : vector<16x64xf32>, vector<64x32xf32>, vector<16x32xf32> -> vector<16x32xf32>
    %c1_235 = arith.constant 1 : index
    %c0_236 = arith.constant 0 : index
    %c0_237 = arith.constant 0 : index
    %369 = vector.load %arg16[%c1_235, %c0_236, %c0_237] : memref<2x1x32xf32, #tpu.memory_space<vmem>>, vector<1x1x32xf32>
    %370 = vector.shape_cast %369 : vector<1x1x32xf32> to vector<1x32xf32>
    %371 = vector.broadcast %370 : vector<1x32xf32> to vector<16x32xf32>
    %372 = arith.addf %368, %371 : vector<16x32xf32>
    %373 = arith.addf %318, %372 : vector<16x32xf32>
    %c1_238 = arith.constant 1 : index
    %c0_239 = arith.constant 0 : index
    %c0_240 = arith.constant 0 : index
    %374 = vector.load %arg17[%c1_238, %c0_239, %c0_240] : memref<2x2x32xf32, #tpu.memory_space<vmem>>, vector<1x2x32xf32>
    %375 = vector.shape_cast %374 : vector<1x2x32xf32> to vector<2x32xf32>
    %376 = vector.extract_strided_slice %375 {offsets = [0, 0], sizes = [1, 32], strides = [1, 1]} : vector<2x32xf32> to vector<1x32xf32>
    %377 = vector.extract_strided_slice %375 {offsets = [1, 0], sizes = [1, 32], strides = [1, 1]} : vector<2x32xf32> to vector<1x32xf32>
    %cst_241 = arith.constant dense<0.000000e+00> : vector<16xf32>
    %378 = vector.multi_reduction <add>, %373, %cst_241 [1] : vector<16x32xf32> to vector<16xf32>
    %379 = vector.shape_cast %378 : vector<16xf32> to vector<16x1xf32>
    %cst_242 = arith.constant 3.200000e+01 : f32
    %380 = vector.broadcast %cst_242 : f32 to vector<16x1xf32>
    %381 = arith.divf %379, %380 : vector<16x1xf32>
    %382 = vector.broadcast %381 : vector<16x1xf32> to vector<16x32xf32>
    %383 = arith.subf %373, %382 : vector<16x32xf32>
    %384 = arith.mulf %383, %383 : vector<16x32xf32>
    %cst_243 = arith.constant dense<0.000000e+00> : vector<16xf32>
    %385 = vector.multi_reduction <add>, %384, %cst_243 [1] : vector<16x32xf32> to vector<16xf32>
    %386 = vector.shape_cast %385 : vector<16xf32> to vector<16x1xf32>
    %cst_244 = arith.constant 3.200000e+01 : f32
    %387 = vector.broadcast %cst_244 : f32 to vector<16x1xf32>
    %388 = arith.divf %386, %387 : vector<16x1xf32>
    %389 = vector.broadcast %381 : vector<16x1xf32> to vector<16x32xf32>
    %390 = arith.subf %373, %389 : vector<16x32xf32>
    %cst_245 = arith.constant 9.99999974E-6 : f32
    %391 = vector.broadcast %cst_245 : f32 to vector<16x1xf32>
    %392 = arith.addf %388, %391 : vector<16x1xf32>
    %393 = math.rsqrt %392 : vector<16x1xf32>
    %394 = vector.broadcast %393 : vector<16x1xf32> to vector<16x32xf32>
    %395 = arith.mulf %390, %394 : vector<16x32xf32>
    %396 = vector.broadcast %376 : vector<1x32xf32> to vector<16x32xf32>
    %397 = arith.mulf %395, %396 : vector<16x32xf32>
    %398 = vector.broadcast %377 : vector<1x32xf32> to vector<16x32xf32>
    %399 = arith.addf %397, %398 : vector<16x32xf32>
    %c0_246 = arith.constant 0 : index
    %c0_247 = arith.constant 0 : index
    %400 = vector.load %arg24[%c0_246, %c0_247] : memref<16x32xf32, #tpu.memory_space<vmem>>, vector<16x32xf32>
    tpu.vector_store %arg24[%c0_246, %c0_247], %399 {strides = array<i32>} : memref<16x32xf32, #tpu.memory_space<vmem>>, vector<16x32xf32>,
    %c0_248 = arith.constant 0 : index
    %c0_249 = arith.constant 0 : index
    %401 = vector.load %arg18[%c0_248, %c0_249] : memref<1x32xf32, #tpu.memory_space<vmem>>, vector<1x32xf32>
    %c0_250 = arith.constant 0 : index
    %c0_251 = arith.constant 0 : index
    %402 = vector.load %arg19[%c0_250, %c0_251] : memref<1x1xf32, #tpu.memory_space<vmem>>, vector<1x1xf32>
    %c0_252 = arith.constant 0 : index
    %403 = memref.load %arg1[%c0_252] : memref<2xi32, #tpu.memory_space<smem>>
    %404 = arith.index_cast %403 : i32 to index
    %c0_253 = arith.constant 0 : index
    %405 = vector.load %arg24[%404, %c0_253] : memref<16x32xf32, #tpu.memory_space<vmem>>, vector<1x32xf32>
    %c0_254 = arith.constant 0 : index
    %c0_255 = arith.constant 0 : index
    %406 = vector.load %arg23[%c0_254, %c0_255] : memref<2x32xf32, #tpu.memory_space<vmem>>, vector<1x32xf32>
    tpu.vector_store %arg23[%c0_254, %c0_255], %405 {strides = array<i32>} : memref<2x32xf32, #tpu.memory_space<vmem>>, vector<1x32xf32>,
    %407 = arith.mulf %405, %401 : vector<1x32xf32>
    %cst_256 = arith.constant dense<0.000000e+00> : vector<1xf32>
    %408 = vector.multi_reduction <add>, %407, %cst_256 [1] : vector<1x32xf32> to vector<1xf32>
    %409 = vector.shape_cast %408 : vector<1xf32> to vector<1x1xf32>
    %410 = arith.addf %409, %402 : vector<1x1xf32>
    %c0_257 = arith.constant 0 : index
    %c0_258 = arith.constant 0 : index
    %411 = vector.load %arg22[%c0_257, %c0_258] : memref<2x1xf32, #tpu.memory_space<vmem>>, vector<1x1xf32>
    tpu.vector_store %arg22[%c0_257, %c0_258], %410 {strides = array<i32>} : memref<2x1xf32, #tpu.memory_space<vmem>>, vector<1x1xf32>,
    %c0_259 = arith.constant 0 : index
    %c0_260 = arith.constant 0 : index
    %412 = vector.load %arg20[%c0_259, %c0_260] : memref<2x1xf32, #tpu.memory_space<vmem>>, vector<1x1xf32>
    %cst_261 = arith.constant 0.000000e+00 : f32
    %413 = vector.broadcast %cst_261 : f32 to vector<1x1xf32>
    %414 = arith.maximumf %410, %413 : vector<1x1xf32>
    %415 = arith.mulf %410, %412 : vector<1x1xf32>
    %416 = arith.subf %414, %415 : vector<1x1xf32>
    %417 = math.absf %410 : vector<1x1xf32>
    %cst_262 = arith.constant 0.000000e+00 : f32
    %418 = vector.broadcast %cst_262 : f32 to vector<1x1xf32>
    %419 = arith.subf %418, %417 : vector<1x1xf32>
    %420 = math.exp %419 : vector<1x1xf32>
    %cst_263 = arith.constant 1.000000e+00 : f32
    %421 = vector.broadcast %cst_263 : f32 to vector<1x1xf32>
    %422 = arith.addf %421, %420 : vector<1x1xf32>
    %423 = math.log %422 : vector<1x1xf32>
    %424 = arith.addf %416, %423 : vector<1x1xf32>
    %c1_264 = arith.constant 1 : index
    %425 = memref.load %arg1[%c1_264] : memref<2xi32, #tpu.memory_space<smem>>
    %426 = arith.index_cast %425 : i32 to index
    %c0_265 = arith.constant 0 : index
    %427 = vector.load %arg24[%426, %c0_265] : memref<16x32xf32, #tpu.memory_space<vmem>>, vector<1x32xf32>
    %c1_266 = arith.constant 1 : index
    %c0_267 = arith.constant 0 : index
    %428 = vector.load %arg23[%c1_266, %c0_267] : memref<2x32xf32, #tpu.memory_space<vmem>>, vector<1x32xf32>
    tpu.vector_store %arg23[%c1_266, %c0_267], %427 {strides = array<i32>} : memref<2x32xf32, #tpu.memory_space<vmem>>, vector<1x32xf32>,
    %429 = arith.mulf %427, %401 : vector<1x32xf32>
    %cst_268 = arith.constant dense<0.000000e+00> : vector<1xf32>
    %430 = vector.multi_reduction <add>, %429, %cst_268 [1] : vector<1x32xf32> to vector<1xf32>
    %431 = vector.shape_cast %430 : vector<1xf32> to vector<1x1xf32>
    %432 = arith.addf %431, %402 : vector<1x1xf32>
    %c1_269 = arith.constant 1 : index
    %c0_270 = arith.constant 0 : index
    %433 = vector.load %arg22[%c1_269, %c0_270] : memref<2x1xf32, #tpu.memory_space<vmem>>, vector<1x1xf32>
    tpu.vector_store %arg22[%c1_269, %c0_270], %432 {strides = array<i32>} : memref<2x1xf32, #tpu.memory_space<vmem>>, vector<1x1xf32>,
    %c1_271 = arith.constant 1 : index
    %c0_272 = arith.constant 0 : index
    %434 = vector.load %arg20[%c1_271, %c0_272] : memref<2x1xf32, #tpu.memory_space<vmem>>, vector<1x1xf32>
    %cst_273 = arith.constant 0.000000e+00 : f32
    %435 = vector.broadcast %cst_273 : f32 to vector<1x1xf32>
    %436 = arith.maximumf %432, %435 : vector<1x1xf32>
    %437 = arith.mulf %432, %434 : vector<1x1xf32>
    %438 = arith.subf %436, %437 : vector<1x1xf32>
    %439 = math.absf %432 : vector<1x1xf32>
    %cst_274 = arith.constant 0.000000e+00 : f32
    %440 = vector.broadcast %cst_274 : f32 to vector<1x1xf32>
    %441 = arith.subf %440, %439 : vector<1x1xf32>
    %442 = math.exp %441 : vector<1x1xf32>
    %cst_275 = arith.constant 1.000000e+00 : f32
    %443 = vector.broadcast %cst_275 : f32 to vector<1x1xf32>
    %444 = arith.addf %443, %442 : vector<1x1xf32>
    %445 = math.log %444 : vector<1x1xf32>
    %446 = arith.addf %438, %445 : vector<1x1xf32>
    %447 = arith.addf %424, %446 : vector<1x1xf32>
    %cst_276 = arith.constant 5.000000e-01 : f32
    %448 = vector.broadcast %cst_276 : f32 to vector<1x1xf32>
    %449 = arith.mulf %447, %448 : vector<1x1xf32>
    %c0_277 = arith.constant 0 : index
    %c0_278 = arith.constant 0 : index
    %450 = vector.load %arg21[%c0_277, %c0_278] : memref<1x1xf32, #tpu.memory_space<vmem>>, vector<1x1xf32>
    tpu.vector_store %arg21[%c0_277, %c0_278], %449 {strides = array<i32>} : memref<1x1xf32, #tpu.memory_space<vmem>>, vector<1x1xf32>,
    return
  }
  func.func @transform_0(%arg0: i32, %arg1: memref<2xi32, #tpu.memory_space<smem>>) -> (i32, i32) {
    %c0_i32 = arith.constant 0 : i32
    %c0_i32_0 = arith.constant 0 : i32
    %c0_i32_1 = arith.constant 0 : i32
    return %c0_i32, %c0_i32_0 : i32, i32
  }
  func.func @transform_1(%arg0: i32, %arg1: memref<2xi32, #tpu.memory_space<smem>>) -> (i32, i32, i32) {
    %c0_i32 = arith.constant 0 : i32
    %c0_i32_0 = arith.constant 0 : i32
    %c0_i32_1 = arith.constant 0 : i32
    %c0_i32_2 = arith.constant 0 : i32
    return %c0_i32, %c0_i32_0, %c0_i32_1 : i32, i32, i32
  }
  func.func @transform_2(%arg0: i32, %arg1: memref<2xi32, #tpu.memory_space<smem>>) -> (i32, i32, i32, i32) {
    %c0_i32 = arith.constant 0 : i32
    %c0_i32_0 = arith.constant 0 : i32
    %c0_i32_1 = arith.constant 0 : i32
    %c0_i32_2 = arith.constant 0 : i32
    %c0_i32_3 = arith.constant 0 : i32
    return %c0_i32, %c0_i32_0, %c0_i32_1, %c0_i32_2 : i32, i32, i32, i32
  }
  func.func @transform_3(%arg0: i32, %arg1: memref<2xi32, #tpu.memory_space<smem>>) -> (i32, i32, i32, i32) {
    %c0_i32 = arith.constant 0 : i32
    %c0_i32_0 = arith.constant 0 : i32
    %c0_i32_1 = arith.constant 0 : i32
    %c0_i32_2 = arith.constant 0 : i32
    %c0_i32_3 = arith.constant 0 : i32
    return %c0_i32, %c0_i32_0, %c0_i32_1, %c0_i32_2 : i32, i32, i32, i32
  }
  func.func @transform_4(%arg0: i32, %arg1: memref<2xi32, #tpu.memory_space<smem>>) -> (i32, i32, i32, i32) {
    %c0_i32 = arith.constant 0 : i32
    %c0_i32_0 = arith.constant 0 : i32
    %c0_i32_1 = arith.constant 0 : i32
    %c0_i32_2 = arith.constant 0 : i32
    %c0_i32_3 = arith.constant 0 : i32
    return %c0_i32, %c0_i32_0, %c0_i32_1, %c0_i32_2 : i32, i32, i32, i32
  }
  func.func @transform_5(%arg0: i32, %arg1: memref<2xi32, #tpu.memory_space<smem>>) -> (i32, i32, i32, i32) {
    %c0_i32 = arith.constant 0 : i32
    %c0_i32_0 = arith.constant 0 : i32
    %c0_i32_1 = arith.constant 0 : i32
    %c0_i32_2 = arith.constant 0 : i32
    %c0_i32_3 = arith.constant 0 : i32
    return %c0_i32, %c0_i32_0, %c0_i32_1, %c0_i32_2 : i32, i32, i32, i32
  }
  func.func @transform_6(%arg0: i32, %arg1: memref<2xi32, #tpu.memory_space<smem>>) -> (i32, i32, i32, i32) {
    %c0_i32 = arith.constant 0 : i32
    %c0_i32_0 = arith.constant 0 : i32
    %c0_i32_1 = arith.constant 0 : i32
    %c0_i32_2 = arith.constant 0 : i32
    %c0_i32_3 = arith.constant 0 : i32
    return %c0_i32, %c0_i32_0, %c0_i32_1, %c0_i32_2 : i32, i32, i32, i32
  }
  func.func @transform_7(%arg0: i32, %arg1: memref<2xi32, #tpu.memory_space<smem>>) -> (i32, i32, i32, i32) {
    %c0_i32 = arith.constant 0 : i32
    %c0_i32_0 = arith.constant 0 : i32
    %c0_i32_1 = arith.constant 0 : i32
    %c0_i32_2 = arith.constant 0 : i32
    %c0_i32_3 = arith.constant 0 : i32
    return %c0_i32, %c0_i32_0, %c0_i32_1, %c0_i32_2 : i32, i32, i32, i32
  }
  func.func @transform_8(%arg0: i32, %arg1: memref<2xi32, #tpu.memory_space<smem>>) -> (i32, i32, i32, i32) {
    %c0_i32 = arith.constant 0 : i32
    %c0_i32_0 = arith.constant 0 : i32
    %c0_i32_1 = arith.constant 0 : i32
    %c0_i32_2 = arith.constant 0 : i32
    %c0_i32_3 = arith.constant 0 : i32
    return %c0_i32, %c0_i32_0, %c0_i32_1, %c0_i32_2 : i32, i32, i32, i32
  }
  func.func @transform_9(%arg0: i32, %arg1: memref<2xi32, #tpu.memory_space<smem>>) -> (i32, i32, i32) {
    %c0_i32 = arith.constant 0 : i32
    %c0_i32_0 = arith.constant 0 : i32
    %c0_i32_1 = arith.constant 0 : i32
    %c0_i32_2 = arith.constant 0 : i32
    return %c0_i32, %c0_i32_0, %c0_i32_1 : i32, i32, i32
  }
  func.func @transform_10(%arg0: i32, %arg1: memref<2xi32, #tpu.memory_space<smem>>) -> (i32, i32, i32) {
    %c0_i32 = arith.constant 0 : i32
    %c0_i32_0 = arith.constant 0 : i32
    %c0_i32_1 = arith.constant 0 : i32
    %c0_i32_2 = arith.constant 0 : i32
    return %c0_i32, %c0_i32_0, %c0_i32_1 : i32, i32, i32
  }
  func.func @transform_11(%arg0: i32, %arg1: memref<2xi32, #tpu.memory_space<smem>>) -> (i32, i32, i32) {
    %c0_i32 = arith.constant 0 : i32
    %c0_i32_0 = arith.constant 0 : i32
    %c0_i32_1 = arith.constant 0 : i32
    %c0_i32_2 = arith.constant 0 : i32
    return %c0_i32, %c0_i32_0, %c0_i32_1 : i32, i32, i32
  }
  func.func @transform_12(%arg0: i32, %arg1: memref<2xi32, #tpu.memory_space<smem>>) -> (i32, i32, i32) {
    %c0_i32 = arith.constant 0 : i32
    %c0_i32_0 = arith.constant 0 : i32
    %c0_i32_1 = arith.constant 0 : i32
    %c0_i32_2 = arith.constant 0 : i32
    return %c0_i32, %c0_i32_0, %c0_i32_1 : i32, i32, i32
  }
  func.func @transform_13(%arg0: i32, %arg1: memref<2xi32, #tpu.memory_space<smem>>) -> (i32, i32, i32) {
    %c0_i32 = arith.constant 0 : i32
    %c0_i32_0 = arith.constant 0 : i32
    %c0_i32_1 = arith.constant 0 : i32
    %c0_i32_2 = arith.constant 0 : i32
    return %c0_i32, %c0_i32_0, %c0_i32_1 : i32, i32, i32
  }
  func.func @transform_14(%arg0: i32, %arg1: memref<2xi32, #tpu.memory_space<smem>>) -> (i32, i32, i32) {
    %c0_i32 = arith.constant 0 : i32
    %c0_i32_0 = arith.constant 0 : i32
    %c0_i32_1 = arith.constant 0 : i32
    %c0_i32_2 = arith.constant 0 : i32
    return %c0_i32, %c0_i32_0, %c0_i32_1 : i32, i32, i32
  }
  func.func @transform_15(%arg0: i32, %arg1: memref<2xi32, #tpu.memory_space<smem>>) -> (i32, i32, i32) {
    %c0_i32 = arith.constant 0 : i32
    %c0_i32_0 = arith.constant 0 : i32
    %c0_i32_1 = arith.constant 0 : i32
    %c0_i32_2 = arith.constant 0 : i32
    return %c0_i32, %c0_i32_0, %c0_i32_1 : i32, i32, i32
  }
  func.func @transform_16(%arg0: i32, %arg1: memref<2xi32, #tpu.memory_space<smem>>) -> (i32, i32) {
    %c0_i32 = arith.constant 0 : i32
    %c0_i32_0 = arith.constant 0 : i32
    %c0_i32_1 = arith.constant 0 : i32
    return %c0_i32, %c0_i32_0 : i32, i32
  }
  func.func @transform_17(%arg0: i32, %arg1: memref<2xi32, #tpu.memory_space<smem>>) -> (i32, i32) {
    %c0_i32 = arith.constant 0 : i32
    %c0_i32_0 = arith.constant 0 : i32
    %c0_i32_1 = arith.constant 0 : i32
    return %c0_i32, %c0_i32_0 : i32, i32
  }
  func.func @transform_18(%arg0: i32, %arg1: memref<2xi32, #tpu.memory_space<smem>>) -> (i32, i32) {
    %c0_i32 = arith.constant 0 : i32
    %c0_i32_0 = arith.constant 0 : i32
    %c0_i32_1 = arith.constant 0 : i32
    return %c0_i32, %c0_i32_0 : i32, i32
  }
  func.func @transform_19(%arg0: i32, %arg1: memref<2xi32, #tpu.memory_space<smem>>) -> (i32, i32) {
    %c0_i32 = arith.constant 0 : i32
    %c0_i32_0 = arith.constant 0 : i32
    %c0_i32_1 = arith.constant 0 : i32
    return %c0_i32, %c0_i32_0 : i32, i32
  }
  func.func @transform_20(%arg0: i32, %arg1: memref<2xi32, #tpu.memory_space<smem>>) -> (i32, i32) {
    %c0_i32 = arith.constant 0 : i32
    %c0_i32_0 = arith.constant 0 : i32
    %c0_i32_1 = arith.constant 0 : i32
    return %c0_i32, %c0_i32_0 : i32, i32
  }
  func.func @transform_21(%arg0: i32, %arg1: memref<2xi32, #tpu.memory_space<smem>>) -> (i32, i32) {
    %c0_i32 = arith.constant 0 : i32
    %c0_i32_0 = arith.constant 0 : i32
    %c0_i32_1 = arith.constant 0 : i32
    return %c0_i32, %c0_i32_0 : i32, i32
  }
}

</mosaic_0001>

<llo_original>
// kernel: forward.1
$region0: #{forward.1}
  #allocation0 [shape = 'u32[]', space=smem, size = 0x4, offset = 0x4, fixed_abs, tag = 'smem constant byte address 0x4 - core index']
  #allocation1 [shape = 'u32[144,128]{1,0:T(1,128)}', space=vmem, size = 0x12000, scoped, tag = 'internal scratch']
  #allocation2 [shape = 'f32[16,32]{1,0:T(8,128)}', space=vmem, size = 0x2000, scoped, tag = 'scratch operand']
  #allocation3 [shape = 's32[1]{0}', space=sflag, size = 0x4, scoped, tag = 'scoped memory for forward.1']
  #allocation4 [shape = 'u8[512]{0}', space=smem, size = 0x200, scoped, tag = 'prefetched SMEM operand 0']
  #allocation5 [shape = 'f32[1,1]{1,0:T(1,128)S(1)}', space=vmem, size = 0x200, scoped, tag = 'scoped memory for forward.1']
  %s0 = inlined_call_operand.vmem [shape: s32[2], index: 0, kind: input, shape index: {}]
  %s1 = inlined_call_operand.vmem [shape: f32[16,32], index: 1, kind: input, shape index: {}]
  %s2 = inlined_call_operand.vmem [shape: f32[2,1,8], index: 2, kind: input, shape index: {}]
  %s3 = inlined_call_operand.vmem [shape: f32[2,2,32,16], index: 3, kind: input, shape index: {}]
  %s4 = inlined_call_operand.vmem [shape: f32[2,2,32,16], index: 4, kind: input, shape index: {}]
  %s5 = inlined_call_operand.vmem [shape: f32[2,2,32,16], index: 5, kind: input, shape index: {}]
  %s6 = inlined_call_operand.vmem [shape: f32[2,2,1,16], index: 6, kind: input, shape index: {}]
  %s7 = inlined_call_operand.vmem [shape: f32[2,2,1,16], index: 7, kind: input, shape index: {}]
  %s8 = inlined_call_operand.vmem [shape: f32[2,2,1,16], index: 8, kind: input, shape index: {}]
  %s9 = inlined_call_operand.vmem [shape: f32[2,2,16,32], index: 9, kind: input, shape index: {}]
  %s10 = inlined_call_operand.vmem [shape: f32[2,1,32], index: 10, kind: input, shape index: {}]
  %s11 = inlined_call_operand.vmem [shape: f32[2,2,32], index: 11, kind: input, shape index: {}]
  %s12 = inlined_call_operand.vmem [shape: f32[2,32,64], index: 12, kind: input, shape index: {}]
  %s13 = inlined_call_operand.vmem [shape: f32[2,1,64], index: 13, kind: input, shape index: {}]
  %s14 = inlined_call_operand.vmem [shape: f32[2,64,32], index: 14, kind: input, shape index: {}]
  %s15 = inlined_call_operand.vmem [shape: f32[2,1,32], index: 15, kind: input, shape index: {}]
  %s16 = inlined_call_operand.vmem [shape: f32[2,2,32], index: 16, kind: input, shape index: {}]
  %s17 = inlined_call_operand.vmem [shape: f32[1,32], index: 17, kind: input, shape index: {}]
  %s18 = inlined_call_operand.<no memory space> [shape: f32[1,1], index: 18, kind: input, shape index: {}]
  %s19 = inlined_call_operand.vmem [shape: f32[2,1], index: 19, kind: input, shape index: {}]
  %s20 = inlined_call_operand.hbm [shape: f32[1,1], index: 20, kind: output, shape index: {0}]
  %s21 = inlined_call_operand.vmem [shape: f32[2,1], index: 21, kind: output, shape index: {1}]
  %s22 = inlined_call_operand.hbm [shape: f32[2,32], index: 22, kind: output, shape index: {2}]
  %23 = xla_tuple %s20, %s21, %s22
  %s24 = sld [smem:[#allocation0]]
  $region102: #{forward.1} parent=0
    _
  %s26 = ssub.s32 1, %s24
  %s27 = scalar_select 0, %s26, %s24
  %s28 = sshll.u32 %s0, 4
  %s29 = int_to_ptr.vmem [resolvable:$true] %s28
  %31 = dma.vmem_to_smem %s29, 16, [#allocation4], [#allocation3]
  %v32 = vstv %s18
  %33 = vst [vmem:[#allocation5] sm:$0x1] %v32
  %34 = dma.done [#allocation3], 16
  %35 = sfence
  $region1: #{forward.1} parent=0
    #allocation6 [shape = 'u8[512]{0}', space=vmem, size = 0x400, scoped, tag = 'output window, operand 0, single buffered']
    #allocation7 [shape = 's32[1]{0}', space=sflag, size = 0x4, scoped, tag = 'scoped memory for forward.1']
    #allocation8 [shape = 'u8[1024]{0}', space=vmem, size = 0x400, scoped, tag = 'output window, operand 2, single buffered']
    #allocation9 [shape = 's32[1]{0}', space=sflag, size = 0x4, scoped, tag = 'scoped memory for forward.1']
    %36 = vsyncpa [#allocation7], 0
    %37 = vsyncpa [#allocation9], 0
    // Predicated region
    $region2: #{forward.1} parent=1 // pred_check
      _
    $region3: #{forward.1} parent=1 // pred_check_branch
      %39 = sbr.rel (0) target = $region5
    $region4: #{forward.1} parent=1 // pred_region
      _
    $region5: #{forward.1} parent=1 // pred_fallthru
      _
    // Predicated region
    $region6: #{forward.1} parent=1 // pred_check
      _
    $region7: #{forward.1} parent=1 // pred_check_branch
      %41 = sbr.rel (0) target = $region9
    $region8: #{forward.1} parent=1 // pred_region
      _
    $region9: #{forward.1} parent=1 // pred_fallthru
      _
    // Predicated region
    $region10: #{forward.1} parent=1 // pred_check
      _
    $region11: #{forward.1} parent=1 // pred_check_branch
      %43 = sbr.rel (0) target = $region13
    $region12: #{forward.1} parent=1 // pred_region
      _
    $region13: #{forward.1} parent=1 // pred_fallthru
      _
    // Predicated region
    $region14: #{forward.1} parent=1 // pred_check
      _
    $region15: #{forward.1} parent=1 // pred_check_branch
      %45 = sbr.rel (0) target = $region17
    $region16: #{forward.1} parent=1 // pred_region
      _
    $region17: #{forward.1} parent=1 // pred_fallthru
      _
    // Predicated region
    $region18: #{forward.1} parent=1 // pred_check
      _
    $region19: #{forward.1} parent=1 // pred_check_branch
      %47 = sbr.rel (0) target = $region21
    $region20: #{forward.1} parent=1 // pred_region
      _
    $region21: #{forward.1} parent=1 // pred_fallthru
      _
    // Predicated region
    $region22: #{forward.1} parent=1 // pred_check
      _
    $region23: #{forward.1} parent=1 // pred_check_branch
      %49 = sbr.rel (0) target = $region25
    $region24: #{forward.1} parent=1 // pred_region
      _
    $region25: #{forward.1} parent=1 // pred_fallthru
      _
    // Predicated region
    $region26: #{forward.1} parent=1 // pred_check
      _
    $region27: #{forward.1} parent=1 // pred_check_branch
      %51 = sbr.rel (0) target = $region29
    $region28: #{forward.1} parent=1 // pred_region
      _
    $region29: #{forward.1} parent=1 // pred_fallthru
      _
    // Predicated region
    $region30: #{forward.1} parent=1 // pred_check
      _
    $region31: #{forward.1} parent=1 // pred_check_branch
      %53 = sbr.rel (0) target = $region33
    $region32: #{forward.1} parent=1 // pred_region
      _
    $region33: #{forward.1} parent=1 // pred_fallthru
      _
    // Predicated region
    $region34: #{forward.1} parent=1 // pred_check
      _
    $region35: #{forward.1} parent=1 // pred_check_branch
      %55 = sbr.rel (0) target = $region37
    $region36: #{forward.1} parent=1 // pred_region
      _
    $region37: #{forward.1} parent=1 // pred_fallthru
      _
    // Predicated region
    $region38: #{forward.1} parent=1 // pred_check
      _
    $region39: #{forward.1} parent=1 // pred_check_branch
      %57 = sbr.rel (0) target = $region41
    $region40: #{forward.1} parent=1 // pred_region
      _
    $region41: #{forward.1} parent=1 // pred_fallthru
      _
    // Predicated region
    $region42: #{forward.1} parent=1 // pred_check
      _
    $region43: #{forward.1} parent=1 // pred_check_branch
      %59 = sbr.rel (0) target = $region45
    $region44: #{forward.1} parent=1 // pred_region
      _
    $region45: #{forward.1} parent=1 // pred_fallthru
      _
    // Predicated region
    $region46: #{forward.1} parent=1 // pred_check
      _
    $region47: #{forward.1} parent=1 // pred_check_branch
      %61 = sbr.rel (0) target = $region49
    $region48: #{forward.1} parent=1 // pred_region
      _
    $region49: #{forward.1} parent=1 // pred_fallthru
      _
    // Predicated region
    $region50: #{forward.1} parent=1 // pred_check
      _
    $region51: #{forward.1} parent=1 // pred_check_branch
      %63 = sbr.rel (0) target = $region53
    $region52: #{forward.1} parent=1 // pred_region
      _
    $region53: #{forward.1} parent=1 // pred_fallthru
      _
    // Predicated region
    $region54: #{forward.1} parent=1 // pred_check
      _
    $region55: #{forward.1} parent=1 // pred_check_branch
      %65 = sbr.rel (0) target = $region57
    $region56: #{forward.1} parent=1 // pred_region
      _
    $region57: #{forward.1} parent=1 // pred_fallthru
      _
    // Predicated region
    $region58: #{forward.1} parent=1 // pred_check
      _
    $region59: #{forward.1} parent=1 // pred_check_branch
      %67 = sbr.rel (0) target = $region61
    $region60: #{forward.1} parent=1 // pred_region
      _
    $region61: #{forward.1} parent=1 // pred_fallthru
      _
    // Predicated region
    $region62: #{forward.1} parent=1 // pred_check
      _
    $region63: #{forward.1} parent=1 // pred_check_branch
      %69 = sbr.rel (0) target = $region65
    $region64: #{forward.1} parent=1 // pred_region
      _
    $region65: #{forward.1} parent=1 // pred_fallthru
      _
    // Predicated region
    $region66: #{forward.1} parent=1 // pred_check
      _
    $region67: #{forward.1} parent=1 // pred_check_branch
      %71 = sbr.rel (0) target = $region69
    $region68: #{forward.1} parent=1 // pred_region
      _
    $region69: #{forward.1} parent=1 // pred_fallthru
      _
    // Predicated region
    $region70: #{forward.1} parent=1 // pred_check
      _
    $region71: #{forward.1} parent=1 // pred_check_branch
      %73 = sbr.rel (0) target = $region73
    $region72: #{forward.1} parent=1 // pred_region
      _
    $region73: #{forward.1} parent=1 // pred_fallthru
      _
    // Predicated region
    $region74: #{forward.1} parent=1 // pred_check
      _
    $region75: #{forward.1} parent=1 // pred_check_branch
      %75 = sbr.rel (0) target = $region77
    $region76: #{forward.1} parent=1 // pred_region
      _
    $region77: #{forward.1} parent=1 // pred_fallthru
      _
    %v76 = vld [vmem:[%s1] sm:$0xff]
    %v77 = vld [vmem:[%s1 + $0x8] sm:$0xff]
    %v78 = vld [vmem:[%s2] sm:$0x1]
    %v79 = vld [vmem:[%s2 + $0x1] sm:$0x1]
    %v80 = vld [vmem:[%s3] sm:$0xff]
    %v81 = vld [vmem:[%s3 + $0x8] sm:$0xff]
    %v82 = vld [vmem:[%s3 + $0x10] sm:$0xff]
    %v83 = vld [vmem:[%s3 + $0x18] sm:$0xff]
    %v84 = vld [vmem:[%s6] sm:$0x1]
    %v86 = vlaneseq
    %v87 = vshrl.u32 %v86, 7
    %v88 = vsub.s32 0, %v87
    %v89 = vrot.slane %v84, %v88
    %vm91 = vcmask 261120
    %v93 = vsel %vm91, %v76, 0
    %v96 = vsel %vm91, %v77, 0
    %98 = vmatprep.subr.mxu0 0.0
    %99 = vmatpush1.msra.mxu0 %v80
    %100 = vmatprep.subr.mxu0 0.0
    %101 = vmatpush1.msra.mxu0 %v81
    %102 = vmatprep.subr.mxu0 0.0
    %103 = vmatpush1.msra.mxu0 %v82
    %104 = vmatprep.subr.mxu0 0.0
    %105 = vmatpush1.msra.mxu0 %v83
    %106 = vmatprep.subr.mxu0 0.0
    %107 = vmatpush1.msra.mxu0 0.0
    %108 = vmatprep.subr.mxu0 0.0
    %109 = vmatpush1.msra.mxu0 0.0
    %110 = vmatprep.subr.mxu0 0.0
    %111 = vmatpush1.msra.mxu0 0.0
    %112 = vmatprep.subr.mxu0 0.0
    %113 = vmatpush1.msra.mxu0 0.0
    %114 = vmatprep.subr.mxu0 0.0
    %115 = vmatpush1.msra.mxu0 0.0
    %116 = vmatprep.subr.mxu0 0.0
    %117 = vmatpush1.msra.mxu0 0.0
    %118 = vmatprep.subr.mxu0 0.0
    %119 = vmatpush1.msra.mxu0 0.0
    %120 = vmatprep.subr.mxu0 0.0
    %121 = vmatpush1.msra.mxu0 0.0
    %122 = vmatprep.subr.mxu0 0.0
    %123 = vmatpush1.msra.mxu0 0.0
    %124 = vmatprep.subr.mxu0 0.0
    %125 = vmatpush1.msra.mxu0 0.0
    %126 = vmatprep.subr.mxu0 0.0
    %127 = vmatpush1.msra.mxu0 0.0
    %128 = vmatprep.subr.mxu0 0.0
    %129 = vmatpush1.msra.mxu0 0.0
    %130 = vmatprep.subr.mxu0 0.0
    %131 = vmatpush1.msra.mxu0 0.0
    %132 = vmatprep.subr.mxu0 0.0
    %133 = vmatpush1.msra.mxu0 0.0
    %134 = vmatprep.subr.mxu0 0.0
    %135 = vmatpush1.msra.mxu0 0.0
    %136 = vmatprep.subr.mxu0 0.0
    %137 = vmatpush1.msra.mxu0 0.0
    %138 = vmatprep.subr.mxu0 0.0
    %139 = vmatpush1.msra.mxu0 0.0
    %140 = vmatprep.subr.mxu0 0.0
    %141 = vmatpush1.msra.mxu0 0.0
    %142 = vmatprep.subr.mxu0 0.0
    %143 = vmatpush1.msra.mxu0 0.0
    %144 = vmatprep.subr.mxu0 0.0
    %145 = vmatpush1.msra.mxu0 0.0
    %146 = vmatprep.subr.mxu0 0.0
    %147 = vmatpush1.msra.mxu0 0.0
    %148 = vmatprep.subr.mxu0 0.0
    %149 = vmatpush1.msra.mxu0 0.0
    %150 = vmatprep.subr.mxu0 0.0
    %151 = vmatpush1.msra.mxu0 0.0
    %152 = vmatprep.subr.mxu0 0.0
    %153 = vmatpush1.msra.mxu0 0.0
    %154 = vmatprep.subr.mxu0 0.0
    %155 = vmatpush1.msra.mxu0 0.0
    %156 = vmatprep.subr.mxu0 0.0
    %157 = vmatpush1.msra.mxu0 0.0
    %158 = vmatprep.subr.mxu0 0.0
    %159 = vmatpush1.msra.mxu0 0.0
    %160 = vmatprep.subr.mxu0 0.0
    %161 = vmatpush1.msra.mxu0 0.0
    %162 = vmatprep.mubr.f32.mxu0 0.0
    %163 = vmatmul.mubr.f32.gmra.mrb[0].mxu0 %v93
    %v164 = vpop.f32.mrb[0].mxu0
    %v165 = vadd.f32 %v89, %v164
    %v166 = vpop.f32.mrb[0].mxu0
    %167 = vmatprep.mubr.f32.mxu0 0.0
    %168 = vmatmul.mubr.f32.gmra.mrb[0].mxu0 %v96
    %v169 = vpop.f32.mrb[0].mxu0
    %v170 = vadd.f32 %v89, %v169
    %v171 = vpop.f32.mrb[0].mxu0
    %172 = vdwg.mxu0
    %v173 = vld [vmem:[%s4] sm:$0xff]
    %v174 = vld [vmem:[%s4 + $0x8] sm:$0xff]
    %v175 = vld [vmem:[%s4 + $0x10] sm:$0xff]
    %v176 = vld [vmem:[%s4 + $0x18] sm:$0xff]
    %v177 = vld [vmem:[%s7] sm:$0x1]
    %v179 = vlaneseq
    %v180 = vshrl.u32 %v179, 7
    %v181 = vsub.s32 0, %v180
    %v182 = vrot.slane %v177, %v181
    %184 = vmatprep.subr.mxu0 0.0
    %185 = vmatpush1.msra.mxu0 %v173
    %186 = vmatprep.subr.mxu0 0.0
    %187 = vmatpush1.msra.mxu0 %v174
    %188 = vmatprep.subr.mxu0 0.0
    %189 = vmatpush1.msra.mxu0 %v175
    %190 = vmatprep.subr.mxu0 0.0
    %191 = vmatpush1.msra.mxu0 %v176
    %192 = vmatprep.subr.mxu0 0.0
    %193 = vmatpush1.msra.mxu0 0.0
    %194 = vmatprep.subr.mxu0 0.0
    %195 = vmatpush1.msra.mxu0 0.0
    %196 = vmatprep.subr.mxu0 0.0
    %197 = vmatpush1.msra.mxu0 0.0
    %198 = vmatprep.subr.mxu0 0.0
    %199 = vmatpush1.msra.mxu0 0.0
    %200 = vmatprep.subr.mxu0 0.0
    %201 = vmatpush1.msra.mxu0 0.0
    %202 = vmatprep.subr.mxu0 0.0
    %203 = vmatpush1.msra.mxu0 0.0
    %204 = vmatprep.subr.mxu0 0.0
    %205 = vmatpush1.msra.mxu0 0.0
    %206 = vmatprep.subr.mxu0 0.0
    %207 = vmatpush1.msra.mxu0 0.0
    %208 = vmatprep.subr.mxu0 0.0
    %209 = vmatpush1.msra.mxu0 0.0
    %210 = vmatprep.subr.mxu0 0.0
    %211 = vmatpush1.msra.mxu0 0.0
    %212 = vmatprep.subr.mxu0 0.0
    %213 = vmatpush1.msra.mxu0 0.0
    %214 = vmatprep.subr.mxu0 0.0
    %215 = vmatpush1.msra.mxu0 0.0
    %216 = vmatprep.subr.mxu0 0.0
    %217 = vmatpush1.msra.mxu0 0.0
    %218 = vmatprep.subr.mxu0 0.0
    %219 = vmatpush1.msra.mxu0 0.0
    %220 = vmatprep.subr.mxu0 0.0
    %221 = vmatpush1.msra.mxu0 0.0
    %222 = vmatprep.subr.mxu0 0.0
    %223 = vmatpush1.msra.mxu0 0.0
    %224 = vmatprep.subr.mxu0 0.0
    %225 = vmatpush1.msra.mxu0 0.0
    %226 = vmatprep.subr.mxu0 0.0
    %227 = vmatpush1.msra.mxu0 0.0
    %228 = vmatprep.subr.mxu0 0.0
    %229 = vmatpush1.msra.mxu0 0.0
    %230 = vmatprep.subr.mxu0 0.0
    %231 = vmatpush1.msra.mxu0 0.0
    %232 = vmatprep.subr.mxu0 0.0
    %233 = vmatpush1.msra.mxu0 0.0
    %234 = vmatprep.subr.mxu0 0.0
    %235 = vmatpush1.msra.mxu0 0.0
    %236 = vmatprep.subr.mxu0 0.0
    %237 = vmatpush1.msra.mxu0 0.0
    %238 = vmatprep.subr.mxu0 0.0
    %239 = vmatpush1.msra.mxu0 0.0
    %240 = vmatprep.subr.mxu0 0.0
    %241 = vmatpush1.msra.mxu0 0.0
    %242 = vmatprep.subr.mxu0 0.0
    %243 = vmatpush1.msra.mxu0 0.0
    %244 = vmatprep.subr.mxu0 0.0
    %245 = vmatpush1.msra.mxu0 0.0
    %246 = vmatprep.subr.mxu0 0.0
    %247 = vmatpush1.msra.mxu0 0.0
    %248 = vmatprep.mubr.f32.mxu0 0.0
    %249 = vmatmul.mubr.f32.gmra.mrb[0].mxu0 %v93
    %v250 = vpop.f32.mrb[0].mxu0
    %v251 = vadd.f32 %v182, %v250
    %v252 = vpop.f32.mrb[0].mxu0
    %253 = vmatprep.mubr.f32.mxu0 0.0
    %254 = vmatmul.mubr.f32.gmra.mrb[0].mxu0 %v96
    %v255 = vpop.f32.mrb[0].mxu0
    %v256 = vadd.f32 %v182, %v255
    %v257 = vpop.f32.mrb[0].mxu0
    %258 = vdwg.mxu0
    %v259 = vld [vmem:[%s5] sm:$0xff]
    %v260 = vld [vmem:[%s5 + $0x8] sm:$0xff]
    %v261 = vld [vmem:[%s5 + $0x10] sm:$0xff]
    %v262 = vld [vmem:[%s5 + $0x18] sm:$0xff]
    %v263 = vld [vmem:[%s8] sm:$0x1]
    %v265 = vlaneseq
    %v266 = vshrl.u32 %v265, 7
    %v267 = vsub.s32 0, %v266
    %v268 = vrot.slane %v263, %v267
    %270 = vmatprep.subr.mxu0 0.0
    %271 = vmatpush1.msra.mxu0 %v259
    %272 = vmatprep.subr.mxu0 0.0
    %273 = vmatpush1.msra.mxu0 %v260
    %274 = vmatprep.subr.mxu0 0.0
    %275 = vmatpush1.msra.mxu0 %v261
    %276 = vmatprep.subr.mxu0 0.0
    %277 = vmatpush1.msra.mxu0 %v262
    %278 = vmatprep.subr.mxu0 0.0
    %279 = vmatpush1.msra.mxu0 0.0
    %280 = vmatprep.subr.mxu0 0.0
    %281 = vmatpush1.msra.mxu0 0.0
    %282 = vmatprep.subr.mxu0 0.0
    %283 = vmatpush1.msra.mxu0 0.0
    %284 = vmatprep.subr.mxu0 0.0
    %285 = vmatpush1.msra.mxu0 0.0
    %286 = vmatprep.subr.mxu0 0.0
    %287 = vmatpush1.msra.mxu0 0.0
    %288 = vmatprep.subr.mxu0 0.0
    %289 = vmatpush1.msra.mxu0 0.0
    %290 = vmatprep.subr.mxu0 0.0
    %291 = vmatpush1.msra.mxu0 0.0
    %292 = vmatprep.subr.mxu0 0.0
    %293 = vmatpush1.msra.mxu0 0.0
    %294 = vmatprep.subr.mxu0 0.0
    %295 = vmatpush1.msra.mxu0 0.0
    %296 = vmatprep.subr.mxu0 0.0
    %297 = vmatpush1.msra.mxu0 0.0
    %298 = vmatprep.subr.mxu0 0.0
    %299 = vmatpush1.msra.mxu0 0.0
    %300 = vmatprep.subr.mxu0 0.0
    %301 = vmatpush1.msra.mxu0 0.0
    %302 = vmatprep.subr.mxu0 0.0
    %303 = vmatpush1.msra.mxu0 0.0
    %304 = vmatprep.subr.mxu0 0.0
    %305 = vmatpush1.msra.mxu0 0.0
    %306 = vmatprep.subr.mxu0 0.0
    %307 = vmatpush1.msra.mxu0 0.0
    %308 = vmatprep.subr.mxu0 0.0
    %309 = vmatpush1.msra.mxu0 0.0
    %310 = vmatprep.subr.mxu0 0.0
    %311 = vmatpush1.msra.mxu0 0.0
    %312 = vmatprep.subr.mxu0 0.0
    %313 = vmatpush1.msra.mxu0 0.0
    %314 = vmatprep.subr.mxu0 0.0
    %315 = vmatpush1.msra.mxu0 0.0
    %316 = vmatprep.subr.mxu0 0.0
    %317 = vmatpush1.msra.mxu0 0.0
    %318 = vmatprep.subr.mxu0 0.0
    %319 = vmatpush1.msra.mxu0 0.0
    %320 = vmatprep.subr.mxu0 0.0
    %321 = vmatpush1.msra.mxu0 0.0
    %322 = vmatprep.subr.mxu0 0.0
    %323 = vmatpush1.msra.mxu0 0.0
    %324 = vmatprep.subr.mxu0 0.0
    %325 = vmatpush1.msra.mxu0 0.0
    %326 = vmatprep.subr.mxu0 0.0
    %327 = vmatpush1.msra.mxu0 0.0
    %328 = vmatprep.subr.mxu0 0.0
    %329 = vmatpush1.msra.mxu0 0.0
    %330 = vmatprep.subr.mxu0 0.0
    %331 = vmatpush1.msra.mxu0 0.0
    %332 = vmatprep.subr.mxu0 0.0
    %333 = vmatpush1.msra.mxu0 0.0
    %334 = vmatprep.mubr.f32.mxu0 0.0
    %335 = vmatmul.mubr.f32.gmra.mrb[0].mxu0 %v93
    %v336 = vpop.f32.mrb[0].mxu0
    %v337 = vadd.f32 %v268, %v336
    %v338 = vpop.f32.mrb[0].mxu0
    %339 = vmatprep.mubr.f32.mxu0 0.0
    %340 = vmatmul.mubr.f32.gmra.mrb[0].mxu0 %v96
    %v341 = vpop.f32.mrb[0].mxu0
    %v342 = vadd.f32 %v268, %v341
    %v343 = vpop.f32.mrb[0].mxu0
    %344 = vdwg.mxu0
    %vm345 = vcmask 130048
    %v347 = vsel %vm345, %v165, 0
    %v350 = vsel %vm345, %v251, 0
    %352 = vmatprep.subr.mxu0 0.0
    %353 = vmatpush1.xpose.msra.mxu0 %v350
    %354 = vmatprep.subr.mxu0 0.0
    %355 = vmatpush1.xpose.msra.mxu0 0.0
    %356 = vmatprep.subr.mxu0 0.0
    %357 = vmatpush1.xpose.msra.mxu0 0.0
    %358 = vmatprep.subr.mxu0 0.0
    %359 = vmatpush1.xpose.msra.mxu0 0.0
    %360 = vmatprep.subr.mxu0 0.0
    %361 = vmatpush1.xpose.msra.mxu0 0.0
    %362 = vmatprep.subr.mxu0 0.0
    %363 = vmatpush1.xpose.msra.mxu0 0.0
    %364 = vmatprep.subr.mxu0 0.0
    %365 = vmatpush1.xpose.msra.mxu0 0.0
    %366 = vmatprep.subr.mxu0 0.0
    %367 = vmatpush1.xpose.msra.mxu0 0.0
    %368 = vmatprep.subr.mxu0 0.0
    %369 = vmatpush1.xpose.msra.mxu0 0.0
    %370 = vmatprep.subr.mxu0 0.0
    %371 = vmatpush1.xpose.msra.mxu0 0.0
    %372 = vmatprep.subr.mxu0 0.0
    %373 = vmatpush1.xpose.msra.mxu0 0.0
    %374 = vmatprep.subr.mxu0 0.0
    %375 = vmatpush1.xpose.msra.mxu0 0.0
    %376 = vmatprep.subr.mxu0 0.0
    %377 = vmatpush1.xpose.msra.mxu0 0.0
    %378 = vmatprep.subr.mxu0 0.0
    %379 = vmatpush1.xpose.msra.mxu0 0.0
    %380 = vmatprep.subr.mxu0 0.0
    %381 = vmatpush1.xpose.msra.mxu0 0.0
    %382 = vmatprep.subr.mxu0 0.0
    %383 = vmatpush1.xpose.msra.mxu0 0.0
    %384 = vmatprep.subr.mxu0 0.0
    %385 = vmatpush1.xpose.msra.mxu0 0.0
    %386 = vmatprep.subr.mxu0 0.0
    %387 = vmatpush1.xpose.msra.mxu0 0.0
    %388 = vmatprep.subr.mxu0 0.0
    %389 = vmatpush1.xpose.msra.mxu0 0.0
    %390 = vmatprep.subr.mxu0 0.0
    %391 = vmatpush1.xpose.msra.mxu0 0.0
    %392 = vmatprep.subr.mxu0 0.0
    %393 = vmatpush1.xpose.msra.mxu0 0.0
    %394 = vmatprep.subr.mxu0 0.0
    %395 = vmatpush1.xpose.msra.mxu0 0.0
    %396 = vmatprep.subr.mxu0 0.0
    %397 = vmatpush1.xpose.msra.mxu0 0.0
    %398 = vmatprep.subr.mxu0 0.0
    %399 = vmatpush1.xpose.msra.mxu0 0.0
    %400 = vmatprep.subr.mxu0 0.0
    %401 = vmatpush1.xpose.msra.mxu0 0.0
    %402 = vmatprep.subr.mxu0 0.0
    %403 = vmatpush1.xpose.msra.mxu0 0.0
    %404 = vmatprep.subr.mxu0 0.0
    %405 = vmatpush1.xpose.msra.mxu0 0.0
    %406 = vmatprep.subr.mxu0 0.0
    %407 = vmatpush1.xpose.msra.mxu0 0.0
    %408 = vmatprep.subr.mxu0 0.0
    %409 = vmatpush1.xpose.msra.mxu0 0.0
    %410 = vmatprep.subr.mxu0 0.0
    %411 = vmatpush1.xpose.msra.mxu0 0.0
    %412 = vmatprep.subr.mxu0 0.0
    %413 = vmatpush1.xpose.msra.mxu0 0.0
    %414 = vmatprep.subr.mxu0 0.0
    %415 = vmatpush1.xpose.msra.mxu0 0.0
    %416 = vmatprep.mubr.f32.mxu0 0.0
    %417 = vmatmul.mubr.f32.gmra.mrb[0].mxu0 %v347
    %v418 = vpop.f32.mrb[0].mxu0
    %v419 = vadd.f32 0.0, %v418
    %v420 = vpop.f32.mrb[0].mxu0
    %421 = vdwg.mxu0
    %v423 = vsel %vm345, %v170, 0
    %v426 = vsel %vm345, %v256, 0
    %428 = vmatprep.subr.mxu0 0.0
    %429 = vmatpush1.xpose.msra.mxu0 %v426
    %430 = vmatprep.subr.mxu0 0.0
    %431 = vmatpush1.xpose.msra.mxu0 0.0
    %432 = vmatprep.subr.mxu0 0.0
    %433 = vmatpush1.xpose.msra.mxu0 0.0
    %434 = vmatprep.subr.mxu0 0.0
    %435 = vmatpush1.xpose.msra.mxu0 0.0
    %436 = vmatprep.subr.mxu0 0.0
    %437 = vmatpush1.xpose.msra.mxu0 0.0
    %438 = vmatprep.subr.mxu0 0.0
    %439 = vmatpush1.xpose.msra.mxu0 0.0
    %440 = vmatprep.subr.mxu0 0.0
    %441 = vmatpush1.xpose.msra.mxu0 0.0
    %442 = vmatprep.subr.mxu0 0.0
    %443 = vmatpush1.xpose.msra.mxu0 0.0
    %444 = vmatprep.subr.mxu0 0.0
    %445 = vmatpush1.xpose.msra.mxu0 0.0
    %446 = vmatprep.subr.mxu0 0.0
    %447 = vmatpush1.xpose.msra.mxu0 0.0
    %448 = vmatprep.subr.mxu0 0.0
    %449 = vmatpush1.xpose.msra.mxu0 0.0
    %450 = vmatprep.subr.mxu0 0.0
    %451 = vmatpush1.xpose.msra.mxu0 0.0
    %452 = vmatprep.subr.mxu0 0.0
    %453 = vmatpush1.xpose.msra.mxu0 0.0
    %454 = vmatprep.subr.mxu0 0.0
    %455 = vmatpush1.xpose.msra.mxu0 0.0
    %456 = vmatprep.subr.mxu0 0.0
    %457 = vmatpush1.xpose.msra.mxu0 0.0
    %458 = vmatprep.subr.mxu0 0.0
    %459 = vmatpush1.xpose.msra.mxu0 0.0
    %460 = vmatprep.subr.mxu0 0.0
    %461 = vmatpush1.xpose.msra.mxu0 0.0
    %462 = vmatprep.subr.mxu0 0.0
    %463 = vmatpush1.xpose.msra.mxu0 0.0
    %464 = vmatprep.subr.mxu0 0.0
    %465 = vmatpush1.xpose.msra.mxu0 0.0
    %466 = vmatprep.subr.mxu0 0.0
    %467 = vmatpush1.xpose.msra.mxu0 0.0
    %468 = vmatprep.subr.mxu0 0.0
    %469 = vmatpush1.xpose.msra.mxu0 0.0
    %470 = vmatprep.subr.mxu0 0.0
    %471 = vmatpush1.xpose.msra.mxu0 0.0
    %472 = vmatprep.subr.mxu0 0.0
    %473 = vmatpush1.xpose.msra.mxu0 0.0
    %474 = vmatprep.subr.mxu0 0.0
    %475 = vmatpush1.xpose.msra.mxu0 0.0
    %476 = vmatprep.subr.mxu0 0.0
    %477 = vmatpush1.xpose.msra.mxu0 0.0
    %478 = vmatprep.subr.mxu0 0.0
    %479 = vmatpush1.xpose.msra.mxu0 0.0
    %480 = vmatprep.subr.mxu0 0.0
    %481 = vmatpush1.xpose.msra.mxu0 0.0
    %482 = vmatprep.subr.mxu0 0.0
    %483 = vmatpush1.xpose.msra.mxu0 0.0
    %484 = vmatprep.subr.mxu0 0.0
    %485 = vmatpush1.xpose.msra.mxu0 0.0
    %486 = vmatprep.subr.mxu0 0.0
    %487 = vmatpush1.xpose.msra.mxu0 0.0
    %488 = vmatprep.subr.mxu0 0.0
    %489 = vmatpush1.xpose.msra.mxu0 0.0
    %490 = vmatprep.subr.mxu0 0.0
    %491 = vmatpush1.xpose.msra.mxu0 0.0
    %492 = vmatprep.mubr.f32.mxu0 0.0
    %493 = vmatmul.mubr.f32.gmra.mrb[0].mxu0 %v423
    %v494 = vpop.f32.mrb[0].mxu0
    %v495 = vadd.f32 0.0, %v494
    %v496 = vpop.f32.mrb[0].mxu0
    %497 = vdwg.mxu0
    %v498 = vmul.f32 %v419, 0.25
    %v499 = vmul.f32 %v495, 0.25
    %v502 = vlaneseq
    %v503 = vshrl.u32 %v502, 7
    %v504 = vsub.s32 0, %v503
    %v505 = vrot.slane %v78, %v504
    %v506 = vlaneseq
    %v507 = vshrl.u32 %v506, 7
    %v508 = vsub.s32 0, %v507
    %v509 = vrot.slane %v79, %v508
    %v512 = vadd.f32 %v498, %v505
    %v513 = vadd.f32 %v499, %v509
    %vm514 = vcmask 64512
    %v515 = vsel %vm514, %v512, -inf
    %516 = vmax.xlane.f32.xlu0 %v515
    %v517 = vpop.xlane.xlu0 %516
    %v518 = vsel %vm514, %v513, -inf
    %519 = vmax.xlane.f32.xlu0 %v518
    %v520 = vpop.xlane.xlu0 %519
    %v521 = vsub.f32 %v512, %v517
    %v522 = vsub.f32 %v513, %v520
    %v523 = vmul.f32 %v521, 1.442695
    %v524 = vpow.pop %v523
    %v525 = vmul.f32 %v522, 1.442695
    %v526 = vpow.pop %v525
    %v527 = vsel %vm514, %v524, 0.0
    %528 = vadd.xlane.f32.xlu0 %v527
    %v529 = vpop.xlane.xlu0 %528
    %v530 = vsel %vm514, %v526, 0.0
    %531 = vadd.xlane.f32.xlu0 %v530
    %v532 = vpop.xlane.xlu0 %531
    %v533 = vrcp.pop %v529
    %v534 = vmul.f32 %v524, %v533
    %v535 = vrcp.pop %v532
    %v536 = vmul.f32 %v526, %v535
    %v538 = vsel %vm514, %v534, 0
    %540 = vmatprep.subr.mxu0 0.0
    %541 = vmatpush1.msra.mxu0 %v337
    %542 = vmatprep.subr.mxu0 0.0
    %543 = vmatpush1.msra.mxu0 0.0
    %544 = vmatprep.subr.mxu0 0.0
    %545 = vmatpush1.msra.mxu0 0.0
    %546 = vmatprep.subr.mxu0 0.0
    %547 = vmatpush1.msra.mxu0 0.0
    %548 = vmatprep.subr.mxu0 0.0
    %549 = vmatpush1.msra.mxu0 0.0
    %550 = vmatprep.subr.mxu0 0.0
    %551 = vmatpush1.msra.mxu0 0.0
    %552 = vmatprep.subr.mxu0 0.0
    %553 = vmatpush1.msra.mxu0 0.0
    %554 = vmatprep.subr.mxu0 0.0
    %555 = vmatpush1.msra.mxu0 0.0
    %556 = vmatprep.subr.mxu0 0.0
    %557 = vmatpush1.msra.mxu0 0.0
    %558 = vmatprep.subr.mxu0 0.0
    %559 = vmatpush1.msra.mxu0 0.0
    %560 = vmatprep.subr.mxu0 0.0
    %561 = vmatpush1.msra.mxu0 0.0
    %562 = vmatprep.subr.mxu0 0.0
    %563 = vmatpush1.msra.mxu0 0.0
    %564 = vmatprep.subr.mxu0 0.0
    %565 = vmatpush1.msra.mxu0 0.0
    %566 = vmatprep.subr.mxu0 0.0
    %567 = vmatpush1.msra.mxu0 0.0
    %568 = vmatprep.subr.mxu0 0.0
    %569 = vmatpush1.msra.mxu0 0.0
    %570 = vmatprep.subr.mxu0 0.0
    %571 = vmatpush1.msra.mxu0 0.0
    %572 = vmatprep.subr.mxu0 0.0
    %573 = vmatpush1.msra.mxu0 0.0
    %574 = vmatprep.subr.mxu0 0.0
    %575 = vmatpush1.msra.mxu0 0.0
    %576 = vmatprep.subr.mxu0 0.0
    %577 = vmatpush1.msra.mxu0 0.0
    %578 = vmatprep.subr.mxu0 0.0
    %579 = vmatpush1.msra.mxu0 0.0
    %580 = vmatprep.subr.mxu0 0.0
    %581 = vmatpush1.msra.mxu0 0.0
    %582 = vmatprep.subr.mxu0 0.0
    %583 = vmatpush1.msra.mxu0 0.0
    %584 = vmatprep.subr.mxu0 0.0
    %585 = vmatpush1.msra.mxu0 0.0
    %586 = vmatprep.subr.mxu0 0.0
    %587 = vmatpush1.msra.mxu0 0.0
    %588 = vmatprep.subr.mxu0 0.0
    %589 = vmatpush1.msra.mxu0 0.0
    %590 = vmatprep.subr.mxu0 0.0
    %591 = vmatpush1.msra.mxu0 0.0
    %592 = vmatprep.subr.mxu0 0.0
    %593 = vmatpush1.msra.mxu0 0.0
    %594 = vmatprep.subr.mxu0 0.0
    %595 = vmatpush1.msra.mxu0 0.0
    %596 = vmatprep.subr.mxu0 0.0
    %597 = vmatpush1.msra.mxu0 0.0
    %598 = vmatprep.subr.mxu0 0.0
    %599 = vmatpush1.msra.mxu0 0.0
    %600 = vmatprep.subr.mxu0 0.0
    %601 = vmatpush1.msra.mxu0 0.0
    %602 = vmatprep.subr.mxu0 0.0
    %603 = vmatpush1.msra.mxu0 0.0
    %604 = vmatprep.mubr.f32.mxu0 0.0
    %605 = vmatmul.mubr.f32.gmra.mrb[0].mxu0 %v538
    %v606 = vpop.f32.mrb[0].mxu0
    %v607 = vadd.f32 0.0, %v606
    %v608 = vpop.f32.mrb[0].mxu0
    %609 = vdwg.mxu0
    %v611 = vsel %vm514, %v536, 0
    %613 = vmatprep.subr.mxu0 0.0
    %614 = vmatpush1.msra.mxu0 %v342
    %615 = vmatprep.subr.mxu0 0.0
    %616 = vmatpush1.msra.mxu0 0.0
    %617 = vmatprep.subr.mxu0 0.0
    %618 = vmatpush1.msra.mxu0 0.0
    %619 = vmatprep.subr.mxu0 0.0
    %620 = vmatpush1.msra.mxu0 0.0
    %621 = vmatprep.subr.mxu0 0.0
    %622 = vmatpush1.msra.mxu0 0.0
    %623 = vmatprep.subr.mxu0 0.0
    %624 = vmatpush1.msra.mxu0 0.0
    %625 = vmatprep.subr.mxu0 0.0
    %626 = vmatpush1.msra.mxu0 0.0
    %627 = vmatprep.subr.mxu0 0.0
    %628 = vmatpush1.msra.mxu0 0.0
    %629 = vmatprep.subr.mxu0 0.0
    %630 = vmatpush1.msra.mxu0 0.0
    %631 = vmatprep.subr.mxu0 0.0
    %632 = vmatpush1.msra.mxu0 0.0
    %633 = vmatprep.subr.mxu0 0.0
    %634 = vmatpush1.msra.mxu0 0.0
    %635 = vmatprep.subr.mxu0 0.0
    %636 = vmatpush1.msra.mxu0 0.0
    %637 = vmatprep.subr.mxu0 0.0
    %638 = vmatpush1.msra.mxu0 0.0
    %639 = vmatprep.subr.mxu0 0.0
    %640 = vmatpush1.msra.mxu0 0.0
    %641 = vmatprep.subr.mxu0 0.0
    %642 = vmatpush1.msra.mxu0 0.0
    %643 = vmatprep.subr.mxu0 0.0
    %644 = vmatpush1.msra.mxu0 0.0
    %645 = vmatprep.subr.mxu0 0.0
    %646 = vmatpush1.msra.mxu0 0.0
    %647 = vmatprep.subr.mxu0 0.0
    %648 = vmatpush1.msra.mxu0 0.0
    %649 = vmatprep.subr.mxu0 0.0
    %650 = vmatpush1.msra.mxu0 0.0
    %651 = vmatprep.subr.mxu0 0.0
    %652 = vmatpush1.msra.mxu0 0.0
    %653 = vmatprep.subr.mxu0 0.0
    %654 = vmatpush1.msra.mxu0 0.0
    %655 = vmatprep.subr.mxu0 0.0
    %656 = vmatpush1.msra.mxu0 0.0
    %657 = vmatprep.subr.mxu0 0.0
    %658 = vmatpush1.msra.mxu0 0.0
    %659 = vmatprep.subr.mxu0 0.0
    %660 = vmatpush1.msra.mxu0 0.0
    %661 = vmatprep.subr.mxu0 0.0
    %662 = vmatpush1.msra.mxu0 0.0
    %663 = vmatprep.subr.mxu0 0.0
    %664 = vmatpush1.msra.mxu0 0.0
    %665 = vmatprep.subr.mxu0 0.0
    %666 = vmatpush1.msra.mxu0 0.0
    %667 = vmatprep.subr.mxu0 0.0
    %668 = vmatpush1.msra.mxu0 0.0
    %669 = vmatprep.subr.mxu0 0.0
    %670 = vmatpush1.msra.mxu0 0.0
    %671 = vmatprep.subr.mxu0 0.0
    %672 = vmatpush1.msra.mxu0 0.0
    %673 = vmatprep.subr.mxu0 0.0
    %674 = vmatpush1.msra.mxu0 0.0
    %675 = vmatprep.subr.mxu0 0.0
    %676 = vmatpush1.msra.mxu0 0.0
    %677 = vmatprep.mubr.f32.mxu0 0.0
    %678 = vmatmul.mubr.f32.gmra.mrb[0].mxu0 %v611
    %v679 = vpop.f32.mrb[0].mxu0
    %v680 = vadd.f32 0.0, %v679
    %v681 = vpop.f32.mrb[0].mxu0
    %682 = vdwg.mxu0
    %v683 = vld [vmem:[%s9] sm:$0xff]
    %v684 = vld [vmem:[%s9 + $0x8] sm:$0xff]
    %s685 = scalar_lea.vmem %s3, 32
    %v686 = vld [vmem:[%s685] sm:$0xff]
    %v687 = vld [vmem:[%s685 + $0x8] sm:$0xff]
    %v688 = vld [vmem:[%s685 + $0x10] sm:$0xff]
    %v689 = vld [vmem:[%s685 + $0x18] sm:$0xff]
    %s690 = scalar_lea.vmem %s6, 1
    %v691 = vld [vmem:[%s690] sm:$0x1]
    %v693 = vlaneseq
    %v694 = vshrl.u32 %v693, 7
    %v695 = vsub.s32 0, %v694
    %v696 = vrot.slane %v691, %v695
    %698 = vmatprep.subr.mxu0 0.0
    %699 = vmatpush1.msra.mxu0 %v686
    %700 = vmatprep.subr.mxu0 0.0
    %701 = vmatpush1.msra.mxu0 %v687
    %702 = vmatprep.subr.mxu0 0.0
    %703 = vmatpush1.msra.mxu0 %v688
    %704 = vmatprep.subr.mxu0 0.0
    %705 = vmatpush1.msra.mxu0 %v689
    %706 = vmatprep.subr.mxu0 0.0
    %707 = vmatpush1.msra.mxu0 0.0
    %708 = vmatprep.subr.mxu0 0.0
    %709 = vmatpush1.msra.mxu0 0.0
    %710 = vmatprep.subr.mxu0 0.0
    %711 = vmatpush1.msra.mxu0 0.0
    %712 = vmatprep.subr.mxu0 0.0
    %713 = vmatpush1.msra.mxu0 0.0
    %714 = vmatprep.subr.mxu0 0.0
    %715 = vmatpush1.msra.mxu0 0.0
    %716 = vmatprep.subr.mxu0 0.0
    %717 = vmatpush1.msra.mxu0 0.0
    %718 = vmatprep.subr.mxu0 0.0
    %719 = vmatpush1.msra.mxu0 0.0
    %720 = vmatprep.subr.mxu0 0.0
    %721 = vmatpush1.msra.mxu0 0.0
    %722 = vmatprep.subr.mxu0 0.0
    %723 = vmatpush1.msra.mxu0 0.0
    %724 = vmatprep.subr.mxu0 0.0
    %725 = vmatpush1.msra.mxu0 0.0
    %726 = vmatprep.subr.mxu0 0.0
    %727 = vmatpush1.msra.mxu0 0.0
    %728 = vmatprep.subr.mxu0 0.0
    %729 = vmatpush1.msra.mxu0 0.0
    %730 = vmatprep.subr.mxu0 0.0
    %731 = vmatpush1.msra.mxu0 0.0
    %732 = vmatprep.subr.mxu0 0.0
    %733 = vmatpush1.msra.mxu0 0.0
    %734 = vmatprep.subr.mxu0 0.0
    %735 = vmatpush1.msra.mxu0 0.0
    %736 = vmatprep.subr.mxu0 0.0
    %737 = vmatpush1.msra.mxu0 0.0
    %738 = vmatprep.subr.mxu0 0.0
    %739 = vmatpush1.msra.mxu0 0.0
    %740 = vmatprep.subr.mxu0 0.0
    %741 = vmatpush1.msra.mxu0 0.0
    %742 = vmatprep.subr.mxu0 0.0
    %743 = vmatpush1.msra.mxu0 0.0
    %744 = vmatprep.subr.mxu0 0.0
    %745 = vmatpush1.msra.mxu0 0.0
    %746 = vmatprep.subr.mxu0 0.0
    %747 = vmatpush1.msra.mxu0 0.0
    %748 = vmatprep.subr.mxu0 0.0
    %749 = vmatpush1.msra.mxu0 0.0
    %750 = vmatprep.subr.mxu0 0.0
    %751 = vmatpush1.msra.mxu0 0.0
    %752 = vmatprep.subr.mxu0 0.0
    %753 = vmatpush1.msra.mxu0 0.0
    %754 = vmatprep.subr.mxu0 0.0
    %755 = vmatpush1.msra.mxu0 0.0
    %756 = vmatprep.subr.mxu0 0.0
    %757 = vmatpush1.msra.mxu0 0.0
    %758 = vmatprep.subr.mxu0 0.0
    %759 = vmatpush1.msra.mxu0 0.0
    %760 = vmatprep.subr.mxu0 0.0
    %761 = vmatpush1.msra.mxu0 0.0
    %762 = vmatprep.mubr.f32.mxu0 0.0
    %763 = vmatmul.mubr.f32.gmra.mrb[0].mxu0 %v93
    %v764 = vpop.f32.mrb[0].mxu0
    %v765 = vadd.f32 %v696, %v764
    %v766 = vpop.f32.mrb[0].mxu0
    %767 = vmatprep.mubr.f32.mxu0 0.0
    %768 = vmatmul.mubr.f32.gmra.mrb[0].mxu0 %v96
    %v769 = vpop.f32.mrb[0].mxu0
    %v770 = vadd.f32 %v696, %v769
    %v771 = vpop.f32.mrb[0].mxu0
    %772 = vdwg.mxu0
    %s773 = scalar_lea.vmem %s4, 32
    %v774 = vld [vmem:[%s773] sm:$0xff]
    %v775 = vld [vmem:[%s773 + $0x8] sm:$0xff]
    %v776 = vld [vmem:[%s773 + $0x10] sm:$0xff]
    %v777 = vld [vmem:[%s773 + $0x18] sm:$0xff]
    %s778 = scalar_lea.vmem %s7, 1
    %v779 = vld [vmem:[%s778] sm:$0x1]
    %v781 = vlaneseq
    %v782 = vshrl.u32 %v781, 7
    %v783 = vsub.s32 0, %v782
    %v784 = vrot.slane %v779, %v783
    %786 = vmatprep.subr.mxu0 0.0
    %787 = vmatpush1.msra.mxu0 %v774
    %788 = vmatprep.subr.mxu0 0.0
    %789 = vmatpush1.msra.mxu0 %v775
    %790 = vmatprep.subr.mxu0 0.0
    %791 = vmatpush1.msra.mxu0 %v776
    %792 = vmatprep.subr.mxu0 0.0
    %793 = vmatpush1.msra.mxu0 %v777
    %794 = vmatprep.subr.mxu0 0.0
    %795 = vmatpush1.msra.mxu0 0.0
    %796 = vmatprep.subr.mxu0 0.0
    %797 = vmatpush1.msra.mxu0 0.0
    %798 = vmatprep.subr.mxu0 0.0
    %799 = vmatpush1.msra.mxu0 0.0
    %800 = vmatprep.subr.mxu0 0.0
    %801 = vmatpush1.msra.mxu0 0.0
    %802 = vmatprep.subr.mxu0 0.0
    %803 = vmatpush1.msra.mxu0 0.0
    %804 = vmatprep.subr.mxu0 0.0
    %805 = vmatpush1.msra.mxu0 0.0
    %806 = vmatprep.subr.mxu0 0.0
    %807 = vmatpush1.msra.mxu0 0.0
    %808 = vmatprep.subr.mxu0 0.0
    %809 = vmatpush1.msra.mxu0 0.0
    %810 = vmatprep.subr.mxu0 0.0
    %811 = vmatpush1.msra.mxu0 0.0
    %812 = vmatprep.subr.mxu0 0.0
    %813 = vmatpush1.msra.mxu0 0.0
    %814 = vmatprep.subr.mxu0 0.0
    %815 = vmatpush1.msra.mxu0 0.0
    %816 = vmatprep.subr.mxu0 0.0
    %817 = vmatpush1.msra.mxu0 0.0
    %818 = vmatprep.subr.mxu0 0.0
    %819 = vmatpush1.msra.mxu0 0.0
    %820 = vmatprep.subr.mxu0 0.0
    %821 = vmatpush1.msra.mxu0 0.0
    %822 = vmatprep.subr.mxu0 0.0
    %823 = vmatpush1.msra.mxu0 0.0
    %824 = vmatprep.subr.mxu0 0.0
    %825 = vmatpush1.msra.mxu0 0.0
    %826 = vmatprep.subr.mxu0 0.0
    %827 = vmatpush1.msra.mxu0 0.0
    %828 = vmatprep.subr.mxu0 0.0
    %829 = vmatpush1.msra.mxu0 0.0
    %830 = vmatprep.subr.mxu0 0.0
    %831 = vmatpush1.msra.mxu0 0.0
    %832 = vmatprep.subr.mxu0 0.0
    %833 = vmatpush1.msra.mxu0 0.0
    %834 = vmatprep.subr.mxu0 0.0
    %835 = vmatpush1.msra.mxu0 0.0
    %836 = vmatprep.subr.mxu0 0.0
    %837 = vmatpush1.msra.mxu0 0.0
    %838 = vmatprep.subr.mxu0 0.0
    %839 = vmatpush1.msra.mxu0 0.0
    %840 = vmatprep.subr.mxu0 0.0
    %841 = vmatpush1.msra.mxu0 0.0
    %842 = vmatprep.subr.mxu0 0.0
    %843 = vmatpush1.msra.mxu0 0.0
    %844 = vmatprep.subr.mxu0 0.0
    %845 = vmatpush1.msra.mxu0 0.0
    %846 = vmatprep.subr.mxu0 0.0
    %847 = vmatpush1.msra.mxu0 0.0
    %848 = vmatprep.subr.mxu0 0.0
    %849 = vmatpush1.msra.mxu0 0.0
    %850 = vmatprep.mubr.f32.mxu0 0.0
    %851 = vmatmul.mubr.f32.gmra.mrb[0].mxu0 %v93
    %v852 = vpop.f32.mrb[0].mxu0
    %v853 = vadd.f32 %v784, %v852
    %v854 = vpop.f32.mrb[0].mxu0
    %855 = vmatprep.mubr.f32.mxu0 0.0
    %856 = vmatmul.mubr.f32.gmra.mrb[0].mxu0 %v96
    %v857 = vpop.f32.mrb[0].mxu0
    %v858 = vadd.f32 %v784, %v857
    %v859 = vpop.f32.mrb[0].mxu0
    %860 = vdwg.mxu0
    %s861 = scalar_lea.vmem %s5, 32
    %v862 = vld [vmem:[%s861] sm:$0xff]
    %v863 = vld [vmem:[%s861 + $0x8] sm:$0xff]
    %v864 = vld [vmem:[%s861 + $0x10] sm:$0xff]
    %v865 = vld [vmem:[%s861 + $0x18] sm:$0xff]
    %s866 = scalar_lea.vmem %s8, 1
    %v867 = vld [vmem:[%s866] sm:$0x1]
    %v869 = vlaneseq
    %v870 = vshrl.u32 %v869, 7
    %v871 = vsub.s32 0, %v870
    %v872 = vrot.slane %v867, %v871
    %874 = vmatprep.subr.mxu0 0.0
    %875 = vmatpush1.msra.mxu0 %v862
    %876 = vmatprep.subr.mxu0 0.0
    %877 = vmatpush1.msra.mxu0 %v863
    %878 = vmatprep.subr.mxu0 0.0
    %879 = vmatpush1.msra.mxu0 %v864
    %880 = vmatprep.subr.mxu0 0.0
    %881 = vmatpush1.msra.mxu0 %v865
    %882 = vmatprep.subr.mxu0 0.0
    %883 = vmatpush1.msra.mxu0 0.0
    %884 = vmatprep.subr.mxu0 0.0
    %885 = vmatpush1.msra.mxu0 0.0
    %886 = vmatprep.subr.mxu0 0.0
    %887 = vmatpush1.msra.mxu0 0.0
    %888 = vmatprep.subr.mxu0 0.0
    %889 = vmatpush1.msra.mxu0 0.0
    %890 = vmatprep.subr.mxu0 0.0
    %891 = vmatpush1.msra.mxu0 0.0
    %892 = vmatprep.subr.mxu0 0.0
    %893 = vmatpush1.msra.mxu0 0.0
    %894 = vmatprep.subr.mxu0 0.0
    %895 = vmatpush1.msra.mxu0 0.0
    %896 = vmatprep.subr.mxu0 0.0
    %897 = vmatpush1.msra.mxu0 0.0
    %898 = vmatprep.subr.mxu0 0.0
    %899 = vmatpush1.msra.mxu0 0.0
    %900 = vmatprep.subr.mxu0 0.0
    %901 = vmatpush1.msra.mxu0 0.0
    %902 = vmatprep.subr.mxu0 0.0
    %903 = vmatpush1.msra.mxu0 0.0
    %904 = vmatprep.subr.mxu0 0.0
    %905 = vmatpush1.msra.mxu0 0.0
    %906 = vmatprep.subr.mxu0 0.0
    %907 = vmatpush1.msra.mxu0 0.0
    %908 = vmatprep.subr.mxu0 0.0
    %909 = vmatpush1.msra.mxu0 0.0
    %910 = vmatprep.subr.mxu0 0.0
    %911 = vmatpush1.msra.mxu0 0.0
    %912 = vmatprep.subr.mxu0 0.0
    %913 = vmatpush1.msra.mxu0 0.0
    %914 = vmatprep.subr.mxu0 0.0
    %915 = vmatpush1.msra.mxu0 0.0
    %916 = vmatprep.subr.mxu0 0.0
    %917 = vmatpush1.msra.mxu0 0.0
    %918 = vmatprep.subr.mxu0 0.0
    %919 = vmatpush1.msra.mxu0 0.0
    %920 = vmatprep.subr.mxu0 0.0
    %921 = vmatpush1.msra.mxu0 0.0
    %922 = vmatprep.subr.mxu0 0.0
    %923 = vmatpush1.msra.mxu0 0.0
    %924 = vmatprep.subr.mxu0 0.0
    %925 = vmatpush1.msra.mxu0 0.0
    %926 = vmatprep.subr.mxu0 0.0
    %927 = vmatpush1.msra.mxu0 0.0
    %928 = vmatprep.subr.mxu0 0.0
    %929 = vmatpush1.msra.mxu0 0.0
    %930 = vmatprep.subr.mxu0 0.0
    %931 = vmatpush1.msra.mxu0 0.0
    %932 = vmatprep.subr.mxu0 0.0
    %933 = vmatpush1.msra.mxu0 0.0
    %934 = vmatprep.subr.mxu0 0.0
    %935 = vmatpush1.msra.mxu0 0.0
    %936 = vmatprep.subr.mxu0 0.0
    %937 = vmatpush1.msra.mxu0 0.0
    %938 = vmatprep.mubr.f32.mxu0 0.0
    %939 = vmatmul.mubr.f32.gmra.mrb[0].mxu0 %v93
    %v940 = vpop.f32.mrb[0].mxu0
    %v941 = vadd.f32 %v872, %v940
    %v942 = vpop.f32.mrb[0].mxu0
    %943 = vmatprep.mubr.f32.mxu0 0.0
    %944 = vmatmul.mubr.f32.gmra.mrb[0].mxu0 %v96
    %v945 = vpop.f32.mrb[0].mxu0
    %v946 = vadd.f32 %v872, %v945
    %v947 = vpop.f32.mrb[0].mxu0
    %948 = vdwg.mxu0
    %v950 = vsel %vm345, %v765, 0
    %v953 = vsel %vm345, %v853, 0
    %955 = vmatprep.subr.mxu0 0.0
    %956 = vmatpush1.xpose.msra.mxu0 %v953
    %957 = vmatprep.subr.mxu0 0.0
    %958 = vmatpush1.xpose.msra.mxu0 0.0
    %959 = vmatprep.subr.mxu0 0.0
    %960 = vmatpush1.xpose.msra.mxu0 0.0
    %961 = vmatprep.subr.mxu0 0.0
    %962 = vmatpush1.xpose.msra.mxu0 0.0
    %963 = vmatprep.subr.mxu0 0.0
    %964 = vmatpush1.xpose.msra.mxu0 0.0
    %965 = vmatprep.subr.mxu0 0.0
    %966 = vmatpush1.xpose.msra.mxu0 0.0
    %967 = vmatprep.subr.mxu0 0.0
    %968 = vmatpush1.xpose.msra.mxu0 0.0
    %969 = vmatprep.subr.mxu0 0.0
    %970 = vmatpush1.xpose.msra.mxu0 0.0
    %971 = vmatprep.subr.mxu0 0.0
    %972 = vmatpush1.xpose.msra.mxu0 0.0
    %973 = vmatprep.subr.mxu0 0.0
    %974 = vmatpush1.xpose.msra.mxu0 0.0
    %975 = vmatprep.subr.mxu0 0.0
    %976 = vmatpush1.xpose.msra.mxu0 0.0
    %977 = vmatprep.subr.mxu0 0.0
    %978 = vmatpush1.xpose.msra.mxu0 0.0
    %979 = vmatprep.subr.mxu0 0.0
    %980 = vmatpush1.xpose.msra.mxu0 0.0
    %981 = vmatprep.subr.mxu0 0.0
    %982 = vmatpush1.xpose.msra.mxu0 0.0
    %983 = vmatprep.subr.mxu0 0.0
    %984 = vmatpush1.xpose.msra.mxu0 0.0
    %985 = vmatprep.subr.mxu0 0.0
    %986 = vmatpush1.xpose.msra.mxu0 0.0
    %987 = vmatprep.subr.mxu0 0.0
    %988 = vmatpush1.xpose.msra.mxu0 0.0
    %989 = vmatprep.subr.mxu0 0.0
    %990 = vmatpush1.xpose.msra.mxu0 0.0
    %991 = vmatprep.subr.mxu0 0.0
    %992 = vmatpush1.xpose.msra.mxu0 0.0
    %993 = vmatprep.subr.mxu0 0.0
    %994 = vmatpush1.xpose.msra.mxu0 0.0
    %995 = vmatprep.subr.mxu0 0.0
    %996 = vmatpush1.xpose.msra.mxu0 0.0
    %997 = vmatprep.subr.mxu0 0.0
    %998 = vmatpush1.xpose.msra.mxu0 0.0
    %999 = vmatprep.subr.mxu0 0.0
    %1000 = vmatpush1.xpose.msra.mxu0 0.0
    %1001 = vmatprep.subr.mxu0 0.0
    %1002 = vmatpush1.xpose.msra.mxu0 0.0
    %1003 = vmatprep.subr.mxu0 0.0
    %1004 = vmatpush1.xpose.msra.mxu0 0.0
    %1005 = vmatprep.subr.mxu0 0.0
    %1006 = vmatpush1.xpose.msra.mxu0 0.0
    %1007 = vmatprep.subr.mxu0 0.0
    %1008 = vmatpush1.xpose.msra.mxu0 0.0
    %1009 = vmatprep.subr.mxu0 0.0
    %1010 = vmatpush1.xpose.msra.mxu0 0.0
    %1011 = vmatprep.subr.mxu0 0.0
    %1012 = vmatpush1.xpose.msra.mxu0 0.0
    %1013 = vmatprep.subr.mxu0 0.0
    %1014 = vmatpush1.xpose.msra.mxu0 0.0
    %1015 = vmatprep.subr.mxu0 0.0
    %1016 = vmatpush1.xpose.msra.mxu0 0.0
    %1017 = vmatprep.subr.mxu0 0.0
    %1018 = vmatpush1.xpose.msra.mxu0 0.0
    %1019 = vmatprep.mubr.f32.mxu0 0.0
    %1020 = vmatmul.mubr.f32.gmra.mrb[0].mxu0 %v950
    %v1021 = vpop.f32.mrb[0].mxu0
    %v1022 = vadd.f32 0.0, %v1021
    %v1023 = vpop.f32.mrb[0].mxu0
    %1024 = vdwg.mxu0
    %v1026 = vsel %vm345, %v770, 0
    %v1029 = vsel %vm345, %v858, 0
    %1031 = vmatprep.subr.mxu0 0.0
    %1032 = vmatpush1.xpose.msra.mxu0 %v1029
    %1033 = vmatprep.subr.mxu0 0.0
    %1034 = vmatpush1.xpose.msra.mxu0 0.0
    %1035 = vmatprep.subr.mxu0 0.0
    %1036 = vmatpush1.xpose.msra.mxu0 0.0
    %1037 = vmatprep.subr.mxu0 0.0
    %1038 = vmatpush1.xpose.msra.mxu0 0.0
    %1039 = vmatprep.subr.mxu0 0.0
    %1040 = vmatpush1.xpose.msra.mxu0 0.0
    %1041 = vmatprep.subr.mxu0 0.0
    %1042 = vmatpush1.xpose.msra.mxu0 0.0
    %1043 = vmatprep.subr.mxu0 0.0
    %1044 = vmatpush1.xpose.msra.mxu0 0.0
    %1045 = vmatprep.subr.mxu0 0.0
    %1046 = vmatpush1.xpose.msra.mxu0 0.0
    %1047 = vmatprep.subr.mxu0 0.0
    %1048 = vmatpush1.xpose.msra.mxu0 0.0
    %1049 = vmatprep.subr.mxu0 0.0
    %1050 = vmatpush1.xpose.msra.mxu0 0.0
    %1051 = vmatprep.subr.mxu0 0.0
    %1052 = vmatpush1.xpose.msra.mxu0 0.0
    %1053 = vmatprep.subr.mxu0 0.0
    %1054 = vmatpush1.xpose.msra.mxu0 0.0
    %1055 = vmatprep.subr.mxu0 0.0
    %1056 = vmatpush1.xpose.msra.mxu0 0.0
    %1057 = vmatprep.subr.mxu0 0.0
    %1058 = vmatpush1.xpose.msra.mxu0 0.0
    %1059 = vmatprep.subr.mxu0 0.0
    %1060 = vmatpush1.xpose.msra.mxu0 0.0
    %1061 = vmatprep.subr.mxu0 0.0
    %1062 = vmatpush1.xpose.msra.mxu0 0.0
    %1063 = vmatprep.subr.mxu0 0.0
    %1064 = vmatpush1.xpose.msra.mxu0 0.0
    %1065 = vmatprep.subr.mxu0 0.0
    %1066 = vmatpush1.xpose.msra.mxu0 0.0
    %1067 = vmatprep.subr.mxu0 0.0
    %1068 = vmatpush1.xpose.msra.mxu0 0.0
    %1069 = vmatprep.subr.mxu0 0.0
    %1070 = vmatpush1.xpose.msra.mxu0 0.0
    %1071 = vmatprep.subr.mxu0 0.0
    %1072 = vmatpush1.xpose.msra.mxu0 0.0
    %1073 = vmatprep.subr.mxu0 0.0
    %1074 = vmatpush1.xpose.msra.mxu0 0.0
    %1075 = vmatprep.subr.mxu0 0.0
    %1076 = vmatpush1.xpose.msra.mxu0 0.0
    %1077 = vmatprep.subr.mxu0 0.0
    %1078 = vmatpush1.xpose.msra.mxu0 0.0
    %1079 = vmatprep.subr.mxu0 0.0
    %1080 = vmatpush1.xpose.msra.mxu0 0.0
    %1081 = vmatprep.subr.mxu0 0.0
    %1082 = vmatpush1.xpose.msra.mxu0 0.0
    %1083 = vmatprep.subr.mxu0 0.0
    %1084 = vmatpush1.xpose.msra.mxu0 0.0
    %1085 = vmatprep.subr.mxu0 0.0
    %1086 = vmatpush1.xpose.msra.mxu0 0.0
    %1087 = vmatprep.subr.mxu0 0.0
    %1088 = vmatpush1.xpose.msra.mxu0 0.0
    %1089 = vmatprep.subr.mxu0 0.0
    %1090 = vmatpush1.xpose.msra.mxu0 0.0
    %1091 = vmatprep.subr.mxu0 0.0
    %1092 = vmatpush1.xpose.msra.mxu0 0.0
    %1093 = vmatprep.subr.mxu0 0.0
    %1094 = vmatpush1.xpose.msra.mxu0 0.0
    %1095 = vmatprep.mubr.f32.mxu0 0.0
    %1096 = vmatmul.mubr.f32.gmra.mrb[0].mxu0 %v1026
    %v1097 = vpop.f32.mrb[0].mxu0
    %v1098 = vadd.f32 0.0, %v1097
    %v1099 = vpop.f32.mrb[0].mxu0
    %1100 = vdwg.mxu0
    %v1101 = vmul.f32 %v1022, 0.25
    %v1102 = vmul.f32 %v1098, 0.25
    %v1103 = vadd.f32 %v1101, %v505
    %v1104 = vadd.f32 %v1102, %v509
    %v1105 = vsel %vm514, %v1103, -inf
    %1106 = vmax.xlane.f32.xlu0 %v1105
    %v1107 = vpop.xlane.xlu0 %1106
    %v1108 = vsel %vm514, %v1104, -inf
    %1109 = vmax.xlane.f32.xlu0 %v1108
    %v1110 = vpop.xlane.xlu0 %1109
    %v1111 = vsub.f32 %v1103, %v1107
    %v1112 = vsub.f32 %v1104, %v1110
    %v1113 = vmul.f32 %v1111, 1.442695
    %v1114 = vpow.pop %v1113
    %v1115 = vmul.f32 %v1112, 1.442695
    %v1116 = vpow.pop %v1115
    %v1117 = vsel %vm514, %v1114, 0.0
    %1118 = vadd.xlane.f32.xlu0 %v1117
    %v1119 = vpop.xlane.xlu0 %1118
    %v1120 = vsel %vm514, %v1116, 0.0
    %1121 = vadd.xlane.f32.xlu0 %v1120
    %v1122 = vpop.xlane.xlu0 %1121
    %v1123 = vrcp.pop %v1119
    %v1124 = vmul.f32 %v1114, %v1123
    %v1125 = vrcp.pop %v1122
    %v1126 = vmul.f32 %v1116, %v1125
    %v1128 = vsel %vm514, %v1124, 0
    %1130 = vmatprep.subr.mxu0 0.0
    %1131 = vmatpush1.msra.mxu0 %v941
    %1132 = vmatprep.subr.mxu0 0.0
    %1133 = vmatpush1.msra.mxu0 0.0
    %1134 = vmatprep.subr.mxu0 0.0
    %1135 = vmatpush1.msra.mxu0 0.0
    %1136 = vmatprep.subr.mxu0 0.0
    %1137 = vmatpush1.msra.mxu0 0.0
    %1138 = vmatprep.subr.mxu0 0.0
    %1139 = vmatpush1.msra.mxu0 0.0
    %1140 = vmatprep.subr.mxu0 0.0
    %1141 = vmatpush1.msra.mxu0 0.0
    %1142 = vmatprep.subr.mxu0 0.0
    %1143 = vmatpush1.msra.mxu0 0.0
    %1144 = vmatprep.subr.mxu0 0.0
    %1145 = vmatpush1.msra.mxu0 0.0
    %1146 = vmatprep.subr.mxu0 0.0
    %1147 = vmatpush1.msra.mxu0 0.0
    %1148 = vmatprep.subr.mxu0 0.0
    %1149 = vmatpush1.msra.mxu0 0.0
    %1150 = vmatprep.subr.mxu0 0.0
    %1151 = vmatpush1.msra.mxu0 0.0
    %1152 = vmatprep.subr.mxu0 0.0
    %1153 = vmatpush1.msra.mxu0 0.0
    %1154 = vmatprep.subr.mxu0 0.0
    %1155 = vmatpush1.msra.mxu0 0.0
    %1156 = vmatprep.subr.mxu0 0.0
    %1157 = vmatpush1.msra.mxu0 0.0
    %1158 = vmatprep.subr.mxu0 0.0
    %1159 = vmatpush1.msra.mxu0 0.0
    %1160 = vmatprep.subr.mxu0 0.0
    %1161 = vmatpush1.msra.mxu0 0.0
    %1162 = vmatprep.subr.mxu0 0.0
    %1163 = vmatpush1.msra.mxu0 0.0
    %1164 = vmatprep.subr.mxu0 0.0
    %1165 = vmatpush1.msra.mxu0 0.0
    %1166 = vmatprep.subr.mxu0 0.0
    %1167 = vmatpush1.msra.mxu0 0.0
    %1168 = vmatprep.subr.mxu0 0.0
    %1169 = vmatpush1.msra.mxu0 0.0
    %1170 = vmatprep.subr.mxu0 0.0
    %1171 = vmatpush1.msra.mxu0 0.0
    %1172 = vmatprep.subr.mxu0 0.0
    %1173 = vmatpush1.msra.mxu0 0.0
    %1174 = vmatprep.subr.mxu0 0.0
    %1175 = vmatpush1.msra.mxu0 0.0
    %1176 = vmatprep.subr.mxu0 0.0
    %1177 = vmatpush1.msra.mxu0 0.0
    %1178 = vmatprep.subr.mxu0 0.0
    %1179 = vmatpush1.msra.mxu0 0.0
    %1180 = vmatprep.subr.mxu0 0.0
    %1181 = vmatpush1.msra.mxu0 0.0
    %1182 = vmatprep.subr.mxu0 0.0
    %1183 = vmatpush1.msra.mxu0 0.0
    %1184 = vmatprep.subr.mxu0 0.0
    %1185 = vmatpush1.msra.mxu0 0.0
    %1186 = vmatprep.subr.mxu0 0.0
    %1187 = vmatpush1.msra.mxu0 0.0
    %1188 = vmatprep.subr.mxu0 0.0
    %1189 = vmatpush1.msra.mxu0 0.0
    %1190 = vmatprep.subr.mxu0 0.0
    %1191 = vmatpush1.msra.mxu0 0.0
    %1192 = vmatprep.subr.mxu0 0.0
    %1193 = vmatpush1.msra.mxu0 0.0
    %1194 = vmatprep.mubr.f32.mxu0 0.0
    %1195 = vmatmul.mubr.f32.gmra.mrb[0].mxu0 %v1128
    %v1196 = vpop.f32.mrb[0].mxu0
    %v1197 = vadd.f32 0.0, %v1196
    %v1198 = vpop.f32.mrb[0].mxu0
    %1199 = vdwg.mxu0
    %v1201 = vsel %vm514, %v1126, 0
    %1203 = vmatprep.subr.mxu0 0.0
    %1204 = vmatpush1.msra.mxu0 %v946
    %1205 = vmatprep.subr.mxu0 0.0
    %1206 = vmatpush1.msra.mxu0 0.0
    %1207 = vmatprep.subr.mxu0 0.0
    %1208 = vmatpush1.msra.mxu0 0.0
    %1209 = vmatprep.subr.mxu0 0.0
    %1210 = vmatpush1.msra.mxu0 0.0
    %1211 = vmatprep.subr.mxu0 0.0
    %1212 = vmatpush1.msra.mxu0 0.0
    %1213 = vmatprep.subr.mxu0 0.0
    %1214 = vmatpush1.msra.mxu0 0.0
    %1215 = vmatprep.subr.mxu0 0.0
    %1216 = vmatpush1.msra.mxu0 0.0
    %1217 = vmatprep.subr.mxu0 0.0
    %1218 = vmatpush1.msra.mxu0 0.0
    %1219 = vmatprep.subr.mxu0 0.0
    %1220 = vmatpush1.msra.mxu0 0.0
    %1221 = vmatprep.subr.mxu0 0.0
    %1222 = vmatpush1.msra.mxu0 0.0
    %1223 = vmatprep.subr.mxu0 0.0
    %1224 = vmatpush1.msra.mxu0 0.0
    %1225 = vmatprep.subr.mxu0 0.0
    %1226 = vmatpush1.msra.mxu0 0.0
    %1227 = vmatprep.subr.mxu0 0.0
    %1228 = vmatpush1.msra.mxu0 0.0
    %1229 = vmatprep.subr.mxu0 0.0
    %1230 = vmatpush1.msra.mxu0 0.0
    %1231 = vmatprep.subr.mxu0 0.0
    %1232 = vmatpush1.msra.mxu0 0.0
    %1233 = vmatprep.subr.mxu0 0.0
    %1234 = vmatpush1.msra.mxu0 0.0
    %1235 = vmatprep.subr.mxu0 0.0
    %1236 = vmatpush1.msra.mxu0 0.0
    %1237 = vmatprep.subr.mxu0 0.0
    %1238 = vmatpush1.msra.mxu0 0.0
    %1239 = vmatprep.subr.mxu0 0.0
    %1240 = vmatpush1.msra.mxu0 0.0
    %1241 = vmatprep.subr.mxu0 0.0
    %1242 = vmatpush1.msra.mxu0 0.0
    %1243 = vmatprep.subr.mxu0 0.0
    %1244 = vmatpush1.msra.mxu0 0.0
    %1245 = vmatprep.subr.mxu0 0.0
    %1246 = vmatpush1.msra.mxu0 0.0
    %1247 = vmatprep.subr.mxu0 0.0
    %1248 = vmatpush1.msra.mxu0 0.0
    %1249 = vmatprep.subr.mxu0 0.0
    %1250 = vmatpush1.msra.mxu0 0.0
    %1251 = vmatprep.subr.mxu0 0.0
    %1252 = vmatpush1.msra.mxu0 0.0
    %1253 = vmatprep.subr.mxu0 0.0
    %1254 = vmatpush1.msra.mxu0 0.0
    %1255 = vmatprep.subr.mxu0 0.0
    %1256 = vmatpush1.msra.mxu0 0.0
    %1257 = vmatprep.subr.mxu0 0.0
    %1258 = vmatpush1.msra.mxu0 0.0
    %1259 = vmatprep.subr.mxu0 0.0
    %1260 = vmatpush1.msra.mxu0 0.0
    %1261 = vmatprep.subr.mxu0 0.0
    %1262 = vmatpush1.msra.mxu0 0.0
    %1263 = vmatprep.subr.mxu0 0.0
    %1264 = vmatpush1.msra.mxu0 0.0
    %1265 = vmatprep.subr.mxu0 0.0
    %1266 = vmatpush1.msra.mxu0 0.0
    %1267 = vmatprep.mubr.f32.mxu0 0.0
    %1268 = vmatmul.mubr.f32.gmra.mrb[0].mxu0 %v1201
    %v1269 = vpop.f32.mrb[0].mxu0
    %v1270 = vadd.f32 0.0, %v1269
    %v1271 = vpop.f32.mrb[0].mxu0
    %1272 = vdwg.mxu0
    %s1273 = scalar_lea.vmem %s9, 16
    %v1274 = vld [vmem:[%s1273] sm:$0xff]
    %v1275 = vld [vmem:[%s1273 + $0x8] sm:$0xff]
    %v1277 = vsel %vm345, %v1197, 0
    %v1280 = vsel %vm345, %v1270, 0
    %1282 = vmatprep.subr.mxu0 0.0
    %1283 = vmatpush1.msra.mxu0 %v1274
    %1284 = vmatprep.subr.mxu0 0.0
    %1285 = vmatpush1.msra.mxu0 %v1275
    %1286 = vmatprep.subr.mxu0 0.0
    %1287 = vmatpush1.msra.mxu0 0.0
    %1288 = vmatprep.subr.mxu0 0.0
    %1289 = vmatpush1.msra.mxu0 0.0
    %1290 = vmatprep.subr.mxu0 0.0
    %1291 = vmatpush1.msra.mxu0 0.0
    %1292 = vmatprep.subr.mxu0 0.0
    %1293 = vmatpush1.msra.mxu0 0.0
    %1294 = vmatprep.subr.mxu0 0.0
    %1295 = vmatpush1.msra.mxu0 0.0
    %1296 = vmatprep.subr.mxu0 0.0
    %1297 = vmatpush1.msra.mxu0 0.0
    %1298 = vmatprep.subr.mxu0 0.0
    %1299 = vmatpush1.msra.mxu0 0.0
    %1300 = vmatprep.subr.mxu0 0.0
    %1301 = vmatpush1.msra.mxu0 0.0
    %1302 = vmatprep.subr.mxu0 0.0
    %1303 = vmatpush1.msra.mxu0 0.0
    %1304 = vmatprep.subr.mxu0 0.0
    %1305 = vmatpush1.msra.mxu0 0.0
    %1306 = vmatprep.subr.mxu0 0.0
    %1307 = vmatpush1.msra.mxu0 0.0
    %1308 = vmatprep.subr.mxu0 0.0
    %1309 = vmatpush1.msra.mxu0 0.0
    %1310 = vmatprep.subr.mxu0 0.0
    %1311 = vmatpush1.msra.mxu0 0.0
    %1312 = vmatprep.subr.mxu0 0.0
    %1313 = vmatpush1.msra.mxu0 0.0
    %1314 = vmatprep.subr.mxu0 0.0
    %1315 = vmatpush1.msra.mxu0 0.0
    %1316 = vmatprep.subr.mxu0 0.0
    %1317 = vmatpush1.msra.mxu0 0.0
    %1318 = vmatprep.subr.mxu0 0.0
    %1319 = vmatpush1.msra.mxu0 0.0
    %1320 = vmatprep.subr.mxu0 0.0
    %1321 = vmatpush1.msra.mxu0 0.0
    %1322 = vmatprep.subr.mxu0 0.0
    %1323 = vmatpush1.msra.mxu0 0.0
    %1324 = vmatprep.subr.mxu0 0.0
    %1325 = vmatpush1.msra.mxu0 0.0
    %1326 = vmatprep.subr.mxu0 0.0
    %1327 = vmatpush1.msra.mxu0 0.0
    %1328 = vmatprep.subr.mxu0 0.0
    %1329 = vmatpush1.msra.mxu0 0.0
    %1330 = vmatprep.subr.mxu0 0.0
    %1331 = vmatpush1.msra.mxu0 0.0
    %1332 = vmatprep.subr.mxu0 0.0
    %1333 = vmatpush1.msra.mxu0 0.0
    %1334 = vmatprep.subr.mxu0 0.0
    %1335 = vmatpush1.msra.mxu0 0.0
    %1336 = vmatprep.subr.mxu0 0.0
    %1337 = vmatpush1.msra.mxu0 0.0
    %1338 = vmatprep.subr.mxu0 0.0
    %1339 = vmatpush1.msra.mxu0 0.0
    %1340 = vmatprep.subr.mxu0 0.0
    %1341 = vmatpush1.msra.mxu0 0.0
    %1342 = vmatprep.subr.mxu0 0.0
    %1343 = vmatpush1.msra.mxu0 0.0
    %1344 = vmatprep.subr.mxu0 0.0
    %1345 = vmatpush1.msra.mxu0 0.0
    %1346 = vmatprep.mubr.f32.mxu0 0.0
    %1347 = vmatmul.mubr.f32.gmra.mrb[0].mxu0 %v1277
    %v1348 = vpop.f32.mrb[0].mxu0
    %v1349 = vadd.f32 0.0, %v1348
    %v1350 = vpop.f32.mrb[0].mxu0
    %1351 = vmatprep.mubr.f32.mxu0 0.0
    %1352 = vmatmul.mubr.f32.gmra.mrb[0].mxu0 %v1280
    %v1353 = vpop.f32.mrb[0].mxu0
    %v1354 = vadd.f32 0.0, %v1353
    %v1355 = vpop.f32.mrb[0].mxu0
    %1356 = vdwg.mxu0
    %v1358 = vsel %vm345, %v607, 0
    %v1361 = vsel %vm345, %v680, 0
    %1363 = vmatprep.subr.mxu0 0.0
    %1364 = vmatpush1.msra.mxu0 %v683
    %1365 = vmatprep.subr.mxu0 0.0
    %1366 = vmatpush1.msra.mxu0 %v684
    %1367 = vmatprep.subr.mxu0 0.0
    %1368 = vmatpush1.msra.mxu0 0.0
    %1369 = vmatprep.subr.mxu0 0.0
    %1370 = vmatpush1.msra.mxu0 0.0
    %1371 = vmatprep.subr.mxu0 0.0
    %1372 = vmatpush1.msra.mxu0 0.0
    %1373 = vmatprep.subr.mxu0 0.0
    %1374 = vmatpush1.msra.mxu0 0.0
    %1375 = vmatprep.subr.mxu0 0.0
    %1376 = vmatpush1.msra.mxu0 0.0
    %1377 = vmatprep.subr.mxu0 0.0
    %1378 = vmatpush1.msra.mxu0 0.0
    %1379 = vmatprep.subr.mxu0 0.0
    %1380 = vmatpush1.msra.mxu0 0.0
    %1381 = vmatprep.subr.mxu0 0.0
    %1382 = vmatpush1.msra.mxu0 0.0
    %1383 = vmatprep.subr.mxu0 0.0
    %1384 = vmatpush1.msra.mxu0 0.0
    %1385 = vmatprep.subr.mxu0 0.0
    %1386 = vmatpush1.msra.mxu0 0.0
    %1387 = vmatprep.subr.mxu0 0.0
    %1388 = vmatpush1.msra.mxu0 0.0
    %1389 = vmatprep.subr.mxu0 0.0
    %1390 = vmatpush1.msra.mxu0 0.0
    %1391 = vmatprep.subr.mxu0 0.0
    %1392 = vmatpush1.msra.mxu0 0.0
    %1393 = vmatprep.subr.mxu0 0.0
    %1394 = vmatpush1.msra.mxu0 0.0
    %1395 = vmatprep.subr.mxu0 0.0
    %1396 = vmatpush1.msra.mxu0 0.0
    %1397 = vmatprep.subr.mxu0 0.0
    %1398 = vmatpush1.msra.mxu0 0.0
    %1399 = vmatprep.subr.mxu0 0.0
    %1400 = vmatpush1.msra.mxu0 0.0
    %1401 = vmatprep.subr.mxu0 0.0
    %1402 = vmatpush1.msra.mxu0 0.0
    %1403 = vmatprep.subr.mxu0 0.0
    %1404 = vmatpush1.msra.mxu0 0.0
    %1405 = vmatprep.subr.mxu0 0.0
    %1406 = vmatpush1.msra.mxu0 0.0
    %1407 = vmatprep.subr.mxu0 0.0
    %1408 = vmatpush1.msra.mxu0 0.0
    %1409 = vmatprep.subr.mxu0 0.0
    %1410 = vmatpush1.msra.mxu0 0.0
    %1411 = vmatprep.subr.mxu0 0.0
    %1412 = vmatpush1.msra.mxu0 0.0
    %1413 = vmatprep.subr.mxu0 0.0
    %1414 = vmatpush1.msra.mxu0 0.0
    %1415 = vmatprep.subr.mxu0 0.0
    %1416 = vmatpush1.msra.mxu0 0.0
    %1417 = vmatprep.subr.mxu0 0.0
    %1418 = vmatpush1.msra.mxu0 0.0
    %1419 = vmatprep.subr.mxu0 0.0
    %1420 = vmatpush1.msra.mxu0 0.0
    %1421 = vmatprep.subr.mxu0 0.0
    %1422 = vmatpush1.msra.mxu0 0.0
    %1423 = vmatprep.subr.mxu0 0.0
    %1424 = vmatpush1.msra.mxu0 0.0
    %1425 = vmatprep.subr.mxu0 0.0
    %1426 = vmatpush1.msra.mxu0 0.0
    %1427 = vmatprep.mubr.f32.mxu0 0.0
    %1428 = vmatmul.mubr.f32.gmra.mrb[0].mxu0 %v1358
    %v1429 = vpop.f32.mrb[0].mxu0
    %v1430 = vadd.f32 %v1349, %v1429
    %v1431 = vpop.f32.mrb[0].mxu0
    %1432 = vmatprep.mubr.f32.mxu0 0.0
    %1433 = vmatmul.mubr.f32.gmra.mrb[0].mxu0 %v1361
    %v1434 = vpop.f32.mrb[0].mxu0
    %v1435 = vadd.f32 %v1354, %v1434
    %v1436 = vpop.f32.mrb[0].mxu0
    %1437 = vdwg.mxu0
    %v1438 = vld [vmem:[%s10] sm:$0x1]
    %v1440 = vlaneseq
    %v1441 = vshrl.u32 %v1440, 7
    %v1442 = vsub.s32 0, %v1441
    %v1443 = vrot.slane %v1438, %v1442
    %v1445 = vadd.f32 %v1430, %v1443
    %v1446 = vadd.f32 %v1435, %v1443
    %v1447 = vadd.f32 %v76, %v1445
    %v1448 = vadd.f32 %v77, %v1446
    %v1449 = vld [vmem:[%s11] sm:$0x3]
    %v1450 = vsel %vm91, %v1447, 0.0
    %1451 = vadd.xlane.f32.xlu0 %v1450
    %v1452 = vpop.xlane.xlu0 %1451
    %v1453 = vsel %vm91, %v1448, 0.0
    %1454 = vadd.xlane.f32.xlu0 %v1453
    %v1455 = vpop.xlane.xlu0 %1454
    %v1456 = vrcp.pop 32.0
    %v1457 = vmul.f32 %v1452, %v1456
    %v1458 = vmul.f32 %v1455, %v1456
    %v1459 = vsub.f32 %v1447, %v1457
    %v1460 = vsub.f32 %v1448, %v1458
    %v1461 = vmul.f32 %v1459, %v1459
    %v1462 = vmul.f32 %v1460, %v1460
    %v1463 = vsel %vm91, %v1461, 0.0
    %1464 = vadd.xlane.f32.xlu0 %v1463
    %v1465 = vpop.xlane.xlu0 %1464
    %v1466 = vsel %vm91, %v1462, 0.0
    %1467 = vadd.xlane.f32.xlu0 %v1466
    %v1468 = vpop.xlane.xlu0 %1467
    %v1469 = vmul.f32 %v1465, %v1456
    %v1470 = vmul.f32 %v1468, %v1456
    %v1471 = vadd.f32 %v1469, 1e-05
    %v1472 = vadd.f32 %v1470, 1e-05
    %v1473 = vrsqrt.pop %v1471
    %v1474 = vrsqrt.pop %v1472
    %v1475 = vmul.f32 %v1459, %v1473
    %v1476 = vmul.f32 %v1460, %v1474
    %v1477 = vlaneseq
    %v1478 = vshrl.u32 %v1477, 7
    %v1479 = vsub.s32 0, %v1478
    %v1480 = vrot.slane %v1449, %v1479
    %v1481 = vmul.f32 %v1475, %v1480
    %v1482 = vmul.f32 %v1476, %v1480
    %v1483 = vlaneseq
    %v1484 = vshrl.u32 %v1483, 7
    %v1485 = vsub.s32 1, %v1484
    %v1486 = vrot.slane %v1449, %v1485
    %v1487 = vadd.f32 %v1481, %v1486
    %v1488 = vadd.f32 %v1482, %v1486
    %v1489 = vld [vmem:[%s12] sm:$0xff]
    %v1490 = vld [vmem:[%s12 + $0x8] sm:$0xff]
    %v1491 = vld [vmem:[%s12 + $0x10] sm:$0xff]
    %v1492 = vld [vmem:[%s12 + $0x18] sm:$0xff]
    %v1493 = vld [vmem:[%s13] sm:$0x1]
    %v1495 = vlaneseq
    %v1496 = vshrl.u32 %v1495, 7
    %v1497 = vsub.s32 0, %v1496
    %v1498 = vrot.slane %v1493, %v1497
    %v1501 = vsel %vm91, %v1487, 0
    %v1504 = vsel %vm91, %v1488, 0
    %1506 = vmatprep.subr.mxu0 0.0
    %1507 = vmatpush1.msra.mxu0 %v1489
    %1508 = vmatprep.subr.mxu0 0.0
    %1509 = vmatpush1.msra.mxu0 %v1490
    %1510 = vmatprep.subr.mxu0 0.0
    %1511 = vmatpush1.msra.mxu0 %v1491
    %1512 = vmatprep.subr.mxu0 0.0
    %1513 = vmatpush1.msra.mxu0 %v1492
    %1514 = vmatprep.subr.mxu0 0.0
    %1515 = vmatpush1.msra.mxu0 0.0
    %1516 = vmatprep.subr.mxu0 0.0
    %1517 = vmatpush1.msra.mxu0 0.0
    %1518 = vmatprep.subr.mxu0 0.0
    %1519 = vmatpush1.msra.mxu0 0.0
    %1520 = vmatprep.subr.mxu0 0.0
    %1521 = vmatpush1.msra.mxu0 0.0
    %1522 = vmatprep.subr.mxu0 0.0
    %1523 = vmatpush1.msra.mxu0 0.0
    %1524 = vmatprep.subr.mxu0 0.0
    %1525 = vmatpush1.msra.mxu0 0.0
    %1526 = vmatprep.subr.mxu0 0.0
    %1527 = vmatpush1.msra.mxu0 0.0
    %1528 = vmatprep.subr.mxu0 0.0
    %1529 = vmatpush1.msra.mxu0 0.0
    %1530 = vmatprep.subr.mxu0 0.0
    %1531 = vmatpush1.msra.mxu0 0.0
    %1532 = vmatprep.subr.mxu0 0.0
    %1533 = vmatpush1.msra.mxu0 0.0
    %1534 = vmatprep.subr.mxu0 0.0
    %1535 = vmatpush1.msra.mxu0 0.0
    %1536 = vmatprep.subr.mxu0 0.0
    %1537 = vmatpush1.msra.mxu0 0.0
    %1538 = vmatprep.subr.mxu0 0.0
    %1539 = vmatpush1.msra.mxu0 0.0
    %1540 = vmatprep.subr.mxu0 0.0
    %1541 = vmatpush1.msra.mxu0 0.0
    %1542 = vmatprep.subr.mxu0 0.0
    %1543 = vmatpush1.msra.mxu0 0.0
    %1544 = vmatprep.subr.mxu0 0.0
    %1545 = vmatpush1.msra.mxu0 0.0
    %1546 = vmatprep.subr.mxu0 0.0
    %1547 = vmatpush1.msra.mxu0 0.0
    %1548 = vmatprep.subr.mxu0 0.0
    %1549 = vmatpush1.msra.mxu0 0.0
    %1550 = vmatprep.subr.mxu0 0.0
    %1551 = vmatpush1.msra.mxu0 0.0
    %1552 = vmatprep.subr.mxu0 0.0
    %1553 = vmatpush1.msra.mxu0 0.0
    %1554 = vmatprep.subr.mxu0 0.0
    %1555 = vmatpush1.msra.mxu0 0.0
    %1556 = vmatprep.subr.mxu0 0.0
    %1557 = vmatpush1.msra.mxu0 0.0
    %1558 = vmatprep.subr.mxu0 0.0
    %1559 = vmatpush1.msra.mxu0 0.0
    %1560 = vmatprep.subr.mxu0 0.0
    %1561 = vmatpush1.msra.mxu0 0.0
    %1562 = vmatprep.subr.mxu0 0.0
    %1563 = vmatpush1.msra.mxu0 0.0
    %1564 = vmatprep.subr.mxu0 0.0
    %1565 = vmatpush1.msra.mxu0 0.0
    %1566 = vmatprep.subr.mxu0 0.0
    %1567 = vmatpush1.msra.mxu0 0.0
    %1568 = vmatprep.subr.mxu0 0.0
    %1569 = vmatpush1.msra.mxu0 0.0
    %1570 = vmatprep.mubr.f32.mxu0 0.0
    %1571 = vmatmul.mubr.f32.gmra.mrb[0].mxu0 %v1501
    %v1572 = vpop.f32.mrb[0].mxu0
    %v1573 = vadd.f32 %v1498, %v1572
    %v1574 = vpop.f32.mrb[0].mxu0
    %1575 = vmatprep.mubr.f32.mxu0 0.0
    %1576 = vmatmul.mubr.f32.gmra.mrb[0].mxu0 %v1504
    %v1577 = vpop.f32.mrb[0].mxu0
    %v1578 = vadd.f32 %v1498, %v1577
    %v1579 = vpop.f32.mrb[0].mxu0
    %1580 = vdwg.mxu0
    %v1581 = vmul.f32 %v1573, 0.5
    %v1582 = vmul.f32 %v1578, 0.5
    %v1583 = vmul.f32 %v1573, 0.70710677
    %v1584 = vmul.f32 %v1578, 0.70710677
    %v1585 = vand.u32 2147483647, %v1583
    %v1586 = vand.u32 2147483647, %v1584
    %v1587 = vmul.f32 %v1585, 0.3275911
    %v1588 = vmul.f32 %v1586, 0.3275911
    %v1589 = vadd.f32 %v1587, 1.0
    %v1590 = vadd.f32 %v1588, 1.0
    %v1591 = vrcp.pop %v1589
    %v1592 = vmul.f32 1.0, %v1591
    %v1593 = vrcp.pop %v1590
    %v1594 = vmul.f32 1.0, %v1593
    %v1595 = vmul.f32 %v1592, 1.0614054
    %v1596 = vmul.f32 %v1594, 1.0614054
    %v1597 = vsub.f32 %v1595, 1.4531521
    %v1598 = vsub.f32 %v1596, 1.4531521
    %v1599 = vmul.f32 %v1597, %v1592
    %v1600 = vmul.f32 %v1598, %v1594
    %v1601 = vadd.f32 %v1599, 1.4214138
    %v1602 = vadd.f32 %v1600, 1.4214138
    %v1603 = vmul.f32 %v1601, %v1592
    %v1604 = vmul.f32 %v1602, %v1594
    %v1605 = vsub.f32 %v1603, 0.28449672
    %v1606 = vsub.f32 %v1604, 0.28449672
    %v1607 = vmul.f32 %v1605, %v1592
    %v1608 = vmul.f32 %v1606, %v1594
    %v1609 = vadd.f32 %v1607, 0.2548296
    %v1610 = vadd.f32 %v1608, 0.2548296
    %v1611 = vmul.f32 %v1609, %v1592
    %v1612 = vmul.f32 %v1610, %v1594
    %v1613 = vsub.f32 0.0, %v1583
    %v1614 = vsub.f32 0.0, %v1584
    %v1615 = vmul.f32 %v1613, %v1583
    %v1616 = vmul.f32 %v1614, %v1584
    %v1617 = vmul.f32 %v1615, 1.442695
    %v1618 = vpow.pop %v1617
    %v1619 = vmul.f32 %v1616, 1.442695
    %v1620 = vpow.pop %v1619
    %v1621 = vmul.f32 %v1611, %v1618
    %v1622 = vmul.f32 %v1612, %v1620
    %v1623 = vsub.f32 1.0, %v1621
    %v1624 = vsub.f32 1.0, %v1622
    %vm1625 = vcmp.ge.f32.partialorder %v1583, 0.0
    %vm1626 = vcmp.ge.f32.partialorder %v1584, 0.0
    %v1627 = vsub.f32 0.0, %v1623
    %v1628 = vsub.f32 0.0, %v1624
    %v1629 = vsel %vm1625, %v1623, %v1627
    %v1630 = vsel %vm1626, %v1624, %v1628
    %v1631 = vadd.f32 %v1629, 1.0
    %v1632 = vadd.f32 %v1630, 1.0
    %v1633 = vmul.f32 %v1581, %v1631
    %v1634 = vmul.f32 %v1582, %v1632
    %v1635 = vld [vmem:[%s14] sm:$0xff]
    %v1636 = vld [vmem:[%s14 + $0x8] sm:$0xff]
    %v1637 = vld [vmem:[%s14 + $0x10] sm:$0xff]
    %v1638 = vld [vmem:[%s14 + $0x18] sm:$0xff]
    %v1639 = vld [vmem:[%s14 + $0x20] sm:$0xff]
    %v1640 = vld [vmem:[%s14 + $0x28] sm:$0xff]
    %v1641 = vld [vmem:[%s14 + $0x30] sm:$0xff]
    %v1642 = vld [vmem:[%s14 + $0x38] sm:$0xff]
    %v1643 = vld [vmem:[%s15] sm:$0x1]
    %v1645 = vlaneseq
    %v1646 = vshrl.u32 %v1645, 7
    %v1647 = vsub.s32 0, %v1646
    %v1648 = vrot.slane %v1643, %v1647
    %vm1650 = vcmask 523264
    %v1652 = vsel %vm1650, %v1633, 0
    %v1655 = vsel %vm1650, %v1634, 0
    %1657 = vmatprep.subr.mxu0 0.0
    %1658 = vmatpush1.msra.mxu0 %v1635
    %1659 = vmatprep.subr.mxu0 0.0
    %1660 = vmatpush1.msra.mxu0 %v1636
    %1661 = vmatprep.subr.mxu0 0.0
    %1662 = vmatpush1.msra.mxu0 %v1637
    %1663 = vmatprep.subr.mxu0 0.0
    %1664 = vmatpush1.msra.mxu0 %v1638
    %1665 = vmatprep.subr.mxu0 0.0
    %1666 = vmatpush1.msra.mxu0 %v1639
    %1667 = vmatprep.subr.mxu0 0.0
    %1668 = vmatpush1.msra.mxu0 %v1640
    %1669 = vmatprep.subr.mxu0 0.0
    %1670 = vmatpush1.msra.mxu0 %v1641
    %1671 = vmatprep.subr.mxu0 0.0
    %1672 = vmatpush1.msra.mxu0 %v1642
    %1673 = vmatprep.subr.mxu0 0.0
    %1674 = vmatpush1.msra.mxu0 0.0
    %1675 = vmatprep.subr.mxu0 0.0
    %1676 = vmatpush1.msra.mxu0 0.0
    %1677 = vmatprep.subr.mxu0 0.0
    %1678 = vmatpush1.msra.mxu0 0.0
    %1679 = vmatprep.subr.mxu0 0.0
    %1680 = vmatpush1.msra.mxu0 0.0
    %1681 = vmatprep.subr.mxu0 0.0
    %1682 = vmatpush1.msra.mxu0 0.0
    %1683 = vmatprep.subr.mxu0 0.0
    %1684 = vmatpush1.msra.mxu0 0.0
    %1685 = vmatprep.subr.mxu0 0.0
    %1686 = vmatpush1.msra.mxu0 0.0
    %1687 = vmatprep.subr.mxu0 0.0
    %1688 = vmatpush1.msra.mxu0 0.0
    %1689 = vmatprep.subr.mxu0 0.0
    %1690 = vmatpush1.msra.mxu0 0.0
    %1691 = vmatprep.subr.mxu0 0.0
    %1692 = vmatpush1.msra.mxu0 0.0
    %1693 = vmatprep.subr.mxu0 0.0
    %1694 = vmatpush1.msra.mxu0 0.0
    %1695 = vmatprep.subr.mxu0 0.0
    %1696 = vmatpush1.msra.mxu0 0.0
    %1697 = vmatprep.subr.mxu0 0.0
    %1698 = vmatpush1.msra.mxu0 0.0
    %1699 = vmatprep.subr.mxu0 0.0
    %1700 = vmatpush1.msra.mxu0 0.0
    %1701 = vmatprep.subr.mxu0 0.0
    %1702 = vmatpush1.msra.mxu0 0.0
    %1703 = vmatprep.subr.mxu0 0.0
    %1704 = vmatpush1.msra.mxu0 0.0
    %1705 = vmatprep.subr.mxu0 0.0
    %1706 = vmatpush1.msra.mxu0 0.0
    %1707 = vmatprep.subr.mxu0 0.0
    %1708 = vmatpush1.msra.mxu0 0.0
    %1709 = vmatprep.subr.mxu0 0.0
    %1710 = vmatpush1.msra.mxu0 0.0
    %1711 = vmatprep.subr.mxu0 0.0
    %1712 = vmatpush1.msra.mxu0 0.0
    %1713 = vmatprep.subr.mxu0 0.0
    %1714 = vmatpush1.msra.mxu0 0.0
    %1715 = vmatprep.subr.mxu0 0.0
    %1716 = vmatpush1.msra.mxu0 0.0
    %1717 = vmatprep.subr.mxu0 0.0
    %1718 = vmatpush1.msra.mxu0 0.0
    %1719 = vmatprep.subr.mxu0 0.0
    %1720 = vmatpush1.msra.mxu0 0.0
    %1721 = vmatprep.mubr.f32.mxu0 0.0
    %1722 = vmatmul.mubr.f32.gmra.mrb[0].mxu0 %v1652
    %v1723 = vpop.f32.mrb[0].mxu0
    %v1724 = vadd.f32 %v1648, %v1723
    %v1725 = vpop.f32.mrb[0].mxu0
    %1726 = vmatprep.mubr.f32.mxu0 0.0
    %1727 = vmatmul.mubr.f32.gmra.mrb[0].mxu0 %v1655
    %v1728 = vpop.f32.mrb[0].mxu0
    %v1729 = vadd.f32 %v1648, %v1728
    %v1730 = vpop.f32.mrb[0].mxu0
    %1731 = vdwg.mxu0
    %v1732 = vadd.f32 %v1487, %v1724
    %v1733 = vadd.f32 %v1488, %v1729
    %v1734 = vld [vmem:[%s16] sm:$0x3]
    %v1735 = vsel %vm91, %v1732, 0.0
    %1736 = vadd.xlane.f32.xlu0 %v1735
    %v1737 = vpop.xlane.xlu0 %1736
    %v1738 = vsel %vm91, %v1733, 0.0
    %1739 = vadd.xlane.f32.xlu0 %v1738
    %v1740 = vpop.xlane.xlu0 %1739
    %v1741 = vmul.f32 %v1737, %v1456
    %v1742 = vmul.f32 %v1740, %v1456
    %v1743 = vsub.f32 %v1732, %v1741
    %v1744 = vsub.f32 %v1733, %v1742
    %v1745 = vmul.f32 %v1743, %v1743
    %v1746 = vmul.f32 %v1744, %v1744
    %v1747 = vsel %vm91, %v1745, 0.0
    %1748 = vadd.xlane.f32.xlu0 %v1747
    %v1749 = vpop.xlane.xlu0 %1748
    %v1750 = vsel %vm91, %v1746, 0.0
    %1751 = vadd.xlane.f32.xlu0 %v1750
    %v1752 = vpop.xlane.xlu0 %1751
    %v1753 = vmul.f32 %v1749, %v1456
    %v1754 = vmul.f32 %v1752, %v1456
    %v1755 = vadd.f32 %v1753, 1e-05
    %v1756 = vadd.f32 %v1754, 1e-05
    %v1757 = vrsqrt.pop %v1755
    %v1758 = vrsqrt.pop %v1756
    %v1759 = vmul.f32 %v1743, %v1757
    %v1760 = vmul.f32 %v1744, %v1758
    %v1761 = vlaneseq
    %v1762 = vshrl.u32 %v1761, 7
    %v1763 = vsub.s32 0, %v1762
    %v1764 = vrot.slane %v1734, %v1763
    %v1765 = vmul.f32 %v1759, %v1764
    %v1766 = vmul.f32 %v1760, %v1764
    %v1767 = vlaneseq
    %v1768 = vshrl.u32 %v1767, 7
    %v1769 = vsub.s32 1, %v1768
    %v1770 = vrot.slane %v1734, %v1769
    %v1771 = vadd.f32 %v1765, %v1770
    %v1772 = vadd.f32 %v1766, %v1770
    %s1773 = scalar_lea.vmem %s3, 64
    %v1774 = vld [vmem:[%s1773] sm:$0xff]
    %v1775 = vld [vmem:[%s1773 + $0x8] sm:$0xff]
    %v1776 = vld [vmem:[%s1773 + $0x10] sm:$0xff]
    %v1777 = vld [vmem:[%s1773 + $0x18] sm:$0xff]
    %s1778 = scalar_lea.vmem %s6, 2
    %v1779 = vld [vmem:[%s1778] sm:$0x1]
    %v1781 = vlaneseq
    %v1782 = vshrl.u32 %v1781, 7
    %v1783 = vsub.s32 0, %v1782
    %v1784 = vrot.slane %v1779, %v1783
    %v1787 = vsel %vm91, %v1771, 0
    %v1790 = vsel %vm91, %v1772, 0
    %1792 = vmatprep.subr.mxu0 0.0
    %1793 = vmatpush1.msra.mxu0 %v1774
    %1794 = vmatprep.subr.mxu0 0.0
    %1795 = vmatpush1.msra.mxu0 %v1775
    %1796 = vmatprep.subr.mxu0 0.0
    %1797 = vmatpush1.msra.mxu0 %v1776
    %1798 = vmatprep.subr.mxu0 0.0
    %1799 = vmatpush1.msra.mxu0 %v1777
    %1800 = vmatprep.subr.mxu0 0.0
    %1801 = vmatpush1.msra.mxu0 0.0
    %1802 = vmatprep.subr.mxu0 0.0
    %1803 = vmatpush1.msra.mxu0 0.0
    %1804 = vmatprep.subr.mxu0 0.0
    %1805 = vmatpush1.msra.mxu0 0.0
    %1806 = vmatprep.subr.mxu0 0.0
    %1807 = vmatpush1.msra.mxu0 0.0
    %1808 = vmatprep.subr.mxu0 0.0
    %1809 = vmatpush1.msra.mxu0 0.0
    %1810 = vmatprep.subr.mxu0 0.0
    %1811 = vmatpush1.msra.mxu0 0.0
    %1812 = vmatprep.subr.mxu0 0.0
    %1813 = vmatpush1.msra.mxu0 0.0
    %1814 = vmatprep.subr.mxu0 0.0
    %1815 = vmatpush1.msra.mxu0 0.0
    %1816 = vmatprep.subr.mxu0 0.0
    %1817 = vmatpush1.msra.mxu0 0.0
    %1818 = vmatprep.subr.mxu0 0.0
    %1819 = vmatpush1.msra.mxu0 0.0
    %1820 = vmatprep.subr.mxu0 0.0
    %1821 = vmatpush1.msra.mxu0 0.0
    %1822 = vmatprep.subr.mxu0 0.0
    %1823 = vmatpush1.msra.mxu0 0.0
    %1824 = vmatprep.subr.mxu0 0.0
    %1825 = vmatpush1.msra.mxu0 0.0
    %1826 = vmatprep.subr.mxu0 0.0
    %1827 = vmatpush1.msra.mxu0 0.0
    %1828 = vmatprep.subr.mxu0 0.0
    %1829 = vmatpush1.msra.mxu0 0.0
    %1830 = vmatprep.subr.mxu0 0.0
    %1831 = vmatpush1.msra.mxu0 0.0
    %1832 = vmatprep.subr.mxu0 0.0
    %1833 = vmatpush1.msra.mxu0 0.0
    %1834 = vmatprep.subr.mxu0 0.0
    %1835 = vmatpush1.msra.mxu0 0.0
    %1836 = vmatprep.subr.mxu0 0.0
    %1837 = vmatpush1.msra.mxu0 0.0
    %1838 = vmatprep.subr.mxu0 0.0
    %1839 = vmatpush1.msra.mxu0 0.0
    %1840 = vmatprep.subr.mxu0 0.0
    %1841 = vmatpush1.msra.mxu0 0.0
    %1842 = vmatprep.subr.mxu0 0.0
    %1843 = vmatpush1.msra.mxu0 0.0
    %1844 = vmatprep.subr.mxu0 0.0
    %1845 = vmatpush1.msra.mxu0 0.0
    %1846 = vmatprep.subr.mxu0 0.0
    %1847 = vmatpush1.msra.mxu0 0.0
    %1848 = vmatprep.subr.mxu0 0.0
    %1849 = vmatpush1.msra.mxu0 0.0
    %1850 = vmatprep.subr.mxu0 0.0
    %1851 = vmatpush1.msra.mxu0 0.0
    %1852 = vmatprep.subr.mxu0 0.0
    %1853 = vmatpush1.msra.mxu0 0.0
    %1854 = vmatprep.subr.mxu0 0.0
    %1855 = vmatpush1.msra.mxu0 0.0
    %1856 = vmatprep.mubr.f32.mxu0 0.0
    %1857 = vmatmul.mubr.f32.gmra.mrb[0].mxu0 %v1787
    %v1858 = vpop.f32.mrb[0].mxu0
    %v1859 = vadd.f32 %v1784, %v1858
    %v1860 = vpop.f32.mrb[0].mxu0
    %1861 = vmatprep.mubr.f32.mxu0 0.0
    %1862 = vmatmul.mubr.f32.gmra.mrb[0].mxu0 %v1790
    %v1863 = vpop.f32.mrb[0].mxu0
    %v1864 = vadd.f32 %v1784, %v1863
    %v1865 = vpop.f32.mrb[0].mxu0
    %1866 = vdwg.mxu0
    %s1867 = scalar_lea.vmem %s4, 64
    %v1868 = vld [vmem:[%s1867] sm:$0xff]
    %v1869 = vld [vmem:[%s1867 + $0x8] sm:$0xff]
    %v1870 = vld [vmem:[%s1867 + $0x10] sm:$0xff]
    %v1871 = vld [vmem:[%s1867 + $0x18] sm:$0xff]
    %s1872 = scalar_lea.vmem %s7, 2
    %v1873 = vld [vmem:[%s1872] sm:$0x1]
    %v1875 = vlaneseq
    %v1876 = vshrl.u32 %v1875, 7
    %v1877 = vsub.s32 0, %v1876
    %v1878 = vrot.slane %v1873, %v1877
    %1880 = vmatprep.subr.mxu0 0.0
    %1881 = vmatpush1.msra.mxu0 %v1868
    %1882 = vmatprep.subr.mxu0 0.0
    %1883 = vmatpush1.msra.mxu0 %v1869
    %1884 = vmatprep.subr.mxu0 0.0
    %1885 = vmatpush1.msra.mxu0 %v1870
    %1886 = vmatprep.subr.mxu0 0.0
    %1887 = vmatpush1.msra.mxu0 %v1871
    %1888 = vmatprep.subr.mxu0 0.0
    %1889 = vmatpush1.msra.mxu0 0.0
    %1890 = vmatprep.subr.mxu0 0.0
    %1891 = vmatpush1.msra.mxu0 0.0
    %1892 = vmatprep.subr.mxu0 0.0
    %1893 = vmatpush1.msra.mxu0 0.0
    %1894 = vmatprep.subr.mxu0 0.0
    %1895 = vmatpush1.msra.mxu0 0.0
    %1896 = vmatprep.subr.mxu0 0.0
    %1897 = vmatpush1.msra.mxu0 0.0
    %1898 = vmatprep.subr.mxu0 0.0
    %1899 = vmatpush1.msra.mxu0 0.0
    %1900 = vmatprep.subr.mxu0 0.0
    %1901 = vmatpush1.msra.mxu0 0.0
    %1902 = vmatprep.subr.mxu0 0.0
    %1903 = vmatpush1.msra.mxu0 0.0
    %1904 = vmatprep.subr.mxu0 0.0
    %1905 = vmatpush1.msra.mxu0 0.0
    %1906 = vmatprep.subr.mxu0 0.0
    %1907 = vmatpush1.msra.mxu0 0.0
    %1908 = vmatprep.subr.mxu0 0.0
    %1909 = vmatpush1.msra.mxu0 0.0
    %1910 = vmatprep.subr.mxu0 0.0
    %1911 = vmatpush1.msra.mxu0 0.0
    %1912 = vmatprep.subr.mxu0 0.0
    %1913 = vmatpush1.msra.mxu0 0.0
    %1914 = vmatprep.subr.mxu0 0.0
    %1915 = vmatpush1.msra.mxu0 0.0
    %1916 = vmatprep.subr.mxu0 0.0
    %1917 = vmatpush1.msra.mxu0 0.0
    %1918 = vmatprep.subr.mxu0 0.0
    %1919 = vmatpush1.msra.mxu0 0.0
    %1920 = vmatprep.subr.mxu0 0.0
    %1921 = vmatpush1.msra.mxu0 0.0
    %1922 = vmatprep.subr.mxu0 0.0
    %1923 = vmatpush1.msra.mxu0 0.0
    %1924 = vmatprep.subr.mxu0 0.0
    %1925 = vmatpush1.msra.mxu0 0.0
    %1926 = vmatprep.subr.mxu0 0.0
    %1927 = vmatpush1.msra.mxu0 0.0
    %1928 = vmatprep.subr.mxu0 0.0
    %1929 = vmatpush1.msra.mxu0 0.0
    %1930 = vmatprep.subr.mxu0 0.0
    %1931 = vmatpush1.msra.mxu0 0.0
    %1932 = vmatprep.subr.mxu0 0.0
    %1933 = vmatpush1.msra.mxu0 0.0
    %1934 = vmatprep.subr.mxu0 0.0
    %1935 = vmatpush1.msra.mxu0 0.0
    %1936 = vmatprep.subr.mxu0 0.0
    %1937 = vmatpush1.msra.mxu0 0.0
    %1938 = vmatprep.subr.mxu0 0.0
    %1939 = vmatpush1.msra.mxu0 0.0
    %1940 = vmatprep.subr.mxu0 0.0
    %1941 = vmatpush1.msra.mxu0 0.0
    %1942 = vmatprep.subr.mxu0 0.0
    %1943 = vmatpush1.msra.mxu0 0.0
    %1944 = vmatprep.mubr.f32.mxu0 0.0
    %1945 = vmatmul.mubr.f32.gmra.mrb[0].mxu0 %v1787
    %v1946 = vpop.f32.mrb[0].mxu0
    %v1947 = vadd.f32 %v1878, %v1946
    %v1948 = vpop.f32.mrb[0].mxu0
    %1949 = vmatprep.mubr.f32.mxu0 0.0
    %1950 = vmatmul.mubr.f32.gmra.mrb[0].mxu0 %v1790
    %v1951 = vpop.f32.mrb[0].mxu0
    %v1952 = vadd.f32 %v1878, %v1951
    %v1953 = vpop.f32.mrb[0].mxu0
    %1954 = vdwg.mxu0
    %s1955 = scalar_lea.vmem %s5, 64
    %v1956 = vld [vmem:[%s1955] sm:$0xff]
    %v1957 = vld [vmem:[%s1955 + $0x8] sm:$0xff]
    %v1958 = vld [vmem:[%s1955 + $0x10] sm:$0xff]
    %v1959 = vld [vmem:[%s1955 + $0x18] sm:$0xff]
    %s1960 = scalar_lea.vmem %s8, 2
    %v1961 = vld [vmem:[%s1960] sm:$0x1]
    %v1963 = vlaneseq
    %v1964 = vshrl.u32 %v1963, 7
    %v1965 = vsub.s32 0, %v1964
    %v1966 = vrot.slane %v1961, %v1965
    %1968 = vmatprep.subr.mxu0 0.0
    %1969 = vmatpush1.msra.mxu0 %v1956
    %1970 = vmatprep.subr.mxu0 0.0
    %1971 = vmatpush1.msra.mxu0 %v1957
    %1972 = vmatprep.subr.mxu0 0.0
    %1973 = vmatpush1.msra.mxu0 %v1958
    %1974 = vmatprep.subr.mxu0 0.0
    %1975 = vmatpush1.msra.mxu0 %v1959
    %1976 = vmatprep.subr.mxu0 0.0
    %1977 = vmatpush1.msra.mxu0 0.0
    %1978 = vmatprep.subr.mxu0 0.0
    %1979 = vmatpush1.msra.mxu0 0.0
    %1980 = vmatprep.subr.mxu0 0.0
    %1981 = vmatpush1.msra.mxu0 0.0
    %1982 = vmatprep.subr.mxu0 0.0
    %1983 = vmatpush1.msra.mxu0 0.0
    %1984 = vmatprep.subr.mxu0 0.0
    %1985 = vmatpush1.msra.mxu0 0.0
    %1986 = vmatprep.subr.mxu0 0.0
    %1987 = vmatpush1.msra.mxu0 0.0
    %1988 = vmatprep.subr.mxu0 0.0
    %1989 = vmatpush1.msra.mxu0 0.0
    %1990 = vmatprep.subr.mxu0 0.0
    %1991 = vmatpush1.msra.mxu0 0.0
    %1992 = vmatprep.subr.mxu0 0.0
    %1993 = vmatpush1.msra.mxu0 0.0
    %1994 = vmatprep.subr.mxu0 0.0
    %1995 = vmatpush1.msra.mxu0 0.0
    %1996 = vmatprep.subr.mxu0 0.0
    %1997 = vmatpush1.msra.mxu0 0.0
    %1998 = vmatprep.subr.mxu0 0.0
    %1999 = vmatpush1.msra.mxu0 0.0
    %2000 = vmatprep.subr.mxu0 0.0
    %2001 = vmatpush1.msra.mxu0 0.0
    %2002 = vmatprep.subr.mxu0 0.0
    %2003 = vmatpush1.msra.mxu0 0.0
    %2004 = vmatprep.subr.mxu0 0.0
    %2005 = vmatpush1.msra.mxu0 0.0
    %2006 = vmatprep.subr.mxu0 0.0
    %2007 = vmatpush1.msra.mxu0 0.0
    %2008 = vmatprep.subr.mxu0 0.0
    %2009 = vmatpush1.msra.mxu0 0.0
    %2010 = vmatprep.subr.mxu0 0.0
    %2011 = vmatpush1.msra.mxu0 0.0
    %2012 = vmatprep.subr.mxu0 0.0
    %2013 = vmatpush1.msra.mxu0 0.0
    %2014 = vmatprep.subr.mxu0 0.0
    %2015 = vmatpush1.msra.mxu0 0.0
    %2016 = vmatprep.subr.mxu0 0.0
    %2017 = vmatpush1.msra.mxu0 0.0
    %2018 = vmatprep.subr.mxu0 0.0
    %2019 = vmatpush1.msra.mxu0 0.0
    %2020 = vmatprep.subr.mxu0 0.0
    %2021 = vmatpush1.msra.mxu0 0.0
    %2022 = vmatprep.subr.mxu0 0.0
    %2023 = vmatpush1.msra.mxu0 0.0
    %2024 = vmatprep.subr.mxu0 0.0
    %2025 = vmatpush1.msra.mxu0 0.0
    %2026 = vmatprep.subr.mxu0 0.0
    %2027 = vmatpush1.msra.mxu0 0.0
    %2028 = vmatprep.subr.mxu0 0.0
    %2029 = vmatpush1.msra.mxu0 0.0
    %2030 = vmatprep.subr.mxu0 0.0
    %2031 = vmatpush1.msra.mxu0 0.0
    %2032 = vmatprep.mubr.f32.mxu0 0.0
    %2033 = vmatmul.mubr.f32.gmra.mrb[0].mxu0 %v1787
    %v2034 = vpop.f32.mrb[0].mxu0
    %v2035 = vadd.f32 %v1966, %v2034
    %v2036 = vpop.f32.mrb[0].mxu0
    %2037 = vmatprep.mubr.f32.mxu0 0.0
    %2038 = vmatmul.mubr.f32.gmra.mrb[0].mxu0 %v1790
    %v2039 = vpop.f32.mrb[0].mxu0
    %v2040 = vadd.f32 %v1966, %v2039
    %v2041 = vpop.f32.mrb[0].mxu0
    %2042 = vdwg.mxu0
    %v2044 = vsel %vm345, %v1859, 0
    %v2047 = vsel %vm345, %v1947, 0
    %2049 = vmatprep.subr.mxu0 0.0
    %2050 = vmatpush1.xpose.msra.mxu0 %v2047
    %2051 = vmatprep.subr.mxu0 0.0
    %2052 = vmatpush1.xpose.msra.mxu0 0.0
    %2053 = vmatprep.subr.mxu0 0.0
    %2054 = vmatpush1.xpose.msra.mxu0 0.0
    %2055 = vmatprep.subr.mxu0 0.0
    %2056 = vmatpush1.xpose.msra.mxu0 0.0
    %2057 = vmatprep.subr.mxu0 0.0
    %2058 = vmatpush1.xpose.msra.mxu0 0.0
    %2059 = vmatprep.subr.mxu0 0.0
    %2060 = vmatpush1.xpose.msra.mxu0 0.0
    %2061 = vmatprep.subr.mxu0 0.0
    %2062 = vmatpush1.xpose.msra.mxu0 0.0
    %2063 = vmatprep.subr.mxu0 0.0
    %2064 = vmatpush1.xpose.msra.mxu0 0.0
    %2065 = vmatprep.subr.mxu0 0.0
    %2066 = vmatpush1.xpose.msra.mxu0 0.0
    %2067 = vmatprep.subr.mxu0 0.0
    %2068 = vmatpush1.xpose.msra.mxu0 0.0
    %2069 = vmatprep.subr.mxu0 0.0
    %2070 = vmatpush1.xpose.msra.mxu0 0.0
    %2071 = vmatprep.subr.mxu0 0.0
    %2072 = vmatpush1.xpose.msra.mxu0 0.0
    %2073 = vmatprep.subr.mxu0 0.0
    %2074 = vmatpush1.xpose.msra.mxu0 0.0
    %2075 = vmatprep.subr.mxu0 0.0
    %2076 = vmatpush1.xpose.msra.mxu0 0.0
    %2077 = vmatprep.subr.mxu0 0.0
    %2078 = vmatpush1.xpose.msra.mxu0 0.0
    %2079 = vmatprep.subr.mxu0 0.0
    %2080 = vmatpush1.xpose.msra.mxu0 0.0
    %2081 = vmatprep.subr.mxu0 0.0
    %2082 = vmatpush1.xpose.msra.mxu0 0.0
    %2083 = vmatprep.subr.mxu0 0.0
    %2084 = vmatpush1.xpose.msra.mxu0 0.0
    %2085 = vmatprep.subr.mxu0 0.0
    %2086 = vmatpush1.xpose.msra.mxu0 0.0
    %2087 = vmatprep.subr.mxu0 0.0
    %2088 = vmatpush1.xpose.msra.mxu0 0.0
    %2089 = vmatprep.subr.mxu0 0.0
    %2090 = vmatpush1.xpose.msra.mxu0 0.0
    %2091 = vmatprep.subr.mxu0 0.0
    %2092 = vmatpush1.xpose.msra.mxu0 0.0
    %2093 = vmatprep.subr.mxu0 0.0
    %2094 = vmatpush1.xpose.msra.mxu0 0.0
    %2095 = vmatprep.subr.mxu0 0.0
    %2096 = vmatpush1.xpose.msra.mxu0 0.0
    %2097 = vmatprep.subr.mxu0 0.0
    %2098 = vmatpush1.xpose.msra.mxu0 0.0
    %2099 = vmatprep.subr.mxu0 0.0
    %2100 = vmatpush1.xpose.msra.mxu0 0.0
    %2101 = vmatprep.subr.mxu0 0.0
    %2102 = vmatpush1.xpose.msra.mxu0 0.0
    %2103 = vmatprep.subr.mxu0 0.0
    %2104 = vmatpush1.xpose.msra.mxu0 0.0
    %2105 = vmatprep.subr.mxu0 0.0
    %2106 = vmatpush1.xpose.msra.mxu0 0.0
    %2107 = vmatprep.subr.mxu0 0.0
    %2108 = vmatpush1.xpose.msra.mxu0 0.0
    %2109 = vmatprep.subr.mxu0 0.0
    %2110 = vmatpush1.xpose.msra.mxu0 0.0
    %2111 = vmatprep.subr.mxu0 0.0
    %2112 = vmatpush1.xpose.msra.mxu0 0.0
    %2113 = vmatprep.mubr.f32.mxu0 0.0
    %2114 = vmatmul.mubr.f32.gmra.mrb[0].mxu0 %v2044
    %v2115 = vpop.f32.mrb[0].mxu0
    %v2116 = vadd.f32 0.0, %v2115
    %v2117 = vpop.f32.mrb[0].mxu0
    %2118 = vdwg.mxu0
    %v2120 = vsel %vm345, %v1864, 0
    %v2123 = vsel %vm345, %v1952, 0
    %2125 = vmatprep.subr.mxu0 0.0
    %2126 = vmatpush1.xpose.msra.mxu0 %v2123
    %2127 = vmatprep.subr.mxu0 0.0
    %2128 = vmatpush1.xpose.msra.mxu0 0.0
    %2129 = vmatprep.subr.mxu0 0.0
    %2130 = vmatpush1.xpose.msra.mxu0 0.0
    %2131 = vmatprep.subr.mxu0 0.0
    %2132 = vmatpush1.xpose.msra.mxu0 0.0
    %2133 = vmatprep.subr.mxu0 0.0
    %2134 = vmatpush1.xpose.msra.mxu0 0.0
    %2135 = vmatprep.subr.mxu0 0.0
    %2136 = vmatpush1.xpose.msra.mxu0 0.0
    %2137 = vmatprep.subr.mxu0 0.0
    %2138 = vmatpush1.xpose.msra.mxu0 0.0
    %2139 = vmatprep.subr.mxu0 0.0
    %2140 = vmatpush1.xpose.msra.mxu0 0.0
    %2141 = vmatprep.subr.mxu0 0.0
    %2142 = vmatpush1.xpose.msra.mxu0 0.0
    %2143 = vmatprep.subr.mxu0 0.0
    %2144 = vmatpush1.xpose.msra.mxu0 0.0
    %2145 = vmatprep.subr.mxu0 0.0
    %2146 = vmatpush1.xpose.msra.mxu0 0.0
    %2147 = vmatprep.subr.mxu0 0.0
    %2148 = vmatpush1.xpose.msra.mxu0 0.0
    %2149 = vmatprep.subr.mxu0 0.0
    %2150 = vmatpush1.xpose.msra.mxu0 0.0
    %2151 = vmatprep.subr.mxu0 0.0
    %2152 = vmatpush1.xpose.msra.mxu0 0.0
    %2153 = vmatprep.subr.mxu0 0.0
    %2154 = vmatpush1.xpose.msra.mxu0 0.0
    %2155 = vmatprep.subr.mxu0 0.0
    %2156 = vmatpush1.xpose.msra.mxu0 0.0
    %2157 = vmatprep.subr.mxu0 0.0
    %2158 = vmatpush1.xpose.msra.mxu0 0.0
    %2159 = vmatprep.subr.mxu0 0.0
    %2160 = vmatpush1.xpose.msra.mxu0 0.0
    %2161 = vmatprep.subr.mxu0 0.0
    %2162 = vmatpush1.xpose.msra.mxu0 0.0
    %2163 = vmatprep.subr.mxu0 0.0
    %2164 = vmatpush1.xpose.msra.mxu0 0.0
    %2165 = vmatprep.subr.mxu0 0.0
    %2166 = vmatpush1.xpose.msra.mxu0 0.0
    %2167 = vmatprep.subr.mxu0 0.0
    %2168 = vmatpush1.xpose.msra.mxu0 0.0
    %2169 = vmatprep.subr.mxu0 0.0
    %2170 = vmatpush1.xpose.msra.mxu0 0.0
    %2171 = vmatprep.subr.mxu0 0.0
    %2172 = vmatpush1.xpose.msra.mxu0 0.0
    %2173 = vmatprep.subr.mxu0 0.0
    %2174 = vmatpush1.xpose.msra.mxu0 0.0
    %2175 = vmatprep.subr.mxu0 0.0
    %2176 = vmatpush1.xpose.msra.mxu0 0.0
    %2177 = vmatprep.subr.mxu0 0.0
    %2178 = vmatpush1.xpose.msra.mxu0 0.0
    %2179 = vmatprep.subr.mxu0 0.0
    %2180 = vmatpush1.xpose.msra.mxu0 0.0
    %2181 = vmatprep.subr.mxu0 0.0
    %2182 = vmatpush1.xpose.msra.mxu0 0.0
    %2183 = vmatprep.subr.mxu0 0.0
    %2184 = vmatpush1.xpose.msra.mxu0 0.0
    %2185 = vmatprep.subr.mxu0 0.0
    %2186 = vmatpush1.xpose.msra.mxu0 0.0
    %2187 = vmatprep.subr.mxu0 0.0
    %2188 = vmatpush1.xpose.msra.mxu0 0.0
    %2189 = vmatprep.mubr.f32.mxu0 0.0
    %2190 = vmatmul.mubr.f32.gmra.mrb[0].mxu0 %v2120
    %v2191 = vpop.f32.mrb[0].mxu0
    %v2192 = vadd.f32 0.0, %v2191
    %v2193 = vpop.f32.mrb[0].mxu0
    %2194 = vdwg.mxu0
    %v2195 = vmul.f32 %v2116, 0.25
    %v2196 = vmul.f32 %v2192, 0.25
    %v2197 = vadd.f32 %v2195, %v505
    %v2198 = vadd.f32 %v2196, %v509
    %v2199 = vsel %vm514, %v2197, -inf
    %2200 = vmax.xlane.f32.xlu0 %v2199
    %v2201 = vpop.xlane.xlu0 %2200
    %v2202 = vsel %vm514, %v2198, -inf
    %2203 = vmax.xlane.f32.xlu0 %v2202
    %v2204 = vpop.xlane.xlu0 %2203
    %v2205 = vsub.f32 %v2197, %v2201
    %v2206 = vsub.f32 %v2198, %v2204
    %v2207 = vmul.f32 %v2205, 1.442695
    %v2208 = vpow.pop %v2207
    %v2209 = vmul.f32 %v2206, 1.442695
    %v2210 = vpow.pop %v2209
    %v2211 = vsel %vm514, %v2208, 0.0
    %2212 = vadd.xlane.f32.xlu0 %v2211
    %v2213 = vpop.xlane.xlu0 %2212
    %v2214 = vsel %vm514, %v2210, 0.0
    %2215 = vadd.xlane.f32.xlu0 %v2214
    %v2216 = vpop.xlane.xlu0 %2215
    %v2217 = vrcp.pop %v2213
    %v2218 = vmul.f32 %v2208, %v2217
    %v2219 = vrcp.pop %v2216
    %v2220 = vmul.f32 %v2210, %v2219
    %v2222 = vsel %vm514, %v2218, 0
    %2224 = vmatprep.subr.mxu0 0.0
    %2225 = vmatpush1.msra.mxu0 %v2035
    %2226 = vmatprep.subr.mxu0 0.0
    %2227 = vmatpush1.msra.mxu0 0.0
    %2228 = vmatprep.subr.mxu0 0.0
    %2229 = vmatpush1.msra.mxu0 0.0
    %2230 = vmatprep.subr.mxu0 0.0
    %2231 = vmatpush1.msra.mxu0 0.0
    %2232 = vmatprep.subr.mxu0 0.0
    %2233 = vmatpush1.msra.mxu0 0.0
    %2234 = vmatprep.subr.mxu0 0.0
    %2235 = vmatpush1.msra.mxu0 0.0
    %2236 = vmatprep.subr.mxu0 0.0
    %2237 = vmatpush1.msra.mxu0 0.0
    %2238 = vmatprep.subr.mxu0 0.0
    %2239 = vmatpush1.msra.mxu0 0.0
    %2240 = vmatprep.subr.mxu0 0.0
    %2241 = vmatpush1.msra.mxu0 0.0
    %2242 = vmatprep.subr.mxu0 0.0
    %2243 = vmatpush1.msra.mxu0 0.0
    %2244 = vmatprep.subr.mxu0 0.0
    %2245 = vmatpush1.msra.mxu0 0.0
    %2246 = vmatprep.subr.mxu0 0.0
    %2247 = vmatpush1.msra.mxu0 0.0
    %2248 = vmatprep.subr.mxu0 0.0
    %2249 = vmatpush1.msra.mxu0 0.0
    %2250 = vmatprep.subr.mxu0 0.0
    %2251 = vmatpush1.msra.mxu0 0.0
    %2252 = vmatprep.subr.mxu0 0.0
    %2253 = vmatpush1.msra.mxu0 0.0
    %2254 = vmatprep.subr.mxu0 0.0
    %2255 = vmatpush1.msra.mxu0 0.0
    %2256 = vmatprep.subr.mxu0 0.0
    %2257 = vmatpush1.msra.mxu0 0.0
    %2258 = vmatprep.subr.mxu0 0.0
    %2259 = vmatpush1.msra.mxu0 0.0
    %2260 = vmatprep.subr.mxu0 0.0
    %2261 = vmatpush1.msra.mxu0 0.0
    %2262 = vmatprep.subr.mxu0 0.0
    %2263 = vmatpush1.msra.mxu0 0.0
    %2264 = vmatprep.subr.mxu0 0.0
    %2265 = vmatpush1.msra.mxu0 0.0
    %2266 = vmatprep.subr.mxu0 0.0
    %2267 = vmatpush1.msra.mxu0 0.0
    %2268 = vmatprep.subr.mxu0 0.0
    %2269 = vmatpush1.msra.mxu0 0.0
    %2270 = vmatprep.subr.mxu0 0.0
    %2271 = vmatpush1.msra.mxu0 0.0
    %2272 = vmatprep.subr.mxu0 0.0
    %2273 = vmatpush1.msra.mxu0 0.0
    %2274 = vmatprep.subr.mxu0 0.0
    %2275 = vmatpush1.msra.mxu0 0.0
    %2276 = vmatprep.subr.mxu0 0.0
    %2277 = vmatpush1.msra.mxu0 0.0
    %2278 = vmatprep.subr.mxu0 0.0
    %2279 = vmatpush1.msra.mxu0 0.0
    %2280 = vmatprep.subr.mxu0 0.0
    %2281 = vmatpush1.msra.mxu0 0.0
    %2282 = vmatprep.subr.mxu0 0.0
    %2283 = vmatpush1.msra.mxu0 0.0
    %2284 = vmatprep.subr.mxu0 0.0
    %2285 = vmatpush1.msra.mxu0 0.0
    %2286 = vmatprep.subr.mxu0 0.0
    %2287 = vmatpush1.msra.mxu0 0.0
    %2288 = vmatprep.mubr.f32.mxu0 0.0
    %2289 = vmatmul.mubr.f32.gmra.mrb[0].mxu0 %v2222
    %v2290 = vpop.f32.mrb[0].mxu0
    %v2291 = vadd.f32 0.0, %v2290
    %v2292 = vpop.f32.mrb[0].mxu0
    %2293 = vdwg.mxu0
    %v2295 = vsel %vm514, %v2220, 0
    %2297 = vmatprep.subr.mxu0 0.0
    %2298 = vmatpush1.msra.mxu0 %v2040
    %2299 = vmatprep.subr.mxu0 0.0
    %2300 = vmatpush1.msra.mxu0 0.0
    %2301 = vmatprep.subr.mxu0 0.0
    %2302 = vmatpush1.msra.mxu0 0.0
    %2303 = vmatprep.subr.mxu0 0.0
    %2304 = vmatpush1.msra.mxu0 0.0
    %2305 = vmatprep.subr.mxu0 0.0
    %2306 = vmatpush1.msra.mxu0 0.0
    %2307 = vmatprep.subr.mxu0 0.0
    %2308 = vmatpush1.msra.mxu0 0.0
    %2309 = vmatprep.subr.mxu0 0.0
    %2310 = vmatpush1.msra.mxu0 0.0
    %2311 = vmatprep.subr.mxu0 0.0
    %2312 = vmatpush1.msra.mxu0 0.0
    %2313 = vmatprep.subr.mxu0 0.0
    %2314 = vmatpush1.msra.mxu0 0.0
    %2315 = vmatprep.subr.mxu0 0.0
    %2316 = vmatpush1.msra.mxu0 0.0
    %2317 = vmatprep.subr.mxu0 0.0
    %2318 = vmatpush1.msra.mxu0 0.0
    %2319 = vmatprep.subr.mxu0 0.0
    %2320 = vmatpush1.msra.mxu0 0.0
    %2321 = vmatprep.subr.mxu0 0.0
    %2322 = vmatpush1.msra.mxu0 0.0
    %2323 = vmatprep.subr.mxu0 0.0
    %2324 = vmatpush1.msra.mxu0 0.0
    %2325 = vmatprep.subr.mxu0 0.0
    %2326 = vmatpush1.msra.mxu0 0.0
    %2327 = vmatprep.subr.mxu0 0.0
    %2328 = vmatpush1.msra.mxu0 0.0
    %2329 = vmatprep.subr.mxu0 0.0
    %2330 = vmatpush1.msra.mxu0 0.0
    %2331 = vmatprep.subr.mxu0 0.0
    %2332 = vmatpush1.msra.mxu0 0.0
    %2333 = vmatprep.subr.mxu0 0.0
    %2334 = vmatpush1.msra.mxu0 0.0
    %2335 = vmatprep.subr.mxu0 0.0
    %2336 = vmatpush1.msra.mxu0 0.0
    %2337 = vmatprep.subr.mxu0 0.0
    %2338 = vmatpush1.msra.mxu0 0.0
    %2339 = vmatprep.subr.mxu0 0.0
    %2340 = vmatpush1.msra.mxu0 0.0
    %2341 = vmatprep.subr.mxu0 0.0
    %2342 = vmatpush1.msra.mxu0 0.0
    %2343 = vmatprep.subr.mxu0 0.0
    %2344 = vmatpush1.msra.mxu0 0.0
    %2345 = vmatprep.subr.mxu0 0.0
    %2346 = vmatpush1.msra.mxu0 0.0
    %2347 = vmatprep.subr.mxu0 0.0
    %2348 = vmatpush1.msra.mxu0 0.0
    %2349 = vmatprep.subr.mxu0 0.0
    %2350 = vmatpush1.msra.mxu0 0.0
    %2351 = vmatprep.subr.mxu0 0.0
    %2352 = vmatpush1.msra.mxu0 0.0
    %2353 = vmatprep.subr.mxu0 0.0
    %2354 = vmatpush1.msra.mxu0 0.0
    %2355 = vmatprep.subr.mxu0 0.0
    %2356 = vmatpush1.msra.mxu0 0.0
    %2357 = vmatprep.subr.mxu0 0.0
    %2358 = vmatpush1.msra.mxu0 0.0
    %2359 = vmatprep.subr.mxu0 0.0
    %2360 = vmatpush1.msra.mxu0 0.0
    %2361 = vmatprep.mubr.f32.mxu0 0.0
    %2362 = vmatmul.mubr.f32.gmra.mrb[0].mxu0 %v2295
    %v2363 = vpop.f32.mrb[0].mxu0
    %v2364 = vadd.f32 0.0, %v2363
    %v2365 = vpop.f32.mrb[0].mxu0
    %2366 = vdwg.mxu0
    %s2367 = scalar_lea.vmem %s9, 32
    %v2368 = vld [vmem:[%s2367] sm:$0xff]
    %v2369 = vld [vmem:[%s2367 + $0x8] sm:$0xff]
    %s2370 = scalar_lea.vmem %s3, 96
    %v2371 = vld [vmem:[%s2370] sm:$0xff]
    %v2372 = vld [vmem:[%s2370 + $0x8] sm:$0xff]
    %v2373 = vld [vmem:[%s2370 + $0x10] sm:$0xff]
    %v2374 = vld [vmem:[%s2370 + $0x18] sm:$0xff]
    %s2375 = scalar_lea.vmem %s6, 3
    %v2376 = vld [vmem:[%s2375] sm:$0x1]
    %v2378 = vlaneseq
    %v2379 = vshrl.u32 %v2378, 7
    %v2380 = vsub.s32 0, %v2379
    %v2381 = vrot.slane %v2376, %v2380
    %2383 = vmatprep.subr.mxu0 0.0
    %2384 = vmatpush1.msra.mxu0 %v2371
    %2385 = vmatprep.subr.mxu0 0.0
    %2386 = vmatpush1.msra.mxu0 %v2372
    %2387 = vmatprep.subr.mxu0 0.0
    %2388 = vmatpush1.msra.mxu0 %v2373
    %2389 = vmatprep.subr.mxu0 0.0
    %2390 = vmatpush1.msra.mxu0 %v2374
    %2391 = vmatprep.subr.mxu0 0.0
    %2392 = vmatpush1.msra.mxu0 0.0
    %2393 = vmatprep.subr.mxu0 0.0
    %2394 = vmatpush1.msra.mxu0 0.0
    %2395 = vmatprep.subr.mxu0 0.0
    %2396 = vmatpush1.msra.mxu0 0.0
    %2397 = vmatprep.subr.mxu0 0.0
    %2398 = vmatpush1.msra.mxu0 0.0
    %2399 = vmatprep.subr.mxu0 0.0
    %2400 = vmatpush1.msra.mxu0 0.0
    %2401 = vmatprep.subr.mxu0 0.0
    %2402 = vmatpush1.msra.mxu0 0.0
    %2403 = vmatprep.subr.mxu0 0.0
    %2404 = vmatpush1.msra.mxu0 0.0
    %2405 = vmatprep.subr.mxu0 0.0
    %2406 = vmatpush1.msra.mxu0 0.0
    %2407 = vmatprep.subr.mxu0 0.0
    %2408 = vmatpush1.msra.mxu0 0.0
    %2409 = vmatprep.subr.mxu0 0.0
    %2410 = vmatpush1.msra.mxu0 0.0
    %2411 = vmatprep.subr.mxu0 0.0
    %2412 = vmatpush1.msra.mxu0 0.0
    %2413 = vmatprep.subr.mxu0 0.0
    %2414 = vmatpush1.msra.mxu0 0.0
    %2415 = vmatprep.subr.mxu0 0.0
    %2416 = vmatpush1.msra.mxu0 0.0
    %2417 = vmatprep.subr.mxu0 0.0
    %2418 = vmatpush1.msra.mxu0 0.0
    %2419 = vmatprep.subr.mxu0 0.0
    %2420 = vmatpush1.msra.mxu0 0.0
    %2421 = vmatprep.subr.mxu0 0.0
    %2422 = vmatpush1.msra.mxu0 0.0
    %2423 = vmatprep.subr.mxu0 0.0
    %2424 = vmatpush1.msra.mxu0 0.0
    %2425 = vmatprep.subr.mxu0 0.0
    %2426 = vmatpush1.msra.mxu0 0.0
    %2427 = vmatprep.subr.mxu0 0.0
    %2428 = vmatpush1.msra.mxu0 0.0
    %2429 = vmatprep.subr.mxu0 0.0
    %2430 = vmatpush1.msra.mxu0 0.0
    %2431 = vmatprep.subr.mxu0 0.0
    %2432 = vmatpush1.msra.mxu0 0.0
    %2433 = vmatprep.subr.mxu0 0.0
    %2434 = vmatpush1.msra.mxu0 0.0
    %2435 = vmatprep.subr.mxu0 0.0
    %2436 = vmatpush1.msra.mxu0 0.0
    %2437 = vmatprep.subr.mxu0 0.0
    %2438 = vmatpush1.msra.mxu0 0.0
    %2439 = vmatprep.subr.mxu0 0.0
    %2440 = vmatpush1.msra.mxu0 0.0
    %2441 = vmatprep.subr.mxu0 0.0
    %2442 = vmatpush1.msra.mxu0 0.0
    %2443 = vmatprep.subr.mxu0 0.0
    %2444 = vmatpush1.msra.mxu0 0.0
    %2445 = vmatprep.subr.mxu0 0.0
    %2446 = vmatpush1.msra.mxu0 0.0
    %2447 = vmatprep.mubr.f32.mxu0 0.0
    %2448 = vmatmul.mubr.f32.gmra.mrb[0].mxu0 %v1787
    %v2449 = vpop.f32.mrb[0].mxu0
    %v2450 = vadd.f32 %v2381, %v2449
    %v2451 = vpop.f32.mrb[0].mxu0
    %2452 = vmatprep.mubr.f32.mxu0 0.0
    %2453 = vmatmul.mubr.f32.gmra.mrb[0].mxu0 %v1790
    %v2454 = vpop.f32.mrb[0].mxu0
    %v2455 = vadd.f32 %v2381, %v2454
    %v2456 = vpop.f32.mrb[0].mxu0
    %2457 = vdwg.mxu0
    %s2458 = scalar_lea.vmem %s4, 96
    %v2459 = vld [vmem:[%s2458] sm:$0xff]
    %v2460 = vld [vmem:[%s2458 + $0x8] sm:$0xff]
    %v2461 = vld [vmem:[%s2458 + $0x10] sm:$0xff]
    %v2462 = vld [vmem:[%s2458 + $0x18] sm:$0xff]
    %s2463 = scalar_lea.vmem %s7, 3
    %v2464 = vld [vmem:[%s2463] sm:$0x1]
    %v2466 = vlaneseq
    %v2467 = vshrl.u32 %v2466, 7
    %v2468 = vsub.s32 0, %v2467
    %v2469 = vrot.slane %v2464, %v2468
    %2471 = vmatprep.subr.mxu0 0.0
    %2472 = vmatpush1.msra.mxu0 %v2459
    %2473 = vmatprep.subr.mxu0 0.0
    %2474 = vmatpush1.msra.mxu0 %v2460
    %2475 = vmatprep.subr.mxu0 0.0
    %2476 = vmatpush1.msra.mxu0 %v2461
    %2477 = vmatprep.subr.mxu0 0.0
    %2478 = vmatpush1.msra.mxu0 %v2462
    %2479 = vmatprep.subr.mxu0 0.0
    %2480 = vmatpush1.msra.mxu0 0.0
    %2481 = vmatprep.subr.mxu0 0.0
    %2482 = vmatpush1.msra.mxu0 0.0
    %2483 = vmatprep.subr.mxu0 0.0
    %2484 = vmatpush1.msra.mxu0 0.0
    %2485 = vmatprep.subr.mxu0 0.0
    %2486 = vmatpush1.msra.mxu0 0.0
    %2487 = vmatprep.subr.mxu0 0.0
    %2488 = vmatpush1.msra.mxu0 0.0
    %2489 = vmatprep.subr.mxu0 0.0
    %2490 = vmatpush1.msra.mxu0 0.0
    %2491 = vmatprep.subr.mxu0 0.0
    %2492 = vmatpush1.msra.mxu0 0.0
    %2493 = vmatprep.subr.mxu0 0.0
    %2494 = vmatpush1.msra.mxu0 0.0
    %2495 = vmatprep.subr.mxu0 0.0
    %2496 = vmatpush1.msra.mxu0 0.0
    %2497 = vmatprep.subr.mxu0 0.0
    %2498 = vmatpush1.msra.mxu0 0.0
    %2499 = vmatprep.subr.mxu0 0.0
    %2500 = vmatpush1.msra.mxu0 0.0
    %2501 = vmatprep.subr.mxu0 0.0
    %2502 = vmatpush1.msra.mxu0 0.0
    %2503 = vmatprep.subr.mxu0 0.0
    %2504 = vmatpush1.msra.mxu0 0.0
    %2505 = vmatprep.subr.mxu0 0.0
    %2506 = vmatpush1.msra.mxu0 0.0
    %2507 = vmatprep.subr.mxu0 0.0
    %2508 = vmatpush1.msra.mxu0 0.0
    %2509 = vmatprep.subr.mxu0 0.0
    %2510 = vmatpush1.msra.mxu0 0.0
    %2511 = vmatprep.subr.mxu0 0.0
    %2512 = vmatpush1.msra.mxu0 0.0
    %2513 = vmatprep.subr.mxu0 0.0
    %2514 = vmatpush1.msra.mxu0 0.0
    %2515 = vmatprep.subr.mxu0 0.0
    %2516 = vmatpush1.msra.mxu0 0.0
    %2517 = vmatprep.subr.mxu0 0.0
    %2518 = vmatpush1.msra.mxu0 0.0
    %2519 = vmatprep.subr.mxu0 0.0
    %2520 = vmatpush1.msra.mxu0 0.0
    %2521 = vmatprep.subr.mxu0 0.0
    %2522 = vmatpush1.msra.mxu0 0.0
    %2523 = vmatprep.subr.mxu0 0.0
    %2524 = vmatpush1.msra.mxu0 0.0
    %2525 = vmatprep.subr.mxu0 0.0
    %2526 = vmatpush1.msra.mxu0 0.0
    %2527 = vmatprep.subr.mxu0 0.0
    %2528 = vmatpush1.msra.mxu0 0.0
    %2529 = vmatprep.subr.mxu0 0.0
    %2530 = vmatpush1.msra.mxu0 0.0
    %2531 = vmatprep.subr.mxu0 0.0
    %2532 = vmatpush1.msra.mxu0 0.0
    %2533 = vmatprep.subr.mxu0 0.0
    %2534 = vmatpush1.msra.mxu0 0.0
    %2535 = vmatprep.mubr.f32.mxu0 0.0
    %2536 = vmatmul.mubr.f32.gmra.mrb[0].mxu0 %v1787
    %v2537 = vpop.f32.mrb[0].mxu0
    %v2538 = vadd.f32 %v2469, %v2537
    %v2539 = vpop.f32.mrb[0].mxu0
    %2540 = vmatprep.mubr.f32.mxu0 0.0
    %2541 = vmatmul.mubr.f32.gmra.mrb[0].mxu0 %v1790
    %v2542 = vpop.f32.mrb[0].mxu0
    %v2543 = vadd.f32 %v2469, %v2542
    %v2544 = vpop.f32.mrb[0].mxu0
    %2545 = vdwg.mxu0
    %s2546 = scalar_lea.vmem %s5, 96
    %v2547 = vld [vmem:[%s2546] sm:$0xff]
    %v2548 = vld [vmem:[%s2546 + $0x8] sm:$0xff]
    %v2549 = vld [vmem:[%s2546 + $0x10] sm:$0xff]
    %v2550 = vld [vmem:[%s2546 + $0x18] sm:$0xff]
    %s2551 = scalar_lea.vmem %s8, 3
    %v2552 = vld [vmem:[%s2551] sm:$0x1]
    %v2554 = vlaneseq
    %v2555 = vshrl.u32 %v2554, 7
    %v2556 = vsub.s32 0, %v2555
    %v2557 = vrot.slane %v2552, %v2556
    %2559 = vmatprep.subr.mxu0 0.0
    %2560 = vmatpush1.msra.mxu0 %v2547
    %2561 = vmatprep.subr.mxu0 0.0
    %2562 = vmatpush1.msra.mxu0 %v2548
    %2563 = vmatprep.subr.mxu0 0.0
    %2564 = vmatpush1.msra.mxu0 %v2549
    %2565 = vmatprep.subr.mxu0 0.0
    %2566 = vmatpush1.msra.mxu0 %v2550
    %2567 = vmatprep.subr.mxu0 0.0
    %2568 = vmatpush1.msra.mxu0 0.0
    %2569 = vmatprep.subr.mxu0 0.0
    %2570 = vmatpush1.msra.mxu0 0.0
    %2571 = vmatprep.subr.mxu0 0.0
    %2572 = vmatpush1.msra.mxu0 0.0
    %2573 = vmatprep.subr.mxu0 0.0
    %2574 = vmatpush1.msra.mxu0 0.0
    %2575 = vmatprep.subr.mxu0 0.0
    %2576 = vmatpush1.msra.mxu0 0.0
    %2577 = vmatprep.subr.mxu0 0.0
    %2578 = vmatpush1.msra.mxu0 0.0
    %2579 = vmatprep.subr.mxu0 0.0
    %2580 = vmatpush1.msra.mxu0 0.0
    %2581 = vmatprep.subr.mxu0 0.0
    %2582 = vmatpush1.msra.mxu0 0.0
    %2583 = vmatprep.subr.mxu0 0.0
    %2584 = vmatpush1.msra.mxu0 0.0
    %2585 = vmatprep.subr.mxu0 0.0
    %2586 = vmatpush1.msra.mxu0 0.0
    %2587 = vmatprep.subr.mxu0 0.0
    %2588 = vmatpush1.msra.mxu0 0.0
    %2589 = vmatprep.subr.mxu0 0.0
    %2590 = vmatpush1.msra.mxu0 0.0
    %2591 = vmatprep.subr.mxu0 0.0
    %2592 = vmatpush1.msra.mxu0 0.0
    %2593 = vmatprep.subr.mxu0 0.0
    %2594 = vmatpush1.msra.mxu0 0.0
    %2595 = vmatprep.subr.mxu0 0.0
    %2596 = vmatpush1.msra.mxu0 0.0
    %2597 = vmatprep.subr.mxu0 0.0
    %2598 = vmatpush1.msra.mxu0 0.0
    %2599 = vmatprep.subr.mxu0 0.0
    %2600 = vmatpush1.msra.mxu0 0.0
    %2601 = vmatprep.subr.mxu0 0.0
    %2602 = vmatpush1.msra.mxu0 0.0
    %2603 = vmatprep.subr.mxu0 0.0
    %2604 = vmatpush1.msra.mxu0 0.0
    %2605 = vmatprep.subr.mxu0 0.0
    %2606 = vmatpush1.msra.mxu0 0.0
    %2607 = vmatprep.subr.mxu0 0.0
    %2608 = vmatpush1.msra.mxu0 0.0
    %2609 = vmatprep.subr.mxu0 0.0
    %2610 = vmatpush1.msra.mxu0 0.0
    %2611 = vmatprep.subr.mxu0 0.0
    %2612 = vmatpush1.msra.mxu0 0.0
    %2613 = vmatprep.subr.mxu0 0.0
    %2614 = vmatpush1.msra.mxu0 0.0
    %2615 = vmatprep.subr.mxu0 0.0
    %2616 = vmatpush1.msra.mxu0 0.0
    %2617 = vmatprep.subr.mxu0 0.0
    %2618 = vmatpush1.msra.mxu0 0.0
    %2619 = vmatprep.subr.mxu0 0.0
    %2620 = vmatpush1.msra.mxu0 0.0
    %2621 = vmatprep.subr.mxu0 0.0
    %2622 = vmatpush1.msra.mxu0 0.0
    %2623 = vmatprep.mubr.f32.mxu0 0.0
    %2624 = vmatmul.mubr.f32.gmra.mrb[0].mxu0 %v1787
    %v2625 = vpop.f32.mrb[0].mxu0
    %v2626 = vadd.f32 %v2557, %v2625
    %v2627 = vpop.f32.mrb[0].mxu0
    %2628 = vmatprep.mubr.f32.mxu0 0.0
    %2629 = vmatmul.mubr.f32.gmra.mrb[0].mxu0 %v1790
    %v2630 = vpop.f32.mrb[0].mxu0
    %v2631 = vadd.f32 %v2557, %v2630
    %v2632 = vpop.f32.mrb[0].mxu0
    %2633 = vdwg.mxu0
    %v2635 = vsel %vm345, %v2450, 0
    %v2638 = vsel %vm345, %v2538, 0
    %2640 = vmatprep.subr.mxu0 0.0
    %2641 = vmatpush1.xpose.msra.mxu0 %v2638
    %2642 = vmatprep.subr.mxu0 0.0
    %2643 = vmatpush1.xpose.msra.mxu0 0.0
    %2644 = vmatprep.subr.mxu0 0.0
    %2645 = vmatpush1.xpose.msra.mxu0 0.0
    %2646 = vmatprep.subr.mxu0 0.0
    %2647 = vmatpush1.xpose.msra.mxu0 0.0
    %2648 = vmatprep.subr.mxu0 0.0
    %2649 = vmatpush1.xpose.msra.mxu0 0.0
    %2650 = vmatprep.subr.mxu0 0.0
    %2651 = vmatpush1.xpose.msra.mxu0 0.0
    %2652 = vmatprep.subr.mxu0 0.0
    %2653 = vmatpush1.xpose.msra.mxu0 0.0
    %2654 = vmatprep.subr.mxu0 0.0
    %2655 = vmatpush1.xpose.msra.mxu0 0.0
    %2656 = vmatprep.subr.mxu0 0.0
    %2657 = vmatpush1.xpose.msra.mxu0 0.0
    %2658 = vmatprep.subr.mxu0 0.0
    %2659 = vmatpush1.xpose.msra.mxu0 0.0
    %2660 = vmatprep.subr.mxu0 0.0
    %2661 = vmatpush1.xpose.msra.mxu0 0.0
    %2662 = vmatprep.subr.mxu0 0.0
    %2663 = vmatpush1.xpose.msra.mxu0 0.0
    %2664 = vmatprep.subr.mxu0 0.0
    %2665 = vmatpush1.xpose.msra.mxu0 0.0
    %2666 = vmatprep.subr.mxu0 0.0
    %2667 = vmatpush1.xpose.msra.mxu0 0.0
    %2668 = vmatprep.subr.mxu0 0.0
    %2669 = vmatpush1.xpose.msra.mxu0 0.0
    %2670 = vmatprep.subr.mxu0 0.0
    %2671 = vmatpush1.xpose.msra.mxu0 0.0
    %2672 = vmatprep.subr.mxu0 0.0
    %2673 = vmatpush1.xpose.msra.mxu0 0.0
    %2674 = vmatprep.subr.mxu0 0.0
    %2675 = vmatpush1.xpose.msra.mxu0 0.0
    %2676 = vmatprep.subr.mxu0 0.0
    %2677 = vmatpush1.xpose.msra.mxu0 0.0
    %2678 = vmatprep.subr.mxu0 0.0
    %2679 = vmatpush1.xpose.msra.mxu0 0.0
    %2680 = vmatprep.subr.mxu0 0.0
    %2681 = vmatpush1.xpose.msra.mxu0 0.0
    %2682 = vmatprep.subr.mxu0 0.0
    %2683 = vmatpush1.xpose.msra.mxu0 0.0
    %2684 = vmatprep.subr.mxu0 0.0
    %2685 = vmatpush1.xpose.msra.mxu0 0.0
    %2686 = vmatprep.subr.mxu0 0.0
    %2687 = vmatpush1.xpose.msra.mxu0 0.0
    %2688 = vmatprep.subr.mxu0 0.0
    %2689 = vmatpush1.xpose.msra.mxu0 0.0
    %2690 = vmatprep.subr.mxu0 0.0
    %2691 = vmatpush1.xpose.msra.mxu0 0.0
    %2692 = vmatprep.subr.mxu0 0.0
    %2693 = vmatpush1.xpose.msra.mxu0 0.0
    %2694 = vmatprep.subr.mxu0 0.0
    %2695 = vmatpush1.xpose.msra.mxu0 0.0
    %2696 = vmatprep.subr.mxu0 0.0
    %2697 = vmatpush1.xpose.msra.mxu0 0.0
    %2698 = vmatprep.subr.mxu0 0.0
    %2699 = vmatpush1.xpose.msra.mxu0 0.0
    %2700 = vmatprep.subr.mxu0 0.0
    %2701 = vmatpush1.xpose.msra.mxu0 0.0
    %2702 = vmatprep.subr.mxu0 0.0
    %2703 = vmatpush1.xpose.msra.mxu0 0.0
    %2704 = vmatprep.mubr.f32.mxu0 0.0
    %2705 = vmatmul.mubr.f32.gmra.mrb[0].mxu0 %v2635
    %v2706 = vpop.f32.mrb[0].mxu0
    %v2707 = vadd.f32 0.0, %v2706
    %v2708 = vpop.f32.mrb[0].mxu0
    %2709 = vdwg.mxu0
    %v2711 = vsel %vm345, %v2455, 0
    %v2714 = vsel %vm345, %v2543, 0
    %2716 = vmatprep.subr.mxu0 0.0
    %2717 = vmatpush1.xpose.msra.mxu0 %v2714
    %2718 = vmatprep.subr.mxu0 0.0
    %2719 = vmatpush1.xpose.msra.mxu0 0.0
    %2720 = vmatprep.subr.mxu0 0.0
    %2721 = vmatpush1.xpose.msra.mxu0 0.0
    %2722 = vmatprep.subr.mxu0 0.0
    %2723 = vmatpush1.xpose.msra.mxu0 0.0
    %2724 = vmatprep.subr.mxu0 0.0
    %2725 = vmatpush1.xpose.msra.mxu0 0.0
    %2726 = vmatprep.subr.mxu0 0.0
    %2727 = vmatpush1.xpose.msra.mxu0 0.0
    %2728 = vmatprep.subr.mxu0 0.0
    %2729 = vmatpush1.xpose.msra.mxu0 0.0
    %2730 = vmatprep.subr.mxu0 0.0
    %2731 = vmatpush1.xpose.msra.mxu0 0.0
    %2732 = vmatprep.subr.mxu0 0.0
    %2733 = vmatpush1.xpose.msra.mxu0 0.0
    %2734 = vmatprep.subr.mxu0 0.0
    %2735 = vmatpush1.xpose.msra.mxu0 0.0
    %2736 = vmatprep.subr.mxu0 0.0
    %2737 = vmatpush1.xpose.msra.mxu0 0.0
    %2738 = vmatprep.subr.mxu0 0.0
    %2739 = vmatpush1.xpose.msra.mxu0 0.0
    %2740 = vmatprep.subr.mxu0 0.0
    %2741 = vmatpush1.xpose.msra.mxu0 0.0
    %2742 = vmatprep.subr.mxu0 0.0
    %2743 = vmatpush1.xpose.msra.mxu0 0.0
    %2744 = vmatprep.subr.mxu0 0.0
    %2745 = vmatpush1.xpose.msra.mxu0 0.0
    %2746 = vmatprep.subr.mxu0 0.0
    %2747 = vmatpush1.xpose.msra.mxu0 0.0
    %2748 = vmatprep.subr.mxu0 0.0
    %2749 = vmatpush1.xpose.msra.mxu0 0.0
    %2750 = vmatprep.subr.mxu0 0.0
    %2751 = vmatpush1.xpose.msra.mxu0 0.0
    %2752 = vmatprep.subr.mxu0 0.0
    %2753 = vmatpush1.xpose.msra.mxu0 0.0
    %2754 = vmatprep.subr.mxu0 0.0
    %2755 = vmatpush1.xpose.msra.mxu0 0.0
    %2756 = vmatprep.subr.mxu0 0.0
    %2757 = vmatpush1.xpose.msra.mxu0 0.0
    %2758 = vmatprep.subr.mxu0 0.0
    %2759 = vmatpush1.xpose.msra.mxu0 0.0
    %2760 = vmatprep.subr.mxu0 0.0
    %2761 = vmatpush1.xpose.msra.mxu0 0.0
    %2762 = vmatprep.subr.mxu0 0.0
    %2763 = vmatpush1.xpose.msra.mxu0 0.0
    %2764 = vmatprep.subr.mxu0 0.0
    %2765 = vmatpush1.xpose.msra.mxu0 0.0
    %2766 = vmatprep.subr.mxu0 0.0
    %2767 = vmatpush1.xpose.msra.mxu0 0.0
    %2768 = vmatprep.subr.mxu0 0.0
    %2769 = vmatpush1.xpose.msra.mxu0 0.0
    %2770 = vmatprep.subr.mxu0 0.0
    %2771 = vmatpush1.xpose.msra.mxu0 0.0
    %2772 = vmatprep.subr.mxu0 0.0
    %2773 = vmatpush1.xpose.msra.mxu0 0.0
    %2774 = vmatprep.subr.mxu0 0.0
    %2775 = vmatpush1.xpose.msra.mxu0 0.0
    %2776 = vmatprep.subr.mxu0 0.0
    %2777 = vmatpush1.xpose.msra.mxu0 0.0
    %2778 = vmatprep.subr.mxu0 0.0
    %2779 = vmatpush1.xpose.msra.mxu0 0.0
    %2780 = vmatprep.mubr.f32.mxu0 0.0
    %2781 = vmatmul.mubr.f32.gmra.mrb[0].mxu0 %v2711
    %v2782 = vpop.f32.mrb[0].mxu0
    %v2783 = vadd.f32 0.0, %v2782
    %v2784 = vpop.f32.mrb[0].mxu0
    %2785 = vdwg.mxu0
    %v2786 = vmul.f32 %v2707, 0.25
    %v2787 = vmul.f32 %v2783, 0.25
    %v2788 = vadd.f32 %v2786, %v505
    %v2789 = vadd.f32 %v2787, %v509
    %v2790 = vsel %vm514, %v2788, -inf
    %2791 = vmax.xlane.f32.xlu0 %v2790
    %v2792 = vpop.xlane.xlu0 %2791
    %v2793 = vsel %vm514, %v2789, -inf
    %2794 = vmax.xlane.f32.xlu0 %v2793
    %v2795 = vpop.xlane.xlu0 %2794
    %v2796 = vsub.f32 %v2788, %v2792
    %v2797 = vsub.f32 %v2789, %v2795
    %v2798 = vmul.f32 %v2796, 1.442695
    %v2799 = vpow.pop %v2798
    %v2800 = vmul.f32 %v2797, 1.442695
    %v2801 = vpow.pop %v2800
    %v2802 = vsel %vm514, %v2799, 0.0
    %2803 = vadd.xlane.f32.xlu0 %v2802
    %v2804 = vpop.xlane.xlu0 %2803
    %v2805 = vsel %vm514, %v2801, 0.0
    %2806 = vadd.xlane.f32.xlu0 %v2805
    %v2807 = vpop.xlane.xlu0 %2806
    %v2808 = vrcp.pop %v2804
    %v2809 = vmul.f32 %v2799, %v2808
    %v2810 = vrcp.pop %v2807
    %v2811 = vmul.f32 %v2801, %v2810
    %v2813 = vsel %vm514, %v2809, 0
    %2815 = vmatprep.subr.mxu0 0.0
    %2816 = vmatpush1.msra.mxu0 %v2626
    %2817 = vmatprep.subr.mxu0 0.0
    %2818 = vmatpush1.msra.mxu0 0.0
    %2819 = vmatprep.subr.mxu0 0.0
    %2820 = vmatpush1.msra.mxu0 0.0
    %2821 = vmatprep.subr.mxu0 0.0
    %2822 = vmatpush1.msra.mxu0 0.0
    %2823 = vmatprep.subr.mxu0 0.0
    %2824 = vmatpush1.msra.mxu0 0.0
    %2825 = vmatprep.subr.mxu0 0.0
    %2826 = vmatpush1.msra.mxu0 0.0
    %2827 = vmatprep.subr.mxu0 0.0
    %2828 = vmatpush1.msra.mxu0 0.0
    %2829 = vmatprep.subr.mxu0 0.0
    %2830 = vmatpush1.msra.mxu0 0.0
    %2831 = vmatprep.subr.mxu0 0.0
    %2832 = vmatpush1.msra.mxu0 0.0
    %2833 = vmatprep.subr.mxu0 0.0
    %2834 = vmatpush1.msra.mxu0 0.0
    %2835 = vmatprep.subr.mxu0 0.0
    %2836 = vmatpush1.msra.mxu0 0.0
    %2837 = vmatprep.subr.mxu0 0.0
    %2838 = vmatpush1.msra.mxu0 0.0
    %2839 = vmatprep.subr.mxu0 0.0
    %2840 = vmatpush1.msra.mxu0 0.0
    %2841 = vmatprep.subr.mxu0 0.0
    %2842 = vmatpush1.msra.mxu0 0.0
    %2843 = vmatprep.subr.mxu0 0.0
    %2844 = vmatpush1.msra.mxu0 0.0
    %2845 = vmatprep.subr.mxu0 0.0
    %2846 = vmatpush1.msra.mxu0 0.0
    %2847 = vmatprep.subr.mxu0 0.0
    %2848 = vmatpush1.msra.mxu0 0.0
    %2849 = vmatprep.subr.mxu0 0.0
    %2850 = vmatpush1.msra.mxu0 0.0
    %2851 = vmatprep.subr.mxu0 0.0
    %2852 = vmatpush1.msra.mxu0 0.0
    %2853 = vmatprep.subr.mxu0 0.0
    %2854 = vmatpush1.msra.mxu0 0.0
    %2855 = vmatprep.subr.mxu0 0.0
    %2856 = vmatpush1.msra.mxu0 0.0
    %2857 = vmatprep.subr.mxu0 0.0
    %2858 = vmatpush1.msra.mxu0 0.0
    %2859 = vmatprep.subr.mxu0 0.0
    %2860 = vmatpush1.msra.mxu0 0.0
    %2861 = vmatprep.subr.mxu0 0.0
    %2862 = vmatpush1.msra.mxu0 0.0
    %2863 = vmatprep.subr.mxu0 0.0
    %2864 = vmatpush1.msra.mxu0 0.0
    %2865 = vmatprep.subr.mxu0 0.0
    %2866 = vmatpush1.msra.mxu0 0.0
    %2867 = vmatprep.subr.mxu0 0.0
    %2868 = vmatpush1.msra.mxu0 0.0
    %2869 = vmatprep.subr.mxu0 0.0
    %2870 = vmatpush1.msra.mxu0 0.0
    %2871 = vmatprep.subr.mxu0 0.0
    %2872 = vmatpush1.msra.mxu0 0.0
    %2873 = vmatprep.subr.mxu0 0.0
    %2874 = vmatpush1.msra.mxu0 0.0
    %2875 = vmatprep.subr.mxu0 0.0
    %2876 = vmatpush1.msra.mxu0 0.0
    %2877 = vmatprep.subr.mxu0 0.0
    %2878 = vmatpush1.msra.mxu0 0.0
    %2879 = vmatprep.mubr.f32.mxu0 0.0
    %2880 = vmatmul.mubr.f32.gmra.mrb[0].mxu0 %v2813
    %v2881 = vpop.f32.mrb[0].mxu0
    %v2882 = vadd.f32 0.0, %v2881
    %v2883 = vpop.f32.mrb[0].mxu0
    %2884 = vdwg.mxu0
    %v2886 = vsel %vm514, %v2811, 0
    %2888 = vmatprep.subr.mxu0 0.0
    %2889 = vmatpush1.msra.mxu0 %v2631
    %2890 = vmatprep.subr.mxu0 0.0
    %2891 = vmatpush1.msra.mxu0 0.0
    %2892 = vmatprep.subr.mxu0 0.0
    %2893 = vmatpush1.msra.mxu0 0.0
    %2894 = vmatprep.subr.mxu0 0.0
    %2895 = vmatpush1.msra.mxu0 0.0
    %2896 = vmatprep.subr.mxu0 0.0
    %2897 = vmatpush1.msra.mxu0 0.0
    %2898 = vmatprep.subr.mxu0 0.0
    %2899 = vmatpush1.msra.mxu0 0.0
    %2900 = vmatprep.subr.mxu0 0.0
    %2901 = vmatpush1.msra.mxu0 0.0
    %2902 = vmatprep.subr.mxu0 0.0
    %2903 = vmatpush1.msra.mxu0 0.0
    %2904 = vmatprep.subr.mxu0 0.0
    %2905 = vmatpush1.msra.mxu0 0.0
    %2906 = vmatprep.subr.mxu0 0.0
    %2907 = vmatpush1.msra.mxu0 0.0
    %2908 = vmatprep.subr.mxu0 0.0
    %2909 = vmatpush1.msra.mxu0 0.0
    %2910 = vmatprep.subr.mxu0 0.0
    %2911 = vmatpush1.msra.mxu0 0.0
    %2912 = vmatprep.subr.mxu0 0.0
    %2913 = vmatpush1.msra.mxu0 0.0
    %2914 = vmatprep.subr.mxu0 0.0
    %2915 = vmatpush1.msra.mxu0 0.0
    %2916 = vmatprep.subr.mxu0 0.0
    %2917 = vmatpush1.msra.mxu0 0.0
    %2918 = vmatprep.subr.mxu0 0.0
    %2919 = vmatpush1.msra.mxu0 0.0
    %2920 = vmatprep.subr.mxu0 0.0
    %2921 = vmatpush1.msra.mxu0 0.0
    %2922 = vmatprep.subr.mxu0 0.0
    %2923 = vmatpush1.msra.mxu0 0.0
    %2924 = vmatprep.subr.mxu0 0.0
    %2925 = vmatpush1.msra.mxu0 0.0
    %2926 = vmatprep.subr.mxu0 0.0
    %2927 = vmatpush1.msra.mxu0 0.0
    %2928 = vmatprep.subr.mxu0 0.0
    %2929 = vmatpush1.msra.mxu0 0.0
    %2930 = vmatprep.subr.mxu0 0.0
    %2931 = vmatpush1.msra.mxu0 0.0
    %2932 = vmatprep.subr.mxu0 0.0
    %2933 = vmatpush1.msra.mxu0 0.0
    %2934 = vmatprep.subr.mxu0 0.0
    %2935 = vmatpush1.msra.mxu0 0.0
    %2936 = vmatprep.subr.mxu0 0.0
    %2937 = vmatpush1.msra.mxu0 0.0
    %2938 = vmatprep.subr.mxu0 0.0
    %2939 = vmatpush1.msra.mxu0 0.0
    %2940 = vmatprep.subr.mxu0 0.0
    %2941 = vmatpush1.msra.mxu0 0.0
    %2942 = vmatprep.subr.mxu0 0.0
    %2943 = vmatpush1.msra.mxu0 0.0
    %2944 = vmatprep.subr.mxu0 0.0
    %2945 = vmatpush1.msra.mxu0 0.0
    %2946 = vmatprep.subr.mxu0 0.0
    %2947 = vmatpush1.msra.mxu0 0.0
    %2948 = vmatprep.subr.mxu0 0.0
    %2949 = vmatpush1.msra.mxu0 0.0
    %2950 = vmatprep.subr.mxu0 0.0
    %2951 = vmatpush1.msra.mxu0 0.0
    %2952 = vmatprep.mubr.f32.mxu0 0.0
    %2953 = vmatmul.mubr.f32.gmra.mrb[0].mxu0 %v2886
    %v2954 = vpop.f32.mrb[0].mxu0
    %v2955 = vadd.f32 0.0, %v2954
    %v2956 = vpop.f32.mrb[0].mxu0
    %2957 = vdwg.mxu0
    %s2958 = scalar_lea.vmem %s9, 48
    %v2959 = vld [vmem:[%s2958] sm:$0xff]
    %v2960 = vld [vmem:[%s2958 + $0x8] sm:$0xff]
    %v2962 = vsel %vm345, %v2882, 0
    %v2965 = vsel %vm345, %v2955, 0
    %2967 = vmatprep.subr.mxu0 0.0
    %2968 = vmatpush1.msra.mxu0 %v2959
    %2969 = vmatprep.subr.mxu0 0.0
    %2970 = vmatpush1.msra.mxu0 %v2960
    %2971 = vmatprep.subr.mxu0 0.0
    %2972 = vmatpush1.msra.mxu0 0.0
    %2973 = vmatprep.subr.mxu0 0.0
    %2974 = vmatpush1.msra.mxu0 0.0
    %2975 = vmatprep.subr.mxu0 0.0
    %2976 = vmatpush1.msra.mxu0 0.0
    %2977 = vmatprep.subr.mxu0 0.0
    %2978 = vmatpush1.msra.mxu0 0.0
    %2979 = vmatprep.subr.mxu0 0.0
    %2980 = vmatpush1.msra.mxu0 0.0
    %2981 = vmatprep.subr.mxu0 0.0
    %2982 = vmatpush1.msra.mxu0 0.0
    %2983 = vmatprep.subr.mxu0 0.0
    %2984 = vmatpush1.msra.mxu0 0.0
    %2985 = vmatprep.subr.mxu0 0.0
    %2986 = vmatpush1.msra.mxu0 0.0
    %2987 = vmatprep.subr.mxu0 0.0
    %2988 = vmatpush1.msra.mxu0 0.0
    %2989 = vmatprep.subr.mxu0 0.0
    %2990 = vmatpush1.msra.mxu0 0.0
    %2991 = vmatprep.subr.mxu0 0.0
    %2992 = vmatpush1.msra.mxu0 0.0
    %2993 = vmatprep.subr.mxu0 0.0
    %2994 = vmatpush1.msra.mxu0 0.0
    %2995 = vmatprep.subr.mxu0 0.0
    %2996 = vmatpush1.msra.mxu0 0.0
    %2997 = vmatprep.subr.mxu0 0.0
    %2998 = vmatpush1.msra.mxu0 0.0
    %2999 = vmatprep.subr.mxu0 0.0
    %3000 = vmatpush1.msra.mxu0 0.0
    %3001 = vmatprep.subr.mxu0 0.0
    %3002 = vmatpush1.msra.mxu0 0.0
    %3003 = vmatprep.subr.mxu0 0.0
    %3004 = vmatpush1.msra.mxu0 0.0
    %3005 = vmatprep.subr.mxu0 0.0
    %3006 = vmatpush1.msra.mxu0 0.0
    %3007 = vmatprep.subr.mxu0 0.0
    %3008 = vmatpush1.msra.mxu0 0.0
    %3009 = vmatprep.subr.mxu0 0.0
    %3010 = vmatpush1.msra.mxu0 0.0
    %3011 = vmatprep.subr.mxu0 0.0
    %3012 = vmatpush1.msra.mxu0 0.0
    %3013 = vmatprep.subr.mxu0 0.0
    %3014 = vmatpush1.msra.mxu0 0.0
    %3015 = vmatprep.subr.mxu0 0.0
    %3016 = vmatpush1.msra.mxu0 0.0
    %3017 = vmatprep.subr.mxu0 0.0
    %3018 = vmatpush1.msra.mxu0 0.0
    %3019 = vmatprep.subr.mxu0 0.0
    %3020 = vmatpush1.msra.mxu0 0.0
    %3021 = vmatprep.subr.mxu0 0.0
    %3022 = vmatpush1.msra.mxu0 0.0
    %3023 = vmatprep.subr.mxu0 0.0
    %3024 = vmatpush1.msra.mxu0 0.0
    %3025 = vmatprep.subr.mxu0 0.0
    %3026 = vmatpush1.msra.mxu0 0.0
    %3027 = vmatprep.subr.mxu0 0.0
    %3028 = vmatpush1.msra.mxu0 0.0
    %3029 = vmatprep.subr.mxu0 0.0
    %3030 = vmatpush1.msra.mxu0 0.0
    %3031 = vmatprep.mubr.f32.mxu0 0.0
    %3032 = vmatmul.mubr.f32.gmra.mrb[0].mxu0 %v2962
    %v3033 = vpop.f32.mrb[0].mxu0
    %v3034 = vadd.f32 0.0, %v3033
    %v3035 = vpop.f32.mrb[0].mxu0
    %3036 = vmatprep.mubr.f32.mxu0 0.0
    %3037 = vmatmul.mubr.f32.gmra.mrb[0].mxu0 %v2965
    %v3038 = vpop.f32.mrb[0].mxu0
    %v3039 = vadd.f32 0.0, %v3038
    %v3040 = vpop.f32.mrb[0].mxu0
    %3041 = vdwg.mxu0
    %v3043 = vsel %vm345, %v2291, 0
    %v3046 = vsel %vm345, %v2364, 0
    %3048 = vmatprep.subr.mxu0 0.0
    %3049 = vmatpush1.msra.mxu0 %v2368
    %3050 = vmatprep.subr.mxu0 0.0
    %3051 = vmatpush1.msra.mxu0 %v2369
    %3052 = vmatprep.subr.mxu0 0.0
    %3053 = vmatpush1.msra.mxu0 0.0
    %3054 = vmatprep.subr.mxu0 0.0
    %3055 = vmatpush1.msra.mxu0 0.0
    %3056 = vmatprep.subr.mxu0 0.0
    %3057 = vmatpush1.msra.mxu0 0.0
    %3058 = vmatprep.subr.mxu0 0.0
    %3059 = vmatpush1.msra.mxu0 0.0
    %3060 = vmatprep.subr.mxu0 0.0
    %3061 = vmatpush1.msra.mxu0 0.0
    %3062 = vmatprep.subr.mxu0 0.0
    %3063 = vmatpush1.msra.mxu0 0.0
    %3064 = vmatprep.subr.mxu0 0.0
    %3065 = vmatpush1.msra.mxu0 0.0
    %3066 = vmatprep.subr.mxu0 0.0
    %3067 = vmatpush1.msra.mxu0 0.0
    %3068 = vmatprep.subr.mxu0 0.0
    %3069 = vmatpush1.msra.mxu0 0.0
    %3070 = vmatprep.subr.mxu0 0.0
    %3071 = vmatpush1.msra.mxu0 0.0
    %3072 = vmatprep.subr.mxu0 0.0
    %3073 = vmatpush1.msra.mxu0 0.0
    %3074 = vmatprep.subr.mxu0 0.0
    %3075 = vmatpush1.msra.mxu0 0.0
    %3076 = vmatprep.subr.mxu0 0.0
    %3077 = vmatpush1.msra.mxu0 0.0
    %3078 = vmatprep.subr.mxu0 0.0
    %3079 = vmatpush1.msra.mxu0 0.0
    %3080 = vmatprep.subr.mxu0 0.0
    %3081 = vmatpush1.msra.mxu0 0.0
    %3082 = vmatprep.subr.mxu0 0.0
    %3083 = vmatpush1.msra.mxu0 0.0
    %3084 = vmatprep.subr.mxu0 0.0
    %3085 = vmatpush1.msra.mxu0 0.0
    %3086 = vmatprep.subr.mxu0 0.0
    %3087 = vmatpush1.msra.mxu0 0.0
    %3088 = vmatprep.subr.mxu0 0.0
    %3089 = vmatpush1.msra.mxu0 0.0
    %3090 = vmatprep.subr.mxu0 0.0
    %3091 = vmatpush1.msra.mxu0 0.0
    %3092 = vmatprep.subr.mxu0 0.0
    %3093 = vmatpush1.msra.mxu0 0.0
    %3094 = vmatprep.subr.mxu0 0.0
    %3095 = vmatpush1.msra.mxu0 0.0
    %3096 = vmatprep.subr.mxu0 0.0
    %3097 = vmatpush1.msra.mxu0 0.0
    %3098 = vmatprep.subr.mxu0 0.0
    %3099 = vmatpush1.msra.mxu0 0.0
    %3100 = vmatprep.subr.mxu0 0.0
    %3101 = vmatpush1.msra.mxu0 0.0
    %3102 = vmatprep.subr.mxu0 0.0
    %3103 = vmatpush1.msra.mxu0 0.0
    %3104 = vmatprep.subr.mxu0 0.0
    %3105 = vmatpush1.msra.mxu0 0.0
    %3106 = vmatprep.subr.mxu0 0.0
    %3107 = vmatpush1.msra.mxu0 0.0
    %3108 = vmatprep.subr.mxu0 0.0
    %3109 = vmatpush1.msra.mxu0 0.0
    %3110 = vmatprep.subr.mxu0 0.0
    %3111 = vmatpush1.msra.mxu0 0.0
    %3112 = vmatprep.mubr.f32.mxu0 0.0
    %3113 = vmatmul.mubr.f32.gmra.mrb[0].mxu0 %v3043
    %v3114 = vpop.f32.mrb[0].mxu0
    %v3115 = vadd.f32 %v3034, %v3114
    %v3116 = vpop.f32.mrb[0].mxu0
    %3117 = vmatprep.mubr.f32.mxu0 0.0
    %3118 = vmatmul.mubr.f32.gmra.mrb[0].mxu0 %v3046
    %v3119 = vpop.f32.mrb[0].mxu0
    %v3120 = vadd.f32 %v3039, %v3119
    %v3121 = vpop.f32.mrb[0].mxu0
    %3122 = vdwg.mxu0
    %s3123 = scalar_lea.vmem %s10, 1
    %v3124 = vld [vmem:[%s3123] sm:$0x1]
    %v3126 = vlaneseq
    %v3127 = vshrl.u32 %v3126, 7
    %v3128 = vsub.s32 0, %v3127
    %v3129 = vrot.slane %v3124, %v3128
    %v3131 = vadd.f32 %v3115, %v3129
    %v3132 = vadd.f32 %v3120, %v3129
    %v3133 = vadd.f32 %v1771, %v3131
    %v3134 = vadd.f32 %v1772, %v3132
    %s3135 = scalar_lea.vmem %s11, 2
    %v3136 = vld [vmem:[%s3135] sm:$0x3]
    %v3137 = vsel %vm91, %v3133, 0.0
    %3138 = vadd.xlane.f32.xlu0 %v3137
    %v3139 = vpop.xlane.xlu0 %3138
    %v3140 = vsel %vm91, %v3134, 0.0
    %3141 = vadd.xlane.f32.xlu0 %v3140
    %v3142 = vpop.xlane.xlu0 %3141
    %v3143 = vmul.f32 %v3139, %v1456
    %v3144 = vmul.f32 %v3142, %v1456
    %v3145 = vsub.f32 %v3133, %v3143
    %v3146 = vsub.f32 %v3134, %v3144
    %v3147 = vmul.f32 %v3145, %v3145
    %v3148 = vmul.f32 %v3146, %v3146
    %v3149 = vsel %vm91, %v3147, 0.0
    %3150 = vadd.xlane.f32.xlu0 %v3149
    %v3151 = vpop.xlane.xlu0 %3150
    %v3152 = vsel %vm91, %v3148, 0.0
    %3153 = vadd.xlane.f32.xlu0 %v3152
    %v3154 = vpop.xlane.xlu0 %3153
    %v3155 = vmul.f32 %v3151, %v1456
    %v3156 = vmul.f32 %v3154, %v1456
    %v3157 = vadd.f32 %v3155, 1e-05
    %v3158 = vadd.f32 %v3156, 1e-05
    %v3159 = vrsqrt.pop %v3157
    %v3160 = vrsqrt.pop %v3158
    %v3161 = vmul.f32 %v3145, %v3159
    %v3162 = vmul.f32 %v3146, %v3160
    %v3163 = vlaneseq
    %v3164 = vshrl.u32 %v3163, 7
    %v3165 = vsub.s32 0, %v3164
    %v3166 = vrot.slane %v3136, %v3165
    %v3167 = vmul.f32 %v3161, %v3166
    %v3168 = vmul.f32 %v3162, %v3166
    %v3169 = vlaneseq
    %v3170 = vshrl.u32 %v3169, 7
    %v3171 = vsub.s32 1, %v3170
    %v3172 = vrot.slane %v3136, %v3171
    %v3173 = vadd.f32 %v3167, %v3172
    %v3174 = vadd.f32 %v3168, %v3172
    %s3175 = scalar_lea.vmem %s12, 32
    %v3176 = vld [vmem:[%s3175] sm:$0xff]
    %v3177 = vld [vmem:[%s3175 + $0x8] sm:$0xff]
    %v3178 = vld [vmem:[%s3175 + $0x10] sm:$0xff]
    %v3179 = vld [vmem:[%s3175 + $0x18] sm:$0xff]
    %s3180 = scalar_lea.vmem %s13, 1
    %v3181 = vld [vmem:[%s3180] sm:$0x1]
    %v3183 = vlaneseq
    %v3184 = vshrl.u32 %v3183, 7
    %v3185 = vsub.s32 0, %v3184
    %v3186 = vrot.slane %v3181, %v3185
    %v3189 = vsel %vm91, %v3173, 0
    %v3192 = vsel %vm91, %v3174, 0
    %3194 = vmatprep.subr.mxu0 0.0
    %3195 = vmatpush1.msra.mxu0 %v3176
    %3196 = vmatprep.subr.mxu0 0.0
    %3197 = vmatpush1.msra.mxu0 %v3177
    %3198 = vmatprep.subr.mxu0 0.0
    %3199 = vmatpush1.msra.mxu0 %v3178
    %3200 = vmatprep.subr.mxu0 0.0
    %3201 = vmatpush1.msra.mxu0 %v3179
    %3202 = vmatprep.subr.mxu0 0.0
    %3203 = vmatpush1.msra.mxu0 0.0
    %3204 = vmatprep.subr.mxu0 0.0
    %3205 = vmatpush1.msra.mxu0 0.0
    %3206 = vmatprep.subr.mxu0 0.0
    %3207 = vmatpush1.msra.mxu0 0.0
    %3208 = vmatprep.subr.mxu0 0.0
    %3209 = vmatpush1.msra.mxu0 0.0
    %3210 = vmatprep.subr.mxu0 0.0
    %3211 = vmatpush1.msra.mxu0 0.0
    %3212 = vmatprep.subr.mxu0 0.0
    %3213 = vmatpush1.msra.mxu0 0.0
    %3214 = vmatprep.subr.mxu0 0.0
    %3215 = vmatpush1.msra.mxu0 0.0
    %3216 = vmatprep.subr.mxu0 0.0
    %3217 = vmatpush1.msra.mxu0 0.0
    %3218 = vmatprep.subr.mxu0 0.0
    %3219 = vmatpush1.msra.mxu0 0.0
    %3220 = vmatprep.subr.mxu0 0.0
    %3221 = vmatpush1.msra.mxu0 0.0
    %3222 = vmatprep.subr.mxu0 0.0
    %3223 = vmatpush1.msra.mxu0 0.0
    %3224 = vmatprep.subr.mxu0 0.0
    %3225 = vmatpush1.msra.mxu0 0.0
    %3226 = vmatprep.subr.mxu0 0.0
    %3227 = vmatpush1.msra.mxu0 0.0
    %3228 = vmatprep.subr.mxu0 0.0
    %3229 = vmatpush1.msra.mxu0 0.0
    %3230 = vmatprep.subr.mxu0 0.0
    %3231 = vmatpush1.msra.mxu0 0.0
    %3232 = vmatprep.subr.mxu0 0.0
    %3233 = vmatpush1.msra.mxu0 0.0
    %3234 = vmatprep.subr.mxu0 0.0
    %3235 = vmatpush1.msra.mxu0 0.0
    %3236 = vmatprep.subr.mxu0 0.0
    %3237 = vmatpush1.msra.mxu0 0.0
    %3238 = vmatprep.subr.mxu0 0.0
    %3239 = vmatpush1.msra.mxu0 0.0
    %3240 = vmatprep.subr.mxu0 0.0
    %3241 = vmatpush1.msra.mxu0 0.0
    %3242 = vmatprep.subr.mxu0 0.0
    %3243 = vmatpush1.msra.mxu0 0.0
    %3244 = vmatprep.subr.mxu0 0.0
    %3245 = vmatpush1.msra.mxu0 0.0
    %3246 = vmatprep.subr.mxu0 0.0
    %3247 = vmatpush1.msra.mxu0 0.0
    %3248 = vmatprep.subr.mxu0 0.0
    %3249 = vmatpush1.msra.mxu0 0.0
    %3250 = vmatprep.subr.mxu0 0.0
    %3251 = vmatpush1.msra.mxu0 0.0
    %3252 = vmatprep.subr.mxu0 0.0
    %3253 = vmatpush1.msra.mxu0 0.0
    %3254 = vmatprep.subr.mxu0 0.0
    %3255 = vmatpush1.msra.mxu0 0.0
    %3256 = vmatprep.subr.mxu0 0.0
    %3257 = vmatpush1.msra.mxu0 0.0
    %3258 = vmatprep.mubr.f32.mxu0 0.0
    %3259 = vmatmul.mubr.f32.gmra.mrb[0].mxu0 %v3189
    %v3260 = vpop.f32.mrb[0].mxu0
    %v3261 = vadd.f32 %v3186, %v3260
    %v3262 = vpop.f32.mrb[0].mxu0
    %3263 = vmatprep.mubr.f32.mxu0 0.0
    %3264 = vmatmul.mubr.f32.gmra.mrb[0].mxu0 %v3192
    %v3265 = vpop.f32.mrb[0].mxu0
    %v3266 = vadd.f32 %v3186, %v3265
    %v3267 = vpop.f32.mrb[0].mxu0
    %3268 = vdwg.mxu0
    %v3269 = vmul.f32 %v3261, 0.5
    %v3270 = vmul.f32 %v3266, 0.5
    %v3271 = vmul.f32 %v3261, 0.70710677
    %v3272 = vmul.f32 %v3266, 0.70710677
    %v3273 = vand.u32 2147483647, %v3271
    %v3274 = vand.u32 2147483647, %v3272
    %v3275 = vmul.f32 %v3273, 0.3275911
    %v3276 = vmul.f32 %v3274, 0.3275911
    %v3277 = vadd.f32 %v3275, 1.0
    %v3278 = vadd.f32 %v3276, 1.0
    %v3279 = vrcp.pop %v3277
    %v3280 = vmul.f32 1.0, %v3279
    %v3281 = vrcp.pop %v3278
    %v3282 = vmul.f32 1.0, %v3281
    %v3283 = vmul.f32 %v3280, 1.0614054
    %v3284 = vmul.f32 %v3282, 1.0614054
    %v3285 = vsub.f32 %v3283, 1.4531521
    %v3286 = vsub.f32 %v3284, 1.4531521
    %v3287 = vmul.f32 %v3285, %v3280
    %v3288 = vmul.f32 %v3286, %v3282
    %v3289 = vadd.f32 %v3287, 1.4214138
    %v3290 = vadd.f32 %v3288, 1.4214138
    %v3291 = vmul.f32 %v3289, %v3280
    %v3292 = vmul.f32 %v3290, %v3282
    %v3293 = vsub.f32 %v3291, 0.28449672
    %v3294 = vsub.f32 %v3292, 0.28449672
    %v3295 = vmul.f32 %v3293, %v3280
    %v3296 = vmul.f32 %v3294, %v3282
    %v3297 = vadd.f32 %v3295, 0.2548296
    %v3298 = vadd.f32 %v3296, 0.2548296
    %v3299 = vmul.f32 %v3297, %v3280
    %v3300 = vmul.f32 %v3298, %v3282
    %v3301 = vsub.f32 0.0, %v3271
    %v3302 = vsub.f32 0.0, %v3272
    %v3303 = vmul.f32 %v3301, %v3271
    %v3304 = vmul.f32 %v3302, %v3272
    %v3305 = vmul.f32 %v3303, 1.442695
    %v3306 = vpow.pop %v3305
    %v3307 = vmul.f32 %v3304, 1.442695
    %v3308 = vpow.pop %v3307
    %v3309 = vmul.f32 %v3299, %v3306
    %v3310 = vmul.f32 %v3300, %v3308
    %v3311 = vsub.f32 1.0, %v3309
    %v3312 = vsub.f32 1.0, %v3310
    %vm3313 = vcmp.ge.f32.partialorder %v3271, 0.0
    %vm3314 = vcmp.ge.f32.partialorder %v3272, 0.0
    %v3315 = vsub.f32 0.0, %v3311
    %v3316 = vsub.f32 0.0, %v3312
    %v3317 = vsel %vm3313, %v3311, %v3315
    %v3318 = vsel %vm3314, %v3312, %v3316
    %v3319 = vadd.f32 %v3317, 1.0
    %v3320 = vadd.f32 %v3318, 1.0
    %v3321 = vmul.f32 %v3269, %v3319
    %v3322 = vmul.f32 %v3270, %v3320
    %s3323 = scalar_lea.vmem %s14, 64
    %v3324 = vld [vmem:[%s3323] sm:$0xff]
    %v3325 = vld [vmem:[%s3323 + $0x8] sm:$0xff]
    %v3326 = vld [vmem:[%s3323 + $0x10] sm:$0xff]
    %v3327 = vld [vmem:[%s3323 + $0x18] sm:$0xff]
    %v3328 = vld [vmem:[%s3323 + $0x20] sm:$0xff]
    %v3329 = vld [vmem:[%s3323 + $0x28] sm:$0xff]
    %v3330 = vld [vmem:[%s3323 + $0x30] sm:$0xff]
    %v3331 = vld [vmem:[%s3323 + $0x38] sm:$0xff]
    %s3332 = scalar_lea.vmem %s15, 1
    %v3333 = vld [vmem:[%s3332] sm:$0x1]
    %v3335 = vlaneseq
    %v3336 = vshrl.u32 %v3335, 7
    %v3337 = vsub.s32 0, %v3336
    %v3338 = vrot.slane %v3333, %v3337
    %v3341 = vsel %vm1650, %v3321, 0
    %v3344 = vsel %vm1650, %v3322, 0
    %3346 = vmatprep.subr.mxu0 0.0
    %3347 = vmatpush1.msra.mxu0 %v3324
    %3348 = vmatprep.subr.mxu0 0.0
    %3349 = vmatpush1.msra.mxu0 %v3325
    %3350 = vmatprep.subr.mxu0 0.0
    %3351 = vmatpush1.msra.mxu0 %v3326
    %3352 = vmatprep.subr.mxu0 0.0
    %3353 = vmatpush1.msra.mxu0 %v3327
    %3354 = vmatprep.subr.mxu0 0.0
    %3355 = vmatpush1.msra.mxu0 %v3328
    %3356 = vmatprep.subr.mxu0 0.0
    %3357 = vmatpush1.msra.mxu0 %v3329
    %3358 = vmatprep.subr.mxu0 0.0
    %3359 = vmatpush1.msra.mxu0 %v3330
    %3360 = vmatprep.subr.mxu0 0.0
    %3361 = vmatpush1.msra.mxu0 %v3331
    %3362 = vmatprep.subr.mxu0 0.0
    %3363 = vmatpush1.msra.mxu0 0.0
    %3364 = vmatprep.subr.mxu0 0.0
    %3365 = vmatpush1.msra.mxu0 0.0
    %3366 = vmatprep.subr.mxu0 0.0
    %3367 = vmatpush1.msra.mxu0 0.0
    %3368 = vmatprep.subr.mxu0 0.0
    %3369 = vmatpush1.msra.mxu0 0.0
    %3370 = vmatprep.subr.mxu0 0.0
    %3371 = vmatpush1.msra.mxu0 0.0
    %3372 = vmatprep.subr.mxu0 0.0
    %3373 = vmatpush1.msra.mxu0 0.0
    %3374 = vmatprep.subr.mxu0 0.0
    %3375 = vmatpush1.msra.mxu0 0.0
    %3376 = vmatprep.subr.mxu0 0.0
    %3377 = vmatpush1.msra.mxu0 0.0
    %3378 = vmatprep.subr.mxu0 0.0
    %3379 = vmatpush1.msra.mxu0 0.0
    %3380 = vmatprep.subr.mxu0 0.0
    %3381 = vmatpush1.msra.mxu0 0.0
    %3382 = vmatprep.subr.mxu0 0.0
    %3383 = vmatpush1.msra.mxu0 0.0
    %3384 = vmatprep.subr.mxu0 0.0
    %3385 = vmatpush1.msra.mxu0 0.0
    %3386 = vmatprep.subr.mxu0 0.0
    %3387 = vmatpush1.msra.mxu0 0.0
    %3388 = vmatprep.subr.mxu0 0.0
    %3389 = vmatpush1.msra.mxu0 0.0
    %3390 = vmatprep.subr.mxu0 0.0
    %3391 = vmatpush1.msra.mxu0 0.0
    %3392 = vmatprep.subr.mxu0 0.0
    %3393 = vmatpush1.msra.mxu0 0.0
    %3394 = vmatprep.subr.mxu0 0.0
    %3395 = vmatpush1.msra.mxu0 0.0
    %3396 = vmatprep.subr.mxu0 0.0
    %3397 = vmatpush1.msra.mxu0 0.0
    %3398 = vmatprep.subr.mxu0 0.0
    %3399 = vmatpush1.msra.mxu0 0.0
    %3400 = vmatprep.subr.mxu0 0.0
    %3401 = vmatpush1.msra.mxu0 0.0
    %3402 = vmatprep.subr.mxu0 0.0
    %3403 = vmatpush1.msra.mxu0 0.0
    %3404 = vmatprep.subr.mxu0 0.0
    %3405 = vmatpush1.msra.mxu0 0.0
    %3406 = vmatprep.subr.mxu0 0.0
    %3407 = vmatpush1.msra.mxu0 0.0
    %3408 = vmatprep.subr.mxu0 0.0
    %3409 = vmatpush1.msra.mxu0 0.0
    %3410 = vmatprep.mubr.f32.mxu0 0.0
    %3411 = vmatmul.mubr.f32.gmra.mrb[0].mxu0 %v3341
    %v3412 = vpop.f32.mrb[0].mxu0
    %v3413 = vadd.f32 %v3338, %v3412
    %v3414 = vpop.f32.mrb[0].mxu0
    %3415 = vmatprep.mubr.f32.mxu0 0.0
    %3416 = vmatmul.mubr.f32.gmra.mrb[0].mxu0 %v3344
    %v3417 = vpop.f32.mrb[0].mxu0
    %v3418 = vadd.f32 %v3338, %v3417
    %v3419 = vpop.f32.mrb[0].mxu0
    %3420 = vdwg.mxu0
    %v3421 = vadd.f32 %v3173, %v3413
    %v3422 = vadd.f32 %v3174, %v3418
    %s3423 = scalar_lea.vmem %s16, 2
    %v3424 = vld [vmem:[%s3423] sm:$0x3]
    %v3425 = vsel %vm91, %v3421, 0.0
    %3426 = vadd.xlane.f32.xlu0 %v3425
    %v3427 = vpop.xlane.xlu0 %3426
    %v3428 = vsel %vm91, %v3422, 0.0
    %3429 = vadd.xlane.f32.xlu0 %v3428
    %v3430 = vpop.xlane.xlu0 %3429
    %v3431 = vmul.f32 %v3427, %v1456
    %v3432 = vmul.f32 %v3430, %v1456
    %v3433 = vsub.f32 %v3421, %v3431
    %v3434 = vsub.f32 %v3422, %v3432
    %v3435 = vmul.f32 %v3433, %v3433
    %v3436 = vmul.f32 %v3434, %v3434
    %v3437 = vsel %vm91, %v3435, 0.0
    %3438 = vadd.xlane.f32.xlu0 %v3437
    %v3439 = vpop.xlane.xlu0 %3438
    %v3440 = vsel %vm91, %v3436, 0.0
    %3441 = vadd.xlane.f32.xlu0 %v3440
    %v3442 = vpop.xlane.xlu0 %3441
    %v3443 = vmul.f32 %v3439, %v1456
    %v3444 = vmul.f32 %v3442, %v1456
    %v3445 = vadd.f32 %v3443, 1e-05
    %v3446 = vadd.f32 %v3444, 1e-05
    %v3447 = vrsqrt.pop %v3445
    %v3448 = vrsqrt.pop %v3446
    %v3449 = vmul.f32 %v3433, %v3447
    %v3450 = vmul.f32 %v3434, %v3448
    %v3451 = vlaneseq
    %v3452 = vshrl.u32 %v3451, 7
    %v3453 = vsub.s32 0, %v3452
    %v3454 = vrot.slane %v3424, %v3453
    %v3455 = vmul.f32 %v3449, %v3454
    %v3456 = vmul.f32 %v3450, %v3454
    %v3457 = vlaneseq
    %v3458 = vshrl.u32 %v3457, 7
    %v3459 = vsub.s32 1, %v3458
    %v3460 = vrot.slane %v3424, %v3459
    %v3461 = vadd.f32 %v3455, %v3460
    %v3462 = vadd.f32 %v3456, %v3460
    %3463 = vst.msk [vmem:[#allocation2] sm:$0xff] %vm91, %v3461
    %3464 = vst.msk [vmem:[#allocation2 + $0x8] sm:$0xff] %vm91, %v3462
    %v3465 = vld [vmem:[%s17] sm:$0x1]
    %v3466 = vld [vmem:[#allocation5] sm:$0x1]
    %s3467 = sld [smem:[#allocation4]]
    %s3468 = scalar_lea.vmem [#allocation2], %s3467
    %v3469 = vld [vmem:[%s3468] sm:$0x1]
    %vm3470 = vcmask 253952
    %3471 = vst.msk [vmem:[#allocation8] sm:$0x1] %vm3470, %v3469
    %v3472 = vmul.f32 %v3469, %v3465
    %v3473 = vsel %vm3470, %v3472, 0.0
    %3474 = vadd.xlane.f32.xlu0 %v3473
    %v3475 = vpop.xlane.xlu0 %3474
    %v3476 = vadd.f32 %v3475, %v3466
    %vm3477 = vcmask 0
    %3478 = vst.msk [vmem:[%s21] sm:$0x1] %vm3477, %v3476
    %v3479 = vld [vmem:[%s19] sm:$0x1]
    %v3480 = vmax.f32 %v3476, 0.0
    %v3481 = vmul.f32 %v3476, %v3479
    %v3482 = vsub.f32 %v3480, %v3481
    %v3483 = vand.u32 2147483647, %v3476
    %v3484 = vsub.f32 0.0, %v3483
    %v3485 = vmul.f32 %v3484, 1.442695
    %v3486 = vpow.pop %v3485
    %v3487 = vadd.f32 %v3486, 1.0
    %v3488 = vlog2.pop %v3487
    %v3489 = vmul.f32 %v3488, 0.6931472
    %v3490 = vadd.f32 %v3482, %v3489
    %s3491 = sld [smem:[#allocation4 + $0x1]]
    %s3492 = scalar_lea.vmem [#allocation2], %s3491
    %v3493 = vld [vmem:[%s3492] sm:$0x1]
    %3494 = vst.msk [vmem:[#allocation8 + $0x1] sm:$0x1] %vm3470, %v3493
    %v3495 = vmul.f32 %v3493, %v3465
    %v3496 = vsel %vm3470, %v3495, 0.0
    %3497 = vadd.xlane.f32.xlu0 %v3496
    %v3498 = vpop.xlane.xlu0 %3497
    %v3499 = vadd.f32 %v3498, %v3466
    %3500 = vst.msk [vmem:[%s21 + $0x1] sm:$0x1] %vm3477, %v3499
    %v3501 = vld [vmem:[%s19 + $0x1] sm:$0x1]
    %v3502 = vmax.f32 %v3499, 0.0
    %v3503 = vmul.f32 %v3499, %v3501
    %v3504 = vsub.f32 %v3502, %v3503
    %v3505 = vand.u32 2147483647, %v3499
    %v3506 = vsub.f32 0.0, %v3505
    %v3507 = vmul.f32 %v3506, 1.442695
    %v3508 = vpow.pop %v3507
    %v3509 = vadd.f32 %v3508, 1.0
    %v3510 = vlog2.pop %v3509
    %v3511 = vmul.f32 %v3510, 0.6931472
    %v3512 = vadd.f32 %v3504, %v3511
    %v3513 = vadd.f32 %v3490, %v3512
    %v3514 = vmul.f32 %v3513, 0.5
    %3515 = vst.msk [vmem:[#allocation6] sm:$0x1] %vm3477, %v3514
    // Predicated region
    $region78: #{forward.1} parent=1 // pred_check
      _
    $region79: #{forward.1} parent=1 // pred_check_branch
      %3517 = sbr.rel (0) target = $region81
    $region80: #{forward.1} parent=1 // pred_region
      %s3519 = ssub.s32 16, 16
      %3520 = vsyncadd [#allocation7], %s3519
      %s3522 = sshll.u32 [#allocation6], 4
      %s3523 = int_to_ptr.vmem [resolvable:$true] %s3522
      %3525 = dma.vmem_to_hbm [thread:$0]  %s3523, 16, %s20, [#allocation7]
    $region81: #{forward.1} parent=1 // pred_fallthru
      _
    // Predicated region
    $region82: #{forward.1} parent=1 // pred_check
      _
    $region83: #{forward.1} parent=1 // pred_check_branch
      %3527 = sbr.rel (0) target = $region85
    $region84: #{forward.1} parent=1 // pred_region
      _
    $region85: #{forward.1} parent=1 // pred_fallthru
      _
    // Predicated region
    $region86: #{forward.1} parent=1 // pred_check
      _
    $region87: #{forward.1} parent=1 // pred_check_branch
      %3529 = sbr.rel (0) target = $region89
    $region88: #{forward.1} parent=1 // pred_region
      %s3531 = ssub.s32 32, 32
      %3532 = vsyncadd [#allocation9], %s3531
      %s3534 = sshll.u32 [#allocation8], 4
      %s3535 = int_to_ptr.vmem [resolvable:$true] %s3534
      %3537 = dma.vmem_to_hbm [thread:$0]  %s3535, 32, %s22, [#allocation9]
    $region89: #{forward.1} parent=1 // pred_fallthru
      _
    // Predicated region
    $region90: #{forward.1} parent=1 // pred_check
      _
    $region91: #{forward.1} parent=1 // pred_check_branch
      %3539 = sbr.rel (0) target = $region93
    $region92: #{forward.1} parent=1 // pred_region
      %3540 = dma.done [#allocation7], 16
    $region93: #{forward.1} parent=1 // pred_fallthru
      _
    // Predicated region
    $region94: #{forward.1} parent=1 // pred_check
      _
    $region95: #{forward.1} parent=1 // pred_check_branch
      %3542 = sbr.rel (0) target = $region97
    $region96: #{forward.1} parent=1 // pred_region
      _
    $region97: #{forward.1} parent=1 // pred_fallthru
      _
    // Predicated region
    $region98: #{forward.1} parent=1 // pred_check
      _
    $region99: #{forward.1} parent=1 // pred_check_branch
      %3544 = sbr.rel (0) target = $region101
    $region100: #{forward.1} parent=1 // pred_region
      %3545 = dma.done [#allocation9], 32
    $region101: #{forward.1} parent=1 // pred_fallthru
      _
    %3546 = vsyncpa [#allocation7], 1
    %3547 = vsyncpa [#allocation9], 1

</llo_original>
